<compile_context>
chip_gen: v6e
topology: v6e:2x2x1
jax: 0.10.0
libtpu: 0.0.40
codegen_flags: <defaults>
</compile_context>

<pallas_src>
import jax
import jax.numpy as jnp
from jax.experimental import pallas as pl
from jax.experimental.pallas import tpu as pltpu

_PREC = jax.lax.Precision.HIGHEST   # used by the pure-JAX reference only


# ------------------------------ tap definitions ------------------------------

def _near_far_taps(band=11):
    # near = the 3x3 neighbourhood in row-major order (matches a (3,3)->9 reshape)
    near = tuple((di, dj) for di in (-1, 0, 1) for dj in (-1, 0, 1))
    r = band // 2
    far = tuple((0, dj) for dj in range(-r, r + 1) if abs(dj) >= 2) + \
          tuple((di, 0) for di in range(-r, r + 1) if abs(di) >= 2)
    return near, far


# ------------------------------ parameter packing ----------------------------

def _blockdiag(a, b):
    o1, k1 = a.shape
    o2, k2 = b.shape
    out = jnp.zeros((o1 + o2, k1 + k2), a.dtype)
    out = out.at[:o1, :k1].set(a)
    out = out.at[o1:, k1:].set(b)
    return out


def _pack_rows(named_blocks, row_align):
    """Pack 2-D blocks into one slab along rows (row starts aligned)."""
    width = max(b.shape[1] for _, b in named_blocks)
    layout = {}
    r = 0
    for name, b in named_blocks:
        r = -(-r // row_align) * row_align
        layout[name] = (r, b.shape[0], b.shape[1])
        r += b.shape[0]
    rows = -(-r // row_align) * row_align
    slab = jnp.zeros((rows, width), named_blocks[0][1].dtype)
    for name, b in named_blocks:
        r0, nr, nc = layout[name]
        slab = slab.at[r0:r0 + nr, :nc].set(b)
    return slab, layout


def _build_high_dw(p, half, gc, idc, near, far, far_row0):
    """Merge identity + 3x3 + 1x11 + 11x1 depthwise branches into one
    near-tap weight matrix (all rows) and one far-tap matrix (rows >= far_row0)."""
    w3 = p['dw_hw_w'].reshape(gc, 3, 3)
    w1x11 = p['dw_w_w'].reshape(gc, 11)
    w11x1 = p['dw_h_w'].reshape(gc, 11)

    wn = jnp.zeros((half, len(near)), jnp.float32)
    wn = wn.at[:idc, near.index((0, 0))].set(1.0)            # identity rows
    for t, (di, dj) in enumerate(near):
        wn = wn.at[idc:idc + gc, t].set(w3[:, di + 1, dj + 1])
        if di == 0:
            wn = wn.at[idc + gc:idc + 2 * gc, t].set(w1x11[:, dj + 5])
        if dj == 0:
            wn = wn.at[idc + 2 * gc:idc + 3 * gc, t].set(w11x1[:, di + 5])

    wf = jnp.zeros((half - far_row0, len(far)), jnp.float32)
    for t, (di, dj) in enumerate(far):
        if di == 0:                                           # 1x11 group
            r0 = idc + gc - far_row0
            wf = wf.at[r0:r0 + gc, t].set(w1x11[:, dj + 5])
        else:                                                 # 11x1 group (dj == 0)
            r0 = idc + 2 * gc - far_row0
            wf = wf.at[r0:r0 + gc, t].set(w11x1[:, di + 5])

    bias = jnp.concatenate([jnp.zeros((idc,), jnp.float32),
                            p['dw_hw_b'], p['dw_w_b'], p['dw_h_b']]).reshape(half, 1)
    return wn, wf, bias


def _build_tap_mask(taps, H, W, Bg):
    HW = H * W
    pos = jnp.arange(HW)
    hh = pos // W
    ww = pos % W
    rows = []
    for (di, dj) in taps:
        valid = ((hh + di >= 0) & (hh + di < H) &
                 (ww + dj >= 0) & (ww + dj < W))
        rows.append(valid)
    m = jnp.stack(rows).astype(jnp.float32)                   # (T, HW)
    return jnp.tile(m, (1, Bg))                               # (T, Bg*HW)


# --------------------------------- fused kernel -------------------------------

def _make_dsa_kernel(*, H, W, Bg, half, near, far, far_row0,
                     wb_layout, wm_layout):
    HW = H * W
    L = Bg * HW

    def kernel(x_ref, wb_ref, wm_ref, mask_ref, o_ref):
        def wb(name):
            r0, nr, nc = wb_layout[name]
            return wb_ref[r0:r0 + nr, 0:nc]

        def wm(name):
            r0, nr, nc = wm_layout[name]
            return wm_ref[r0:r0 + nr, 0:nc]

        def mm(w_bf16, act):                  # MXU: bf16 operands, f32 accumulation
            return jnp.dot(w_bf16, act.astype(jnp.bfloat16),
                           preferred_element_type=jnp.float32)

        def silu(z):
            return z * jax.nn.sigmoid(z)

        def l2n(z):                           # == z / max(||z||_2, 1e-12)
            ss = jnp.sum(z * z, axis=-1, keepdims=True)
            return z * jax.lax.rsqrt(jnp.maximum(ss, 1e-24))

        def dw(x, w, taps, mask_row0):
            # depthwise conv on a flattened (R, L) slab via static XLU lane
            # rotations; precomputed boundary masks kill image / batch wraps.
            acc = None
            for t, (di, dj) in enumerate(taps):
                off = di * W + dj
                s = pltpu.roll(x, (-off) % L, axis=1) if off else x
                if (di, dj) != (0, 0):
                    s = s * mask_ref[mask_row0 + t:mask_row0 + t + 1, :]
                term = s * w[:, t:t + 1]
                acc = term if acc is None else acc + term
            return acc

        x = x_ref[...]                                        # (C, L) f32
        high_in = x[:half]
        low_in = x[half:]

        # ---- high branch: merged identity / 3x3 / 1x11 / 11x1 depthwise ----
        acc = dw(high_in, wm('hdw_near_w'), near, 0)
        acc_far = dw(high_in[far_row0:], wm('hdw_far_w'), far, len(near))
        if far_row0 == 0:
            high = acc + acc_far + wm('hdw_b')
        else:
            high = jnp.concatenate([acc[:far_row0], acc[far_row0:] + acc_far],
                                   axis=0) + wm('hdw_b')

        # ---- merged 1x1 convs: [h2l(high); qkv(low_in)] in one MXU pass ----
        hl = jnp.concatenate([high, low_in], axis=0)          # (C, L)
        hq = mm(wb('hq_w'), hl) + wm('hq_b')                  # (4*half, L)
        h2l = silu(hq[:half])                                 # high2low
        qkv = dw(hq[half:], wm('qkv_dw_w'), near, 0) + wm('qkv_dw_b')
        q = qkv[:half]
        k = qkv[half:2 * half]
        v = qkv[2 * half:] * h2l                              # v = v * high

        # ---- XCA per batch; gram / softmax / attn@v kept in f32 ----
        temp = wm('temp')                                     # (half, 1)
        neg = wm('head_mask')                                 # (half, half)
        outs = []
        for b in range(Bg):
            sl = slice(b * HW, (b + 1) * HW)
            qb = l2n(q[:, sl])
            kb = l2n(k[:, sl])
            s = jnp.dot(qb, kb.T, preferred_element_type=jnp.float32) * temp + neg
            s = s - jnp.max(s, axis=-1, keepdims=True)
            e = jnp.exp(s)
            attn = e / jnp.sum(e, axis=-1, keepdims=True)
            outs.append(jnp.dot(attn, v[:, sl], preferred_element_type=jnp.float32))
        att = outs[0] if Bg == 1 else jnp.concatenate(outs, axis=1)
        low = mm(wb('proj_w'), att) + wm('proj_b')            # (half, L)

        # ---- low2high + conv_act (channel concat replaced by 2 matmuls) ----
        l2h = silu(mm(wb('l2h_w'), low) + wm('l2h_b'))
        fused = l2h * high
        r0, nr, _ = wb_layout['ca_w']
        y = (mm(wb_ref[r0:r0 + nr, 0:half], fused)
             + mm(wb_ref[r0:r0 + nr, half:2 * half], low)
             + wm('ca_b'))
        y = silu(y)
        o_ref[...] = (y * x).astype(o_ref.dtype)

    return kernel


# ----------------------------------- wrapper ----------------------------------

def _default_grid_blocks(B):
    # v7x has 2 TensorCores/chip -> 2-way parallel grid; v5e/v6e are single-TC
    # where one fused step (all batches folded onto lanes) is fastest.
    try:
        kind = jax.devices()[0].device_kind.lower()
    except Exception:
        kind = ""
    if "v7" in kind and B >= 2 and B % 2 == 0:
        return 2
    return 1


def dsa_forward(x, p, in_channels, heads=4, grid_blocks=None):
    """DSA forward, NCHW in / NCHW out, as one fused Pallas TPU kernel."""
    B, C, H, W = x.shape
    assert C == in_channels and C % 2 == 0
    HW = H * W
    assert HW % 128 == 0, "H*W must be a multiple of 128 for the lane-dense layout"
    half = C // 2
    gc = int(half * 0.25)
    idc = half - 3 * gc
    assert half % heads == 0

    near, far = _near_far_taps()
    # roll wrap-around must always be killed by the validity mask
    assert all(abs(di) < H and abs(dj) < W for (di, dj) in near + far)

    if grid_blocks is None:
        grid_blocks = _default_grid_blocks(B)
    if B % grid_blocks != 0:
        grid_blocks = 1
    Bg = B // grid_blocks
    L = Bg * HW

    # far taps only touch the 1x11 / 11x1 channel groups; restrict them to that
    # row band when it is sublane (8-row) aligned.
    far_row0 = idc + gc if (idc + gc) % 8 == 0 else 0

    w2 = lambda w: w.reshape(w.shape[0], w.shape[1])      # (O,Cin,1,1)->(O,Cin)
    col = lambda b: b.reshape(-1, 1)

    # -- slab 1: bf16 matmul weights (pre-cast, block-diag h2l/qkv merge) --
    hq_w = _blockdiag(w2(p['h2l_w']), w2(p['qkv_w']))      # (4*half, C)
    wb, wb_layout = _pack_rows(
        [('hq_w',   hq_w.astype(jnp.bfloat16)),
         ('proj_w', w2(p['proj_w']).astype(jnp.bfloat16)),
         ('l2h_w',  w2(p['l2h_w']).astype(jnp.bfloat16)),
         ('ca_w',   w2(p['ca_w']).astype(jnp.bfloat16))],
        row_align=16)

    # -- slab 2: f32 misc (depthwise weights, biases, temperature, head mask) --
    hdw_nw, hdw_fw, hdw_b = _build_high_dw(p, half, gc, idc, near, far, far_row0)
    rh = jnp.arange(half) // (half // heads)
    head_mask = jnp.where(rh[:, None] == rh[None, :], 0.0, -1e30).astype(jnp.float32)
    temp = jnp.repeat(p['temperature'].reshape(heads), half // heads).reshape(half, 1)
    wm, wm_layout = _pack_rows(
        [('hdw_near_w', hdw_nw),
         ('hdw_far_w',  hdw_fw),
         ('qkv_dw_w',   p['qkv_dw_w'].reshape(3 * half, 9)),
         ('hdw_b',      hdw_b),
         ('hq_b',       jnp.concatenate([p['h2l_b'], p['qkv_b']]).reshape(-1, 1)),
         ('qkv_dw_b',   col(p['qkv_dw_b'])),
         ('proj_b',     col(p['proj_b'])),
         ('l2h_b',      col(p['l2h_b'])),
         ('ca_b',       col(p['ca_b'])),
         ('temp',       temp),
         ('head_mask',  head_mask)],
        row_align=8)

    # -- precomputed per-tap boundary masks (shared by high and qkv depthwise) --
    tap_mask = _build_tap_mask(near + far, H, W, Bg)        # (n_taps, L)

    # channels x (batch-major flattened spatial): lane = b*HW + h*W + w
    xt = x.reshape(B, C, HW).transpose(1, 0, 2).reshape(C, B * HW)

    kernel = _make_dsa_kernel(H=H, W=W, Bg=Bg, half=half, near=near, far=far,
                              far_row0=far_row0,
                              wb_layout=wb_layout, wm_layout=wm_layout)

    out = pl.pallas_call(
        kernel,
        grid=(grid_blocks,),
        in_specs=[pl.BlockSpec((C, L), lambda g: (0, g)),
                  pl.BlockSpec(wb.shape, lambda g: (0, 0)),
                  pl.BlockSpec(wm.shape, lambda g: (0, 0)),
                  pl.BlockSpec(tap_mask.shape, lambda g: (0, 0))],
        out_specs=pl.BlockSpec((C, L), lambda g: (0, g)),
        out_shape=jax.ShapeDtypeStruct((C, B * HW), jnp.float32),
        compiler_params=pltpu.CompilerParams(
            dimension_semantics=("parallel",)),
    )(xt, wb, wm, tap_mask)

    return out.reshape(C, B, HW).transpose(1, 0, 2).reshape(B, C, H, W)


# --------------------------- deterministic parameters -------------------------

def init_params(key, in_channels):
    half = in_channels // 2
    gc = int(half * 0.25)
    heads = 4
    ks = jax.random.split(key, 18)

    def w(k, shape, scale=0.05):
        return scale * jax.random.normal(k, shape, jnp.float32)

    return {
        'dw_hw_w': w(ks[0], (gc, 1, 3, 3)),        'dw_hw_b': w(ks[1], (gc,)),
        'dw_w_w':  w(ks[2], (gc, 1, 1, 11)),       'dw_w_b':  w(ks[3], (gc,)),
        'dw_h_w':  w(ks[4], (gc, 1, 11, 1)),       'dw_h_b':  w(ks[5], (gc,)),
        'ca_w':    w(ks[6], (in_channels, in_channels, 1, 1)),
        'ca_b':    w(ks[7], (in_channels,)),
        'temperature': jnp.ones((heads, 1, 1), jnp.float32),
        'qkv_w':   w(ks[8], (3 * half, half, 1, 1)),  'qkv_b':   w(ks[9], (3 * half,)),
        'qkv_dw_w': w(ks[10], (3 * half, 1, 3, 3)),   'qkv_dw_b': w(ks[11], (3 * half,)),
        'proj_w':  w(ks[12], (half, half, 1, 1)),     'proj_b':  w(ks[13], (half,)),
        'h2l_w':   w(ks[14], (half, half, 1, 1)),     'h2l_b':   w(ks[15], (half,)),
        'l2h_w':   w(ks[16], (half, half, 1, 1)),     'l2h_b':   w(ks[17], (half,)),
    }


# ------------------------------ pure-JAX reference ----------------------------

def _ref_conv1x1(x, w, b, act=False):
    O, Cin = w.shape[0], w.shape[1]
    y = jnp.einsum('bchw,oc->bohw', x, w.reshape(O, Cin), precision=_PREC)
    y = y + b[None, :, None, None]
    return jax.nn.silu(y) if act else y


def _ref_dwconv(x, w, b, kh, kw):
    Cin = x.shape[1]
    y = jax.lax.conv_general_dilated(
        x, w, window_strides=(1, 1),
        padding=((kh // 2, kh // 2), (kw // 2, kw // 2)),
        dimension_numbers=('NCHW', 'OIHW', 'NCHW'),
        feature_group_count=Cin, precision=_PREC)
    return y + b[None, :, None, None]


def _ref_xca(x, high, p, heads=4):
    B, Cx, H, W = x.shape
    ch = Cx // heads
    qkv = _ref_dwconv(_ref_conv1x1(x, p['qkv_w'], p['qkv_b']),
                      p['qkv_dw_w'], p['qkv_dw_b'], 3, 3)
    q, k, v = jnp.split(qkv, 3, axis=1)
    v = v * high

    def rh(t):
        return t.reshape(B, heads, ch, H * W)
    q, k, v = rh(q), rh(k), rh(v)
    q = q / jnp.maximum(jnp.linalg.norm(q, axis=-1, keepdims=True), 1e-12)
    k = k / jnp.maximum(jnp.linalg.norm(k, axis=-1, keepdims=True), 1e-12)
    attn = jnp.einsum('bhcd,bhed->bhce', q, k, precision=_PREC) * p['temperature'][None]
    attn = jax.nn.softmax(attn, axis=-1)
    out = jnp.einsum('bhce,bhed->bhcd', attn, v, precision=_PREC)
    return _ref_conv1x1(out.reshape(B, Cx, H, W), p['proj_w'], p['proj_b'])


def dsa_ref(x, p, in_channels):
    half = in_channels // 2
    gc = int(half * 0.25)
    idc = half - 3 * gc
    high, low = x[:, :half], x[:, half:]
    high = jnp.concatenate([
        high[:, :idc],
        _ref_dwconv(high[:, idc:idc + gc], p['dw_hw_w'], p['dw_hw_b'], 3, 3),
        _ref_dwconv(high[:, idc + gc:idc + 2 * gc], p['dw_w_w'], p['dw_w_b'], 1, 11),
        _ref_dwconv(high[:, idc + 2 * gc:idc + 3 * gc], p['dw_h_w'], p['dw_h_b'], 11, 1),
    ], axis=1)
    low = _ref_xca(low, _ref_conv1x1(high, p['h2l_w'], p['h2l_b'], act=True), p, heads=4)
    out = jnp.concatenate([_ref_conv1x1(low, p['l2h_w'], p['l2h_b'], act=True) * high, low],
                          axis=1)
    return _ref_conv1x1(out, p['ca_w'], p['ca_b'], act=True) * x


# ------------------------------------- main ------------------------------------

if __name__ == "__main__":
    key = jax.random.PRNGKey(0)
    kx, kp = jax.random.split(key)
    in_channels = 32
    B, H, W = 2, 16, 16
    x = jax.random.normal(kx, (B, in_channels, H, W), jnp.float32)
    params = init_params(kp, in_channels)

    fwd = jax.jit(lambda xx: dsa_forward(xx, params, in_channels))
    out = jax.block_until_ready(fwd(x))

    ref = dsa_ref(x, params, in_channels)
    assert out.shape == x.shape, (out.shape, x.shape)
    err = float(jnp.max(jnp.abs(out - ref)))
    assert err < 5e-3, f"max abs err vs reference: {err}"
    print("KERNEL_OK")
</pallas_src>

<mosaic_0001>
module attributes {stable_mosaic.version = 11 : i64} {
  func.func @kernel(%arg0: i32, %arg1: memref<32x512xf32, #tpu.memory_space<vmem>>, %arg2: memref<128x32xbf16, #tpu.memory_space<vmem>>, %arg3: memref<296x16xf32, #tpu.memory_space<vmem>>, %arg4: memref<25x512xf32, #tpu.memory_space<vmem>>, %arg5: memref<32x512xf32, #tpu.memory_space<vmem>>) attributes {dimension_semantics = [#tpu.dimension_semantics<parallel>], iteration_bounds = array<i64: 1>, scalar_prefetch = 0 : i64, scratch_operands = 0 : i64, tpu.core_type = #tpu.core_type<tc>, window_params = [{transform_indices = @transform_0, window_bounds = array<i64: 32, 512>}, {pipeline_mode = #tpu.pipeline_mode<synchronous>, transform_indices = @transform_1, window_bounds = array<i64: 128, 32>}, {pipeline_mode = #tpu.pipeline_mode<synchronous>, transform_indices = @transform_2, window_bounds = array<i64: 296, 16>}, {pipeline_mode = #tpu.pipeline_mode<synchronous>, transform_indices = @transform_3, window_bounds = array<i64: 25, 512>}, {transform_indices = @transform_4, window_bounds = array<i64: 32, 512>}]} {
    %c0 = arith.constant 0 : index
    %c0_0 = arith.constant 0 : index
    %0 = vector.load %arg1[%c0, %c0_0] : memref<32x512xf32, #tpu.memory_space<vmem>>, vector<32x512xf32>
    %1 = vector.extract_strided_slice %0 {offsets = [0, 0], sizes = [16, 512], strides = [1, 1]} : vector<32x512xf32> to vector<16x512xf32>
    %2 = vector.extract_strided_slice %0 {offsets = [16, 0], sizes = [16, 512], strides = [1, 1]} : vector<32x512xf32> to vector<16x512xf32>
    %c0_1 = arith.constant 0 : index
    %c0_2 = arith.constant 0 : index
    %3 = vector.load %arg3[%c0_1, %c0_2] : memref<296x16xf32, #tpu.memory_space<vmem>>, vector<16x9xf32>
    %c17_i32 = arith.constant 17 : i32
    %4 = tpu.dynamic_rotate %1 by %c17_i32 dim 1 : vector<16x512xf32>, i32 -> vector<16x512xf32>
    %c0_3 = arith.constant 0 : index
    %c0_4 = arith.constant 0 : index
    %5 = vector.load %arg4[%c0_3, %c0_4] : memref<25x512xf32, #tpu.memory_space<vmem>>, vector<1x512xf32>
    %6 = vector.broadcast %5 : vector<1x512xf32> to vector<16x512xf32>
    %7 = arith.mulf %4, %6 : vector<16x512xf32>
    %8 = vector.extract_strided_slice %3 {offsets = [0, 0], sizes = [16, 1], strides = [1, 1]} : vector<16x9xf32> to vector<16x1xf32>
    %9 = vector.broadcast %8 : vector<16x1xf32> to vector<16x512xf32>
    %10 = arith.mulf %7, %9 : vector<16x512xf32>
    %c16_i32 = arith.constant 16 : i32
    %11 = tpu.dynamic_rotate %1 by %c16_i32 dim 1 : vector<16x512xf32>, i32 -> vector<16x512xf32>
    %c1 = arith.constant 1 : index
    %c0_5 = arith.constant 0 : index
    %12 = vector.load %arg4[%c1, %c0_5] : memref<25x512xf32, #tpu.memory_space<vmem>>, vector<1x512xf32>
    %13 = vector.broadcast %12 : vector<1x512xf32> to vector<16x512xf32>
    %14 = arith.mulf %11, %13 : vector<16x512xf32>
    %15 = vector.extract_strided_slice %3 {offsets = [0, 1], sizes = [16, 1], strides = [1, 1]} : vector<16x9xf32> to vector<16x1xf32>
    %16 = vector.broadcast %15 : vector<16x1xf32> to vector<16x512xf32>
    %17 = arith.mulf %14, %16 : vector<16x512xf32>
    %18 = arith.addf %10, %17 : vector<16x512xf32>
    %c15_i32 = arith.constant 15 : i32
    %19 = tpu.dynamic_rotate %1 by %c15_i32 dim 1 : vector<16x512xf32>, i32 -> vector<16x512xf32>
    %c2 = arith.constant 2 : index
    %c0_6 = arith.constant 0 : index
    %20 = vector.load %arg4[%c2, %c0_6] : memref<25x512xf32, #tpu.memory_space<vmem>>, vector<1x512xf32>
    %21 = vector.broadcast %20 : vector<1x512xf32> to vector<16x512xf32>
    %22 = arith.mulf %19, %21 : vector<16x512xf32>
    %23 = vector.extract_strided_slice %3 {offsets = [0, 2], sizes = [16, 1], strides = [1, 1]} : vector<16x9xf32> to vector<16x1xf32>
    %24 = vector.broadcast %23 : vector<16x1xf32> to vector<16x512xf32>
    %25 = arith.mulf %22, %24 : vector<16x512xf32>
    %26 = arith.addf %18, %25 : vector<16x512xf32>
    %c1_i32 = arith.constant 1 : i32
    %27 = tpu.dynamic_rotate %1 by %c1_i32 dim 1 : vector<16x512xf32>, i32 -> vector<16x512xf32>
    %c3 = arith.constant 3 : index
    %c0_7 = arith.constant 0 : index
    %28 = vector.load %arg4[%c3, %c0_7] : memref<25x512xf32, #tpu.memory_space<vmem>>, vector<1x512xf32>
    %29 = vector.broadcast %28 : vector<1x512xf32> to vector<16x512xf32>
    %30 = arith.mulf %27, %29 : vector<16x512xf32>
    %31 = vector.extract_strided_slice %3 {offsets = [0, 3], sizes = [16, 1], strides = [1, 1]} : vector<16x9xf32> to vector<16x1xf32>
    %32 = vector.broadcast %31 : vector<16x1xf32> to vector<16x512xf32>
    %33 = arith.mulf %30, %32 : vector<16x512xf32>
    %34 = arith.addf %26, %33 : vector<16x512xf32>
    %35 = vector.extract_strided_slice %3 {offsets = [0, 4], sizes = [16, 1], strides = [1, 1]} : vector<16x9xf32> to vector<16x1xf32>
    %36 = vector.broadcast %35 : vector<16x1xf32> to vector<16x512xf32>
    %37 = arith.mulf %1, %36 : vector<16x512xf32>
    %38 = arith.addf %34, %37 : vector<16x512xf32>
    %c511_i32 = arith.constant 511 : i32
    %39 = tpu.dynamic_rotate %1 by %c511_i32 dim 1 : vector<16x512xf32>, i32 -> vector<16x512xf32>
    %c5 = arith.constant 5 : index
    %c0_8 = arith.constant 0 : index
    %40 = vector.load %arg4[%c5, %c0_8] : memref<25x512xf32, #tpu.memory_space<vmem>>, vector<1x512xf32>
    %41 = vector.broadcast %40 : vector<1x512xf32> to vector<16x512xf32>
    %42 = arith.mulf %39, %41 : vector<16x512xf32>
    %43 = vector.extract_strided_slice %3 {offsets = [0, 5], sizes = [16, 1], strides = [1, 1]} : vector<16x9xf32> to vector<16x1xf32>
    %44 = vector.broadcast %43 : vector<16x1xf32> to vector<16x512xf32>
    %45 = arith.mulf %42, %44 : vector<16x512xf32>
    %46 = arith.addf %38, %45 : vector<16x512xf32>
    %c497_i32 = arith.constant 497 : i32
    %47 = tpu.dynamic_rotate %1 by %c497_i32 dim 1 : vector<16x512xf32>, i32 -> vector<16x512xf32>
    %c6 = arith.constant 6 : index
    %c0_9 = arith.constant 0 : index
    %48 = vector.load %arg4[%c6, %c0_9] : memref<25x512xf32, #tpu.memory_space<vmem>>, vector<1x512xf32>
    %49 = vector.broadcast %48 : vector<1x512xf32> to vector<16x512xf32>
    %50 = arith.mulf %47, %49 : vector<16x512xf32>
    %51 = vector.extract_strided_slice %3 {offsets = [0, 6], sizes = [16, 1], strides = [1, 1]} : vector<16x9xf32> to vector<16x1xf32>
    %52 = vector.broadcast %51 : vector<16x1xf32> to vector<16x512xf32>
    %53 = arith.mulf %50, %52 : vector<16x512xf32>
    %54 = arith.addf %46, %53 : vector<16x512xf32>
    %c496_i32 = arith.constant 496 : i32
    %55 = tpu.dynamic_rotate %1 by %c496_i32 dim 1 : vector<16x512xf32>, i32 -> vector<16x512xf32>
    %c7 = arith.constant 7 : index
    %c0_10 = arith.constant 0 : index
    %56 = vector.load %arg4[%c7, %c0_10] : memref<25x512xf32, #tpu.memory_space<vmem>>, vector<1x512xf32>
    %57 = vector.broadcast %56 : vector<1x512xf32> to vector<16x512xf32>
    %58 = arith.mulf %55, %57 : vector<16x512xf32>
    %59 = vector.extract_strided_slice %3 {offsets = [0, 7], sizes = [16, 1], strides = [1, 1]} : vector<16x9xf32> to vector<16x1xf32>
    %60 = vector.broadcast %59 : vector<16x1xf32> to vector<16x512xf32>
    %61 = arith.mulf %58, %60 : vector<16x512xf32>
    %62 = arith.addf %54, %61 : vector<16x512xf32>
    %c495_i32 = arith.constant 495 : i32
    %63 = tpu.dynamic_rotate %1 by %c495_i32 dim 1 : vector<16x512xf32>, i32 -> vector<16x512xf32>
    %c8 = arith.constant 8 : index
    %c0_11 = arith.constant 0 : index
    %64 = vector.load %arg4[%c8, %c0_11] : memref<25x512xf32, #tpu.memory_space<vmem>>, vector<1x512xf32>
    %65 = vector.broadcast %64 : vector<1x512xf32> to vector<16x512xf32>
    %66 = arith.mulf %63, %65 : vector<16x512xf32>
    %67 = vector.extract_strided_slice %3 {offsets = [0, 8], sizes = [16, 1], strides = [1, 1]} : vector<16x9xf32> to vector<16x1xf32>
    %68 = vector.broadcast %67 : vector<16x1xf32> to vector<16x512xf32>
    %69 = arith.mulf %66, %68 : vector<16x512xf32>
    %70 = arith.addf %62, %69 : vector<16x512xf32>
    %71 = vector.extract_strided_slice %1 {offsets = [8, 0], sizes = [8, 512], strides = [1, 1]} : vector<16x512xf32> to vector<8x512xf32>
    %c16 = arith.constant 16 : index
    %c0_12 = arith.constant 0 : index
    %72 = vector.load %arg3[%c16, %c0_12] : memref<296x16xf32, #tpu.memory_space<vmem>>, vector<8x16xf32>
    %c5_i32 = arith.constant 5 : i32
    %73 = tpu.dynamic_rotate %71 by %c5_i32 dim 1 : vector<8x512xf32>, i32 -> vector<8x512xf32>
    %c9 = arith.constant 9 : index
    %c0_13 = arith.constant 0 : index
    %74 = vector.load %arg4[%c9, %c0_13] : memref<25x512xf32, #tpu.memory_space<vmem>>, vector<1x512xf32>
    %75 = vector.broadcast %74 : vector<1x512xf32> to vector<8x512xf32>
    %76 = arith.mulf %73, %75 : vector<8x512xf32>
    %77 = vector.extract_strided_slice %72 {offsets = [0, 0], sizes = [8, 1], strides = [1, 1]} : vector<8x16xf32> to vector<8x1xf32>
    %78 = vector.broadcast %77 : vector<8x1xf32> to vector<8x512xf32>
    %79 = arith.mulf %76, %78 : vector<8x512xf32>
    %c4_i32 = arith.constant 4 : i32
    %80 = tpu.dynamic_rotate %71 by %c4_i32 dim 1 : vector<8x512xf32>, i32 -> vector<8x512xf32>
    %c10 = arith.constant 10 : index
    %c0_14 = arith.constant 0 : index
    %81 = vector.load %arg4[%c10, %c0_14] : memref<25x512xf32, #tpu.memory_space<vmem>>, vector<1x512xf32>
    %82 = vector.broadcast %81 : vector<1x512xf32> to vector<8x512xf32>
    %83 = arith.mulf %80, %82 : vector<8x512xf32>
    %84 = vector.extract_strided_slice %72 {offsets = [0, 1], sizes = [8, 1], strides = [1, 1]} : vector<8x16xf32> to vector<8x1xf32>
    %85 = vector.broadcast %84 : vector<8x1xf32> to vector<8x512xf32>
    %86 = arith.mulf %83, %85 : vector<8x512xf32>
    %87 = arith.addf %79, %86 : vector<8x512xf32>
    %c3_i32 = arith.constant 3 : i32
    %88 = tpu.dynamic_rotate %71 by %c3_i32 dim 1 : vector<8x512xf32>, i32 -> vector<8x512xf32>
    %c11 = arith.constant 11 : index
    %c0_15 = arith.constant 0 : index
    %89 = vector.load %arg4[%c11, %c0_15] : memref<25x512xf32, #tpu.memory_space<vmem>>, vector<1x512xf32>
    %90 = vector.broadcast %89 : vector<1x512xf32> to vector<8x512xf32>
    %91 = arith.mulf %88, %90 : vector<8x512xf32>
    %92 = vector.extract_strided_slice %72 {offsets = [0, 2], sizes = [8, 1], strides = [1, 1]} : vector<8x16xf32> to vector<8x1xf32>
    %93 = vector.broadcast %92 : vector<8x1xf32> to vector<8x512xf32>
    %94 = arith.mulf %91, %93 : vector<8x512xf32>
    %95 = arith.addf %87, %94 : vector<8x512xf32>
    %c2_i32 = arith.constant 2 : i32
    %96 = tpu.dynamic_rotate %71 by %c2_i32 dim 1 : vector<8x512xf32>, i32 -> vector<8x512xf32>
    %c12 = arith.constant 12 : index
    %c0_16 = arith.constant 0 : index
    %97 = vector.load %arg4[%c12, %c0_16] : memref<25x512xf32, #tpu.memory_space<vmem>>, vector<1x512xf32>
    %98 = vector.broadcast %97 : vector<1x512xf32> to vector<8x512xf32>
    %99 = arith.mulf %96, %98 : vector<8x512xf32>
    %100 = vector.extract_strided_slice %72 {offsets = [0, 3], sizes = [8, 1], strides = [1, 1]} : vector<8x16xf32> to vector<8x1xf32>
    %101 = vector.broadcast %100 : vector<8x1xf32> to vector<8x512xf32>
    %102 = arith.mulf %99, %101 : vector<8x512xf32>
    %103 = arith.addf %95, %102 : vector<8x512xf32>
    %c510_i32 = arith.constant 510 : i32
    %104 = tpu.dynamic_rotate %71 by %c510_i32 dim 1 : vector<8x512xf32>, i32 -> vector<8x512xf32>
    %c13 = arith.constant 13 : index
    %c0_17 = arith.constant 0 : index
    %105 = vector.load %arg4[%c13, %c0_17] : memref<25x512xf32, #tpu.memory_space<vmem>>, vector<1x512xf32>
    %106 = vector.broadcast %105 : vector<1x512xf32> to vector<8x512xf32>
    %107 = arith.mulf %104, %106 : vector<8x512xf32>
    %108 = vector.extract_strided_slice %72 {offsets = [0, 4], sizes = [8, 1], strides = [1, 1]} : vector<8x16xf32> to vector<8x1xf32>
    %109 = vector.broadcast %108 : vector<8x1xf32> to vector<8x512xf32>
    %110 = arith.mulf %107, %109 : vector<8x512xf32>
    %111 = arith.addf %103, %110 : vector<8x512xf32>
    %c509_i32 = arith.constant 509 : i32
    %112 = tpu.dynamic_rotate %71 by %c509_i32 dim 1 : vector<8x512xf32>, i32 -> vector<8x512xf32>
    %c14 = arith.constant 14 : index
    %c0_18 = arith.constant 0 : index
    %113 = vector.load %arg4[%c14, %c0_18] : memref<25x512xf32, #tpu.memory_space<vmem>>, vector<1x512xf32>
    %114 = vector.broadcast %113 : vector<1x512xf32> to vector<8x512xf32>
    %115 = arith.mulf %112, %114 : vector<8x512xf32>
    %116 = vector.extract_strided_slice %72 {offsets = [0, 5], sizes = [8, 1], strides = [1, 1]} : vector<8x16xf32> to vector<8x1xf32>
    %117 = vector.broadcast %116 : vector<8x1xf32> to vector<8x512xf32>
    %118 = arith.mulf %115, %117 : vector<8x512xf32>
    %119 = arith.addf %111, %118 : vector<8x512xf32>
    %c508_i32 = arith.constant 508 : i32
    %120 = tpu.dynamic_rotate %71 by %c508_i32 dim 1 : vector<8x512xf32>, i32 -> vector<8x512xf32>
    %c15 = arith.constant 15 : index
    %c0_19 = arith.constant 0 : index
    %121 = vector.load %arg4[%c15, %c0_19] : memref<25x512xf32, #tpu.memory_space<vmem>>, vector<1x512xf32>
    %122 = vector.broadcast %121 : vector<1x512xf32> to vector<8x512xf32>
    %123 = arith.mulf %120, %122 : vector<8x512xf32>
    %124 = vector.extract_strided_slice %72 {offsets = [0, 6], sizes = [8, 1], strides = [1, 1]} : vector<8x16xf32> to vector<8x1xf32>
    %125 = vector.broadcast %124 : vector<8x1xf32> to vector<8x512xf32>
    %126 = arith.mulf %123, %125 : vector<8x512xf32>
    %127 = arith.addf %119, %126 : vector<8x512xf32>
    %c507_i32 = arith.constant 507 : i32
    %128 = tpu.dynamic_rotate %71 by %c507_i32 dim 1 : vector<8x512xf32>, i32 -> vector<8x512xf32>
    %c16_20 = arith.constant 16 : index
    %c0_21 = arith.constant 0 : index
    %129 = vector.load %arg4[%c16_20, %c0_21] : memref<25x512xf32, #tpu.memory_space<vmem>>, vector<1x512xf32>
    %130 = vector.broadcast %129 : vector<1x512xf32> to vector<8x512xf32>
    %131 = arith.mulf %128, %130 : vector<8x512xf32>
    %132 = vector.extract_strided_slice %72 {offsets = [0, 7], sizes = [8, 1], strides = [1, 1]} : vector<8x16xf32> to vector<8x1xf32>
    %133 = vector.broadcast %132 : vector<8x1xf32> to vector<8x512xf32>
    %134 = arith.mulf %131, %133 : vector<8x512xf32>
    %135 = arith.addf %127, %134 : vector<8x512xf32>
    %c80_i32 = arith.constant 80 : i32
    %136 = tpu.dynamic_rotate %71 by %c80_i32 dim 1 : vector<8x512xf32>, i32 -> vector<8x512xf32>
    %c17 = arith.constant 17 : index
    %c0_22 = arith.constant 0 : index
    %137 = vector.load %arg4[%c17, %c0_22] : memref<25x512xf32, #tpu.memory_space<vmem>>, vector<1x512xf32>
    %138 = vector.broadcast %137 : vector<1x512xf32> to vector<8x512xf32>
    %139 = arith.mulf %136, %138 : vector<8x512xf32>
    %140 = vector.extract_strided_slice %72 {offsets = [0, 8], sizes = [8, 1], strides = [1, 1]} : vector<8x16xf32> to vector<8x1xf32>
    %141 = vector.broadcast %140 : vector<8x1xf32> to vector<8x512xf32>
    %142 = arith.mulf %139, %141 : vector<8x512xf32>
    %143 = arith.addf %135, %142 : vector<8x512xf32>
    %c64_i32 = arith.constant 64 : i32
    %144 = tpu.dynamic_rotate %71 by %c64_i32 dim 1 : vector<8x512xf32>, i32 -> vector<8x512xf32>
    %c18 = arith.constant 18 : index
    %c0_23 = arith.constant 0 : index
    %145 = vector.load %arg4[%c18, %c0_23] : memref<25x512xf32, #tpu.memory_space<vmem>>, vector<1x512xf32>
    %146 = vector.broadcast %145 : vector<1x512xf32> to vector<8x512xf32>
    %147 = arith.mulf %144, %146 : vector<8x512xf32>
    %148 = vector.extract_strided_slice %72 {offsets = [0, 9], sizes = [8, 1], strides = [1, 1]} : vector<8x16xf32> to vector<8x1xf32>
    %149 = vector.broadcast %148 : vector<8x1xf32> to vector<8x512xf32>
    %150 = arith.mulf %147, %149 : vector<8x512xf32>
    %151 = arith.addf %143, %150 : vector<8x512xf32>
    %c48_i32 = arith.constant 48 : i32
    %152 = tpu.dynamic_rotate %71 by %c48_i32 dim 1 : vector<8x512xf32>, i32 -> vector<8x512xf32>
    %c19 = arith.constant 19 : index
    %c0_24 = arith.constant 0 : index
    %153 = vector.load %arg4[%c19, %c0_24] : memref<25x512xf32, #tpu.memory_space<vmem>>, vector<1x512xf32>
    %154 = vector.broadcast %153 : vector<1x512xf32> to vector<8x512xf32>
    %155 = arith.mulf %152, %154 : vector<8x512xf32>
    %156 = vector.extract_strided_slice %72 {offsets = [0, 10], sizes = [8, 1], strides = [1, 1]} : vector<8x16xf32> to vector<8x1xf32>
    %157 = vector.broadcast %156 : vector<8x1xf32> to vector<8x512xf32>
    %158 = arith.mulf %155, %157 : vector<8x512xf32>
    %159 = arith.addf %151, %158 : vector<8x512xf32>
    %c32_i32 = arith.constant 32 : i32
    %160 = tpu.dynamic_rotate %71 by %c32_i32 dim 1 : vector<8x512xf32>, i32 -> vector<8x512xf32>
    %c20 = arith.constant 20 : index
    %c0_25 = arith.constant 0 : index
    %161 = vector.load %arg4[%c20, %c0_25] : memref<25x512xf32, #tpu.memory_space<vmem>>, vector<1x512xf32>
    %162 = vector.broadcast %161 : vector<1x512xf32> to vector<8x512xf32>
    %163 = arith.mulf %160, %162 : vector<8x512xf32>
    %164 = vector.extract_strided_slice %72 {offsets = [0, 11], sizes = [8, 1], strides = [1, 1]} : vector<8x16xf32> to vector<8x1xf32>
    %165 = vector.broadcast %164 : vector<8x1xf32> to vector<8x512xf32>
    %166 = arith.mulf %163, %165 : vector<8x512xf32>
    %167 = arith.addf %159, %166 : vector<8x512xf32>
    %c480_i32 = arith.constant 480 : i32
    %168 = tpu.dynamic_rotate %71 by %c480_i32 dim 1 : vector<8x512xf32>, i32 -> vector<8x512xf32>
    %c21 = arith.constant 21 : index
    %c0_26 = arith.constant 0 : index
    %169 = vector.load %arg4[%c21, %c0_26] : memref<25x512xf32, #tpu.memory_space<vmem>>, vector<1x512xf32>
    %170 = vector.broadcast %169 : vector<1x512xf32> to vector<8x512xf32>
    %171 = arith.mulf %168, %170 : vector<8x512xf32>
    %172 = vector.extract_strided_slice %72 {offsets = [0, 12], sizes = [8, 1], strides = [1, 1]} : vector<8x16xf32> to vector<8x1xf32>
    %173 = vector.broadcast %172 : vector<8x1xf32> to vector<8x512xf32>
    %174 = arith.mulf %171, %173 : vector<8x512xf32>
    %175 = arith.addf %167, %174 : vector<8x512xf32>
    %c464_i32 = arith.constant 464 : i32
    %176 = tpu.dynamic_rotate %71 by %c464_i32 dim 1 : vector<8x512xf32>, i32 -> vector<8x512xf32>
    %c22 = arith.constant 22 : index
    %c0_27 = arith.constant 0 : index
    %177 = vector.load %arg4[%c22, %c0_27] : memref<25x512xf32, #tpu.memory_space<vmem>>, vector<1x512xf32>
    %178 = vector.broadcast %177 : vector<1x512xf32> to vector<8x512xf32>
    %179 = arith.mulf %176, %178 : vector<8x512xf32>
    %180 = vector.extract_strided_slice %72 {offsets = [0, 13], sizes = [8, 1], strides = [1, 1]} : vector<8x16xf32> to vector<8x1xf32>
    %181 = vector.broadcast %180 : vector<8x1xf32> to vector<8x512xf32>
    %182 = arith.mulf %179, %181 : vector<8x512xf32>
    %183 = arith.addf %175, %182 : vector<8x512xf32>
    %c448_i32 = arith.constant 448 : i32
    %184 = tpu.dynamic_rotate %71 by %c448_i32 dim 1 : vector<8x512xf32>, i32 -> vector<8x512xf32>
    %c23 = arith.constant 23 : index
    %c0_28 = arith.constant 0 : index
    %185 = vector.load %arg4[%c23, %c0_28] : memref<25x512xf32, #tpu.memory_space<vmem>>, vector<1x512xf32>
    %186 = vector.broadcast %185 : vector<1x512xf32> to vector<8x512xf32>
    %187 = arith.mulf %184, %186 : vector<8x512xf32>
    %188 = vector.extract_strided_slice %72 {offsets = [0, 14], sizes = [8, 1], strides = [1, 1]} : vector<8x16xf32> to vector<8x1xf32>
    %189 = vector.broadcast %188 : vector<8x1xf32> to vector<8x512xf32>
    %190 = arith.mulf %187, %189 : vector<8x512xf32>
    %191 = arith.addf %183, %190 : vector<8x512xf32>
    %c432_i32 = arith.constant 432 : i32
    %192 = tpu.dynamic_rotate %71 by %c432_i32 dim 1 : vector<8x512xf32>, i32 -> vector<8x512xf32>
    %c24 = arith.constant 24 : index
    %c0_29 = arith.constant 0 : index
    %193 = vector.load %arg4[%c24, %c0_29] : memref<25x512xf32, #tpu.memory_space<vmem>>, vector<1x512xf32>
    %194 = vector.broadcast %193 : vector<1x512xf32> to vector<8x512xf32>
    %195 = arith.mulf %192, %194 : vector<8x512xf32>
    %196 = vector.extract_strided_slice %72 {offsets = [0, 15], sizes = [8, 1], strides = [1, 1]} : vector<8x16xf32> to vector<8x1xf32>
    %197 = vector.broadcast %196 : vector<8x1xf32> to vector<8x512xf32>
    %198 = arith.mulf %195, %197 : vector<8x512xf32>
    %199 = arith.addf %191, %198 : vector<8x512xf32>
    %200 = vector.extract_strided_slice %70 {offsets = [0, 0], sizes = [8, 512], strides = [1, 1]} : vector<16x512xf32> to vector<8x512xf32>
    %201 = vector.extract_strided_slice %70 {offsets = [8, 0], sizes = [8, 512], strides = [1, 1]} : vector<16x512xf32> to vector<8x512xf32>
    %202 = arith.addf %201, %199 : vector<8x512xf32>
    %203 = tpu.concatenate %200, %202 in 0 : vector<8x512xf32>, vector<8x512xf32> -> vector<16x512xf32>
    %c72 = arith.constant 72 : index
    %c0_30 = arith.constant 0 : index
    %204 = vector.load %arg3[%c72, %c0_30] : memref<296x16xf32, #tpu.memory_space<vmem>>, vector<16x1xf32>
    %205 = vector.broadcast %204 : vector<16x1xf32> to vector<16x512xf32>
    %206 = arith.addf %203, %205 : vector<16x512xf32>
    %207 = tpu.concatenate %206, %2 in 0 : vector<16x512xf32>, vector<16x512xf32> -> vector<32x512xf32>
    %c0_31 = arith.constant 0 : index
    %c0_32 = arith.constant 0 : index
    %208 = vector.load %arg2[%c0_31, %c0_32] : memref<128x32xbf16, #tpu.memory_space<vmem>>, vector<64x32xbf16>
    %209 = arith.truncf %207 : vector<32x512xf32> to vector<32x512xbf16>
    %cst = arith.constant dense<0.000000e+00> : vector<64x512xf32>
    %210 = tpu.matmul %208, %209, %cst {dimension_numbers = #tpu.dot_dimension_numbers<[1], [0], [0], [1], [0, 0, 1, 1], [], []>} : vector<64x32xbf16>, vector<32x512xbf16>, vector<64x512xf32> -> vector<64x512xf32>
    %c88 = arith.constant 88 : index
    %c0_33 = arith.constant 0 : index
    %211 = vector.load %arg3[%c88, %c0_33] : memref<296x16xf32, #tpu.memory_space<vmem>>, vector<64x1xf32>
    %212 = vector.broadcast %211 : vector<64x1xf32> to vector<64x512xf32>
    %213 = arith.addf %210, %212 : vector<64x512xf32>
    %214 = vector.extract_strided_slice %213 {offsets = [0, 0], sizes = [16, 512], strides = [1, 1]} : vector<64x512xf32> to vector<16x512xf32>
    %215 = arith.negf %214 : vector<16x512xf32>
    %216 = math.exp %215 : vector<16x512xf32>
    %cst_34 = arith.constant 1.000000e+00 : f32
    %217 = vector.broadcast %cst_34 : f32 to vector<16x512xf32>
    %218 = arith.addf %217, %216 : vector<16x512xf32>
    %219 = arith.divf %217, %218 : vector<16x512xf32>
    %220 = arith.mulf %214, %219 : vector<16x512xf32>
    %221 = vector.extract_strided_slice %213 {offsets = [16, 0], sizes = [48, 512], strides = [1, 1]} : vector<64x512xf32> to vector<48x512xf32>
    %c24_35 = arith.constant 24 : index
    %c0_36 = arith.constant 0 : index
    %222 = vector.load %arg3[%c24_35, %c0_36] : memref<296x16xf32, #tpu.memory_space<vmem>>, vector<48x9xf32>
    %c17_i32_37 = arith.constant 17 : i32
    %223 = tpu.dynamic_rotate %221 by %c17_i32_37 dim 1 : vector<48x512xf32>, i32 -> vector<48x512xf32>
    %c0_38 = arith.constant 0 : index
    %c0_39 = arith.constant 0 : index
    %224 = vector.load %arg4[%c0_38, %c0_39] : memref<25x512xf32, #tpu.memory_space<vmem>>, vector<1x512xf32>
    %225 = vector.broadcast %224 : vector<1x512xf32> to vector<48x512xf32>
    %226 = arith.mulf %223, %225 : vector<48x512xf32>
    %227 = vector.extract_strided_slice %222 {offsets = [0, 0], sizes = [48, 1], strides = [1, 1]} : vector<48x9xf32> to vector<48x1xf32>
    %228 = vector.broadcast %227 : vector<48x1xf32> to vector<48x512xf32>
    %229 = arith.mulf %226, %228 : vector<48x512xf32>
    %c16_i32_40 = arith.constant 16 : i32
    %230 = tpu.dynamic_rotate %221 by %c16_i32_40 dim 1 : vector<48x512xf32>, i32 -> vector<48x512xf32>
    %c1_41 = arith.constant 1 : index
    %c0_42 = arith.constant 0 : index
    %231 = vector.load %arg4[%c1_41, %c0_42] : memref<25x512xf32, #tpu.memory_space<vmem>>, vector<1x512xf32>
    %232 = vector.broadcast %231 : vector<1x512xf32> to vector<48x512xf32>
    %233 = arith.mulf %230, %232 : vector<48x512xf32>
    %234 = vector.extract_strided_slice %222 {offsets = [0, 1], sizes = [48, 1], strides = [1, 1]} : vector<48x9xf32> to vector<48x1xf32>
    %235 = vector.broadcast %234 : vector<48x1xf32> to vector<48x512xf32>
    %236 = arith.mulf %233, %235 : vector<48x512xf32>
    %237 = arith.addf %229, %236 : vector<48x512xf32>
    %c15_i32_43 = arith.constant 15 : i32
    %238 = tpu.dynamic_rotate %221 by %c15_i32_43 dim 1 : vector<48x512xf32>, i32 -> vector<48x512xf32>
    %c2_44 = arith.constant 2 : index
    %c0_45 = arith.constant 0 : index
    %239 = vector.load %arg4[%c2_44, %c0_45] : memref<25x512xf32, #tpu.memory_space<vmem>>, vector<1x512xf32>
    %240 = vector.broadcast %239 : vector<1x512xf32> to vector<48x512xf32>
    %241 = arith.mulf %238, %240 : vector<48x512xf32>
    %242 = vector.extract_strided_slice %222 {offsets = [0, 2], sizes = [48, 1], strides = [1, 1]} : vector<48x9xf32> to vector<48x1xf32>
    %243 = vector.broadcast %242 : vector<48x1xf32> to vector<48x512xf32>
    %244 = arith.mulf %241, %243 : vector<48x512xf32>
    %245 = arith.addf %237, %244 : vector<48x512xf32>
    %c1_i32_46 = arith.constant 1 : i32
    %246 = tpu.dynamic_rotate %221 by %c1_i32_46 dim 1 : vector<48x512xf32>, i32 -> vector<48x512xf32>
    %c3_47 = arith.constant 3 : index
    %c0_48 = arith.constant 0 : index
    %247 = vector.load %arg4[%c3_47, %c0_48] : memref<25x512xf32, #tpu.memory_space<vmem>>, vector<1x512xf32>
    %248 = vector.broadcast %247 : vector<1x512xf32> to vector<48x512xf32>
    %249 = arith.mulf %246, %248 : vector<48x512xf32>
    %250 = vector.extract_strided_slice %222 {offsets = [0, 3], sizes = [48, 1], strides = [1, 1]} : vector<48x9xf32> to vector<48x1xf32>
    %251 = vector.broadcast %250 : vector<48x1xf32> to vector<48x512xf32>
    %252 = arith.mulf %249, %251 : vector<48x512xf32>
    %253 = arith.addf %245, %252 : vector<48x512xf32>
    %254 = vector.extract_strided_slice %222 {offsets = [0, 4], sizes = [48, 1], strides = [1, 1]} : vector<48x9xf32> to vector<48x1xf32>
    %255 = vector.broadcast %254 : vector<48x1xf32> to vector<48x512xf32>
    %256 = arith.mulf %221, %255 : vector<48x512xf32>
    %257 = arith.addf %253, %256 : vector<48x512xf32>
    %c511_i32_49 = arith.constant 511 : i32
    %258 = tpu.dynamic_rotate %221 by %c511_i32_49 dim 1 : vector<48x512xf32>, i32 -> vector<48x512xf32>
    %c5_50 = arith.constant 5 : index
    %c0_51 = arith.constant 0 : index
    %259 = vector.load %arg4[%c5_50, %c0_51] : memref<25x512xf32, #tpu.memory_space<vmem>>, vector<1x512xf32>
    %260 = vector.broadcast %259 : vector<1x512xf32> to vector<48x512xf32>
    %261 = arith.mulf %258, %260 : vector<48x512xf32>
    %262 = vector.extract_strided_slice %222 {offsets = [0, 5], sizes = [48, 1], strides = [1, 1]} : vector<48x9xf32> to vector<48x1xf32>
    %263 = vector.broadcast %262 : vector<48x1xf32> to vector<48x512xf32>
    %264 = arith.mulf %261, %263 : vector<48x512xf32>
    %265 = arith.addf %257, %264 : vector<48x512xf32>
    %c497_i32_52 = arith.constant 497 : i32
    %266 = tpu.dynamic_rotate %221 by %c497_i32_52 dim 1 : vector<48x512xf32>, i32 -> vector<48x512xf32>
    %c6_53 = arith.constant 6 : index
    %c0_54 = arith.constant 0 : index
    %267 = vector.load %arg4[%c6_53, %c0_54] : memref<25x512xf32, #tpu.memory_space<vmem>>, vector<1x512xf32>
    %268 = vector.broadcast %267 : vector<1x512xf32> to vector<48x512xf32>
    %269 = arith.mulf %266, %268 : vector<48x512xf32>
    %270 = vector.extract_strided_slice %222 {offsets = [0, 6], sizes = [48, 1], strides = [1, 1]} : vector<48x9xf32> to vector<48x1xf32>
    %271 = vector.broadcast %270 : vector<48x1xf32> to vector<48x512xf32>
    %272 = arith.mulf %269, %271 : vector<48x512xf32>
    %273 = arith.addf %265, %272 : vector<48x512xf32>
    %c496_i32_55 = arith.constant 496 : i32
    %274 = tpu.dynamic_rotate %221 by %c496_i32_55 dim 1 : vector<48x512xf32>, i32 -> vector<48x512xf32>
    %c7_56 = arith.constant 7 : index
    %c0_57 = arith.constant 0 : index
    %275 = vector.load %arg4[%c7_56, %c0_57] : memref<25x512xf32, #tpu.memory_space<vmem>>, vector<1x512xf32>
    %276 = vector.broadcast %275 : vector<1x512xf32> to vector<48x512xf32>
    %277 = arith.mulf %274, %276 : vector<48x512xf32>
    %278 = vector.extract_strided_slice %222 {offsets = [0, 7], sizes = [48, 1], strides = [1, 1]} : vector<48x9xf32> to vector<48x1xf32>
    %279 = vector.broadcast %278 : vector<48x1xf32> to vector<48x512xf32>
    %280 = arith.mulf %277, %279 : vector<48x512xf32>
    %281 = arith.addf %273, %280 : vector<48x512xf32>
    %c495_i32_58 = arith.constant 495 : i32
    %282 = tpu.dynamic_rotate %221 by %c495_i32_58 dim 1 : vector<48x512xf32>, i32 -> vector<48x512xf32>
    %c8_59 = arith.constant 8 : index
    %c0_60 = arith.constant 0 : index
    %283 = vector.load %arg4[%c8_59, %c0_60] : memref<25x512xf32, #tpu.memory_space<vmem>>, vector<1x512xf32>
    %284 = vector.broadcast %283 : vector<1x512xf32> to vector<48x512xf32>
    %285 = arith.mulf %282, %284 : vector<48x512xf32>
    %286 = vector.extract_strided_slice %222 {offsets = [0, 8], sizes = [48, 1], strides = [1, 1]} : vector<48x9xf32> to vector<48x1xf32>
    %287 = vector.broadcast %286 : vector<48x1xf32> to vector<48x512xf32>
    %288 = arith.mulf %285, %287 : vector<48x512xf32>
    %289 = arith.addf %281, %288 : vector<48x512xf32>
    %c152 = arith.constant 152 : index
    %c0_61 = arith.constant 0 : index
    %290 = vector.load %arg3[%c152, %c0_61] : memref<296x16xf32, #tpu.memory_space<vmem>>, vector<48x1xf32>
    %291 = vector.broadcast %290 : vector<48x1xf32> to vector<48x512xf32>
    %292 = arith.addf %289, %291 : vector<48x512xf32>
    %293 = vector.extract_strided_slice %292 {offsets = [0, 0], sizes = [16, 512], strides = [1, 1]} : vector<48x512xf32> to vector<16x512xf32>
    %294 = vector.extract_strided_slice %292 {offsets = [16, 0], sizes = [16, 512], strides = [1, 1]} : vector<48x512xf32> to vector<16x512xf32>
    %295 = vector.extract_strided_slice %292 {offsets = [32, 0], sizes = [16, 512], strides = [1, 1]} : vector<48x512xf32> to vector<16x512xf32>
    %296 = arith.mulf %295, %220 : vector<16x512xf32>
    %c264 = arith.constant 264 : index
    %c0_62 = arith.constant 0 : index
    %297 = vector.load %arg3[%c264, %c0_62] : memref<296x16xf32, #tpu.memory_space<vmem>>, vector<16x1xf32>
    %c280 = arith.constant 280 : index
    %c0_63 = arith.constant 0 : index
    %298 = vector.load %arg3[%c280, %c0_63] : memref<296x16xf32, #tpu.memory_space<vmem>>, vector<16x16xf32>
    %299 = vector.extract_strided_slice %293 {offsets = [0, 0], sizes = [16, 256], strides = [1, 1]} : vector<16x512xf32> to vector<16x256xf32>
    %300 = arith.mulf %299, %299 : vector<16x256xf32>
    %cst_64 = arith.constant dense<0.000000e+00> : vector<16xf32>
    %301 = vector.multi_reduction <add>, %300, %cst_64 [1] : vector<16x256xf32> to vector<16xf32>
    %302 = vector.shape_cast %301 : vector<16xf32> to vector<16x1xf32>
    %cst_65 = arith.constant 1.000000e-24 : f32
    %303 = vector.broadcast %cst_65 : f32 to vector<16x1xf32>
    %304 = arith.maximumf %302, %303 : vector<16x1xf32>
    %305 = math.rsqrt %304 : vector<16x1xf32>
    %306 = vector.broadcast %305 : vector<16x1xf32> to vector<16x256xf32>
    %307 = arith.mulf %299, %306 : vector<16x256xf32>
    %308 = vector.extract_strided_slice %294 {offsets = [0, 0], sizes = [16, 256], strides = [1, 1]} : vector<16x512xf32> to vector<16x256xf32>
    %309 = arith.mulf %308, %308 : vector<16x256xf32>
    %cst_66 = arith.constant dense<0.000000e+00> : vector<16xf32>
    %310 = vector.multi_reduction <add>, %309, %cst_66 [1] : vector<16x256xf32> to vector<16xf32>
    %311 = vector.shape_cast %310 : vector<16xf32> to vector<16x1xf32>
    %cst_67 = arith.constant 1.000000e-24 : f32
    %312 = vector.broadcast %cst_67 : f32 to vector<16x1xf32>
    %313 = arith.maximumf %311, %312 : vector<16x1xf32>
    %314 = math.rsqrt %313 : vector<16x1xf32>
    %315 = vector.broadcast %314 : vector<16x1xf32> to vector<16x256xf32>
    %316 = arith.mulf %308, %315 : vector<16x256xf32>
    %317 = tpu.transpose %316, [1, 0] : vector<16x256xf32> -> vector<256x16xf32>
    %cst_68 = arith.constant dense<0.000000e+00> : vector<16x16xf32>
    %318 = tpu.matmul %307, %317, %cst_68 {dimension_numbers = #tpu.dot_dimension_numbers<[1], [0], [0], [1], [0, 0, 1, 1], [], []>} : vector<16x256xf32>, vector<256x16xf32>, vector<16x16xf32> -> vector<16x16xf32>
    %319 = vector.broadcast %297 : vector<16x1xf32> to vector<16x16xf32>
    %320 = arith.mulf %318, %319 : vector<16x16xf32>
    %321 = arith.addf %320, %298 : vector<16x16xf32>
    %cst_69 = arith.constant dense<0xFF800000> : vector<16xf32>
    %322 = vector.multi_reduction <maximumf>, %321, %cst_69 [1] : vector<16x16xf32> to vector<16xf32>
    %323 = vector.shape_cast %322 : vector<16xf32> to vector<16x1xf32>
    %324 = vector.broadcast %323 : vector<16x1xf32> to vector<16x16xf32>
    %325 = arith.subf %321, %324 : vector<16x16xf32>
    %326 = math.exp %325 : vector<16x16xf32>
    %cst_70 = arith.constant dense<0.000000e+00> : vector<16xf32>
    %327 = vector.multi_reduction <add>, %326, %cst_70 [1] : vector<16x16xf32> to vector<16xf32>
    %328 = vector.shape_cast %327 : vector<16xf32> to vector<16x1xf32>
    %329 = vector.broadcast %328 : vector<16x1xf32> to vector<16x16xf32>
    %330 = arith.divf %326, %329 : vector<16x16xf32>
    %331 = vector.extract_strided_slice %296 {offsets = [0, 0], sizes = [16, 256], strides = [1, 1]} : vector<16x512xf32> to vector<16x256xf32>
    %cst_71 = arith.constant dense<0.000000e+00> : vector<16x256xf32>
    %332 = tpu.matmul %330, %331, %cst_71 {dimension_numbers = #tpu.dot_dimension_numbers<[1], [0], [0], [1], [0, 0, 1, 1], [], []>} : vector<16x16xf32>, vector<16x256xf32>, vector<16x256xf32> -> vector<16x256xf32>
    %333 = vector.extract_strided_slice %293 {offsets = [0, 256], sizes = [16, 256], strides = [1, 1]} : vector<16x512xf32> to vector<16x256xf32>
    %334 = arith.mulf %333, %333 : vector<16x256xf32>
    %cst_72 = arith.constant dense<0.000000e+00> : vector<16xf32>
    %335 = vector.multi_reduction <add>, %334, %cst_72 [1] : vector<16x256xf32> to vector<16xf32>
    %336 = vector.shape_cast %335 : vector<16xf32> to vector<16x1xf32>
    %cst_73 = arith.constant 1.000000e-24 : f32
    %337 = vector.broadcast %cst_73 : f32 to vector<16x1xf32>
    %338 = arith.maximumf %336, %337 : vector<16x1xf32>
    %339 = math.rsqrt %338 : vector<16x1xf32>
    %340 = vector.broadcast %339 : vector<16x1xf32> to vector<16x256xf32>
    %341 = arith.mulf %333, %340 : vector<16x256xf32>
    %342 = vector.extract_strided_slice %294 {offsets = [0, 256], sizes = [16, 256], strides = [1, 1]} : vector<16x512xf32> to vector<16x256xf32>
    %343 = arith.mulf %342, %342 : vector<16x256xf32>
    %cst_74 = arith.constant dense<0.000000e+00> : vector<16xf32>
    %344 = vector.multi_reduction <add>, %343, %cst_74 [1] : vector<16x256xf32> to vector<16xf32>
    %345 = vector.shape_cast %344 : vector<16xf32> to vector<16x1xf32>
    %cst_75 = arith.constant 1.000000e-24 : f32
    %346 = vector.broadcast %cst_75 : f32 to vector<16x1xf32>
    %347 = arith.maximumf %345, %346 : vector<16x1xf32>
    %348 = math.rsqrt %347 : vector<16x1xf32>
    %349 = vector.broadcast %348 : vector<16x1xf32> to vector<16x256xf32>
    %350 = arith.mulf %342, %349 : vector<16x256xf32>
    %351 = tpu.transpose %350, [1, 0] : vector<16x256xf32> -> vector<256x16xf32>
    %cst_76 = arith.constant dense<0.000000e+00> : vector<16x16xf32>
    %352 = tpu.matmul %341, %351, %cst_76 {dimension_numbers = #tpu.dot_dimension_numbers<[1], [0], [0], [1], [0, 0, 1, 1], [], []>} : vector<16x256xf32>, vector<256x16xf32>, vector<16x16xf32> -> vector<16x16xf32>
    %353 = vector.broadcast %297 : vector<16x1xf32> to vector<16x16xf32>
    %354 = arith.mulf %352, %353 : vector<16x16xf32>
    %355 = arith.addf %354, %298 : vector<16x16xf32>
    %cst_77 = arith.constant dense<0xFF800000> : vector<16xf32>
    %356 = vector.multi_reduction <maximumf>, %355, %cst_77 [1] : vector<16x16xf32> to vector<16xf32>
    %357 = vector.shape_cast %356 : vector<16xf32> to vector<16x1xf32>
    %358 = vector.broadcast %357 : vector<16x1xf32> to vector<16x16xf32>
    %359 = arith.subf %355, %358 : vector<16x16xf32>
    %360 = math.exp %359 : vector<16x16xf32>
    %cst_78 = arith.constant dense<0.000000e+00> : vector<16xf32>
    %361 = vector.multi_reduction <add>, %360, %cst_78 [1] : vector<16x16xf32> to vector<16xf32>
    %362 = vector.shape_cast %361 : vector<16xf32> to vector<16x1xf32>
    %363 = vector.broadcast %362 : vector<16x1xf32> to vector<16x16xf32>
    %364 = arith.divf %360, %363 : vector<16x16xf32>
    %365 = vector.extract_strided_slice %296 {offsets = [0, 256], sizes = [16, 256], strides = [1, 1]} : vector<16x512xf32> to vector<16x256xf32>
    %cst_79 = arith.constant dense<0.000000e+00> : vector<16x256xf32>
    %366 = tpu.matmul %364, %365, %cst_79 {dimension_numbers = #tpu.dot_dimension_numbers<[1], [0], [0], [1], [0, 0, 1, 1], [], []>} : vector<16x16xf32>, vector<16x256xf32>, vector<16x256xf32> -> vector<16x256xf32>
    %367 = tpu.concatenate %332, %366 in 1 : vector<16x256xf32>, vector<16x256xf32> -> vector<16x512xf32>
    %c64 = arith.constant 64 : index
    %c0_80 = arith.constant 0 : index
    %368 = vector.load %arg2[%c64, %c0_80] : memref<128x32xbf16, #tpu.memory_space<vmem>>, vector<16x16xbf16>
    %369 = arith.truncf %367 : vector<16x512xf32> to vector<16x512xbf16>
    %cst_81 = arith.constant dense<0.000000e+00> : vector<16x512xf32>
    %370 = tpu.matmul %368, %369, %cst_81 {dimension_numbers = #tpu.dot_dimension_numbers<[1], [0], [0], [1], [0, 0, 1, 1], [], []>} : vector<16x16xbf16>, vector<16x512xbf16>, vector<16x512xf32> -> vector<16x512xf32>
    %c200 = arith.constant 200 : index
    %c0_82 = arith.constant 0 : index
    %371 = vector.load %arg3[%c200, %c0_82] : memref<296x16xf32, #tpu.memory_space<vmem>>, vector<16x1xf32>
    %372 = vector.broadcast %371 : vector<16x1xf32> to vector<16x512xf32>
    %373 = arith.addf %370, %372 : vector<16x512xf32>
    %c80 = arith.constant 80 : index
    %c0_83 = arith.constant 0 : index
    %374 = vector.load %arg2[%c80, %c0_83] : memref<128x32xbf16, #tpu.memory_space<vmem>>, vector<16x16xbf16>
    %375 = arith.truncf %373 : vector<16x512xf32> to vector<16x512xbf16>
    %cst_84 = arith.constant dense<0.000000e+00> : vector<16x512xf32>
    %376 = tpu.matmul %374, %375, %cst_84 {dimension_numbers = #tpu.dot_dimension_numbers<[1], [0], [0], [1], [0, 0, 1, 1], [], []>} : vector<16x16xbf16>, vector<16x512xbf16>, vector<16x512xf32> -> vector<16x512xf32>
    %c216 = arith.constant 216 : index
    %c0_85 = arith.constant 0 : index
    %377 = vector.load %arg3[%c216, %c0_85] : memref<296x16xf32, #tpu.memory_space<vmem>>, vector<16x1xf32>
    %378 = vector.broadcast %377 : vector<16x1xf32> to vector<16x512xf32>
    %379 = arith.addf %376, %378 : vector<16x512xf32>
    %380 = arith.negf %379 : vector<16x512xf32>
    %381 = math.exp %380 : vector<16x512xf32>
    %cst_86 = arith.constant 1.000000e+00 : f32
    %382 = vector.broadcast %cst_86 : f32 to vector<16x512xf32>
    %383 = arith.addf %382, %381 : vector<16x512xf32>
    %384 = arith.divf %382, %383 : vector<16x512xf32>
    %385 = arith.mulf %379, %384 : vector<16x512xf32>
    %386 = arith.mulf %385, %206 : vector<16x512xf32>
    %c96 = arith.constant 96 : index
    %c0_87 = arith.constant 0 : index
    %387 = vector.load %arg2[%c96, %c0_87] : memref<128x32xbf16, #tpu.memory_space<vmem>>, vector<32x16xbf16>
    %388 = arith.truncf %386 : vector<16x512xf32> to vector<16x512xbf16>
    %cst_88 = arith.constant dense<0.000000e+00> : vector<32x512xf32>
    %389 = tpu.matmul %387, %388, %cst_88 {dimension_numbers = #tpu.dot_dimension_numbers<[1], [0], [0], [1], [0, 0, 1, 1], [], []>} : vector<32x16xbf16>, vector<16x512xbf16>, vector<32x512xf32> -> vector<32x512xf32>
    %c96_89 = arith.constant 96 : index
    %c16_90 = arith.constant 16 : index
    %390 = vector.load %arg2[%c96_89, %c16_90] : memref<128x32xbf16, #tpu.memory_space<vmem>>, vector<32x16xbf16>
    %391 = arith.truncf %373 : vector<16x512xf32> to vector<16x512xbf16>
    %cst_91 = arith.constant dense<0.000000e+00> : vector<32x512xf32>
    %392 = tpu.matmul %390, %391, %cst_91 {dimension_numbers = #tpu.dot_dimension_numbers<[1], [0], [0], [1], [0, 0, 1, 1], [], []>} : vector<32x16xbf16>, vector<16x512xbf16>, vector<32x512xf32> -> vector<32x512xf32>
    %393 = arith.addf %389, %392 : vector<32x512xf32>
    %c232 = arith.constant 232 : index
    %c0_92 = arith.constant 0 : index
    %394 = vector.load %arg3[%c232, %c0_92] : memref<296x16xf32, #tpu.memory_space<vmem>>, vector<32x1xf32>
    %395 = vector.broadcast %394 : vector<32x1xf32> to vector<32x512xf32>
    %396 = arith.addf %393, %395 : vector<32x512xf32>
    %397 = arith.negf %396 : vector<32x512xf32>
    %398 = math.exp %397 : vector<32x512xf32>
    %cst_93 = arith.constant 1.000000e+00 : f32
    %399 = vector.broadcast %cst_93 : f32 to vector<32x512xf32>
    %400 = arith.addf %399, %398 : vector<32x512xf32>
    %401 = arith.divf %399, %400 : vector<32x512xf32>
    %402 = arith.mulf %396, %401 : vector<32x512xf32>
    %403 = arith.mulf %402, %0 : vector<32x512xf32>
    %c0_94 = arith.constant 0 : index
    %c0_95 = arith.constant 0 : index
    %404 = vector.load %arg5[%c0_94, %c0_95] : memref<32x512xf32, #tpu.memory_space<vmem>>, vector<32x512xf32>
    tpu.vector_store %arg5[%c0_94, %c0_95], %403 {strides = array<i32>} : memref<32x512xf32, #tpu.memory_space<vmem>>, vector<32x512xf32>,
    return
  }
  func.func @transform_0(%arg0: i32) -> (i32, i32) {
    %c0_i32 = arith.constant 0 : i32
    %c0_i32_0 = arith.constant 0 : i32
    return %c0_i32, %arg0 : i32, i32
  }
  func.func @transform_1(%arg0: i32) -> (i32, i32) {
    %c0_i32 = arith.constant 0 : i32
    %c0_i32_0 = arith.constant 0 : i32
    %c0_i32_1 = arith.constant 0 : i32
    return %c0_i32, %c0_i32_0 : i32, i32
  }
  func.func @transform_2(%arg0: i32) -> (i32, i32) {
    %c0_i32 = arith.constant 0 : i32
    %c0_i32_0 = arith.constant 0 : i32
    %c0_i32_1 = arith.constant 0 : i32
    return %c0_i32, %c0_i32_0 : i32, i32
  }
  func.func @transform_3(%arg0: i32) -> (i32, i32) {
    %c0_i32 = arith.constant 0 : i32
    %c0_i32_0 = arith.constant 0 : i32
    %c0_i32_1 = arith.constant 0 : i32
    return %c0_i32, %c0_i32_0 : i32, i32
  }
  func.func @transform_4(%arg0: i32) -> (i32, i32) {
    %c0_i32 = arith.constant 0 : i32
    %c0_i32_0 = arith.constant 0 : i32
    return %c0_i32, %arg0 : i32, i32
  }
}

</mosaic_0001>

<llo_original>
// kernel: _lambda_.1
$region0: #{_lambda_.1}
  #allocation0 [shape = 'u32[]', space=smem, size = 0x4, offset = 0x4, fixed_abs, tag = 'smem constant byte address 0x4 - core index']
  #allocation1 [shape = 'u32[144,128]{1,0:T(1,128)}', space=vmem, size = 0x12000, scoped, tag = 'internal scratch']
  %s0 = inlined_call_operand.vmem [shape: f32[32,512], index: 0, kind: input, shape index: {}]
  %s1 = inlined_call_operand.vmem [shape: bf16[128,32], index: 1, kind: input, shape index: {}]
  %s2 = inlined_call_operand.vmem [shape: f32[296,16], index: 2, kind: input, shape index: {}]
  %s3 = inlined_call_operand.vmem [shape: f32[25,512], index: 3, kind: input, shape index: {}]
  %s4 = inlined_call_operand.vmem [shape: f32[32,512], index: 4, kind: output, shape index: {}]
  %s5 = sld [smem:[#allocation0]]
  $region26: #{_lambda_.1} parent=0
    _
  %s7 = ssub.s32 1, %s5
  %s8 = scalar_select 0, %s7, %s5
  // Predicated region
  $region2: #{_lambda_.1} parent=0 // pred_check
    _
  $region3: #{_lambda_.1} parent=0 // pred_check_branch
    %10 = sbr.rel (0) target = $region5
  $region4: #{_lambda_.1} parent=0 // pred_region
    _
  $region5: #{_lambda_.1} parent=0 // pred_fallthru
    _
  // Predicated region
  $region6: #{_lambda_.1} parent=0 // pred_check
    _
  $region7: #{_lambda_.1} parent=0 // pred_check_branch
    %12 = sbr.rel (0) target = $region9
  $region8: #{_lambda_.1} parent=0 // pred_region
    _
  $region9: #{_lambda_.1} parent=0 // pred_fallthru
    _
  // Predicated region
  $region10: #{_lambda_.1} parent=0 // pred_check
    _
  $region11: #{_lambda_.1} parent=0 // pred_check_branch
    %14 = sbr.rel (0) target = $region13
  $region12: #{_lambda_.1} parent=0 // pred_region
    _
  $region13: #{_lambda_.1} parent=0 // pred_fallthru
    _
  // Predicated region
  $region14: #{_lambda_.1} parent=0 // pred_check
    _
  $region15: #{_lambda_.1} parent=0 // pred_check_branch
    %16 = sbr.rel (0) target = $region17
  $region16: #{_lambda_.1} parent=0 // pred_region
    _
  $region17: #{_lambda_.1} parent=0 // pred_fallthru
    _
  %v18 = vld [vmem:[%s0] sm:$0xff]
  %v19 = vld [vmem:[%s0 + $0x8] sm:$0xff]
  %v20 = vld [vmem:[%s0 + $0x10] sm:$0xff]
  %v21 = vld [vmem:[%s0 + $0x18] sm:$0xff]
  %v22 = vld [vmem:[%s0 + $0x20] sm:$0xff]
  %v23 = vld [vmem:[%s0 + $0x28] sm:$0xff]
  %v24 = vld [vmem:[%s0 + $0x30] sm:$0xff]
  %v25 = vld [vmem:[%s0 + $0x38] sm:$0xff]
  %v26 = vld [vmem:[%s0 + $0x40] sm:$0xff]
  %v27 = vld [vmem:[%s0 + $0x48] sm:$0xff]
  %v28 = vld [vmem:[%s0 + $0x50] sm:$0xff]
  %v29 = vld [vmem:[%s0 + $0x58] sm:$0xff]
  %v30 = vld [vmem:[%s0 + $0x60] sm:$0xff]
  %v31 = vld [vmem:[%s0 + $0x68] sm:$0xff]
  %v32 = vld [vmem:[%s0 + $0x70] sm:$0xff]
  %v33 = vld [vmem:[%s0 + $0x78] sm:$0xff]
  %v34 = vld [vmem:[%s2] sm:$0xff]
  %v35 = vld [vmem:[%s2 + $0x8] sm:$0xff]
  %36 = vrot.lane.b32.xlu0 %v18, 17
  %v37 = vpop.permute.xlu0 %36
  %38 = vrot.lane.b32.xlu0 %v22, 17
  %v39 = vpop.permute.xlu0 %38
  %40 = vrot.lane.b32.xlu0 %v19, 17
  %v41 = vpop.permute.xlu0 %40
  %42 = vrot.lane.b32.xlu0 %v23, 17
  %v43 = vpop.permute.xlu0 %42
  %44 = vrot.lane.b32.xlu0 %v20, 17
  %v45 = vpop.permute.xlu0 %44
  %46 = vrot.lane.b32.xlu0 %v24, 17
  %v47 = vpop.permute.xlu0 %46
  %48 = vrot.lane.b32.xlu0 %v21, 17
  %v49 = vpop.permute.xlu0 %48
  %50 = vrot.lane.b32.xlu0 %v25, 17
  %v51 = vpop.permute.xlu0 %50
  %v52 = vlaneseq
  %v53 = vand.u32 %v52, 127
  %vm54 = vcmp.lt.s32.totalorder %v53, 17
  %v55 = vsel %vm54, %v45, %v49
  %v56 = vsel %vm54, %v47, %v51
  %v57 = vsel %vm54, %v41, %v45
  %v58 = vsel %vm54, %v43, %v47
  %v59 = vsel %vm54, %v37, %v41
  %v60 = vsel %vm54, %v39, %v43
  %v61 = vsel %vm54, %v49, %v37
  %v62 = vsel %vm54, %v51, %v39
  %v63 = vld [vmem:[%s3] ss:$8 sm:$0xf]
  %v65 = vlaneseq
  %v66 = vshrl.u32 %v65, 7
  %v67 = vsub.s32 0, %v66
  %v68 = vrot.slane %v63, %v67
  %v69 = vlaneseq
  %v70 = vshrl.u32 %v69, 7
  %v71 = vsub.s32 1, %v70
  %v72 = vrot.slane %v63, %v71
  %v73 = vlaneseq
  %v74 = vshrl.u32 %v73, 7
  %v75 = vsub.s32 2, %v74
  %v76 = vrot.slane %v63, %v75
  %v77 = vlaneseq
  %v78 = vshrl.u32 %v77, 7
  %v79 = vsub.s32 3, %v78
  %v80 = vrot.slane %v63, %v79
  %v85 = vmul.f32 %v61, %v68
  %v86 = vmul.f32 %v59, %v72
  %v87 = vmul.f32 %v57, %v76
  %v88 = vmul.f32 %v55, %v80
  %v89 = vmul.f32 %v62, %v68
  %v90 = vmul.f32 %v60, %v72
  %v91 = vmul.f32 %v58, %v76
  %v92 = vmul.f32 %v56, %v80
  %94 = vset.pattern.permute.xlu0 0
  %95 = vperm.xlu0 %94, %v34
  %v96 = vpop.permute.xlu0 %95
  %99 = vset.pattern.permute.xlu0 0
  %100 = vperm.xlu0 %99, %v35
  %v101 = vpop.permute.xlu0 %100
  %v103 = vmul.f32 %v85, %v96
  %v104 = vmul.f32 %v86, %v96
  %v105 = vmul.f32 %v87, %v96
  %v106 = vmul.f32 %v88, %v96
  %v107 = vmul.f32 %v89, %v101
  %v108 = vmul.f32 %v90, %v101
  %v109 = vmul.f32 %v91, %v101
  %v110 = vmul.f32 %v92, %v101
  %111 = vrot.lane.b32.xlu0 %v18, 16
  %v112 = vpop.permute.xlu0 %111
  %113 = vrot.lane.b32.xlu0 %v22, 16
  %v114 = vpop.permute.xlu0 %113
  %115 = vrot.lane.b32.xlu0 %v19, 16
  %v116 = vpop.permute.xlu0 %115
  %117 = vrot.lane.b32.xlu0 %v23, 16
  %v118 = vpop.permute.xlu0 %117
  %119 = vrot.lane.b32.xlu0 %v20, 16
  %v120 = vpop.permute.xlu0 %119
  %121 = vrot.lane.b32.xlu0 %v24, 16
  %v122 = vpop.permute.xlu0 %121
  %123 = vrot.lane.b32.xlu0 %v21, 16
  %v124 = vpop.permute.xlu0 %123
  %125 = vrot.lane.b32.xlu0 %v25, 16
  %v126 = vpop.permute.xlu0 %125
  %vm127 = vcmp.lt.s32.totalorder %v53, 16
  %v128 = vsel %vm127, %v120, %v124
  %v129 = vsel %vm127, %v122, %v126
  %v130 = vsel %vm127, %v116, %v120
  %v131 = vsel %vm127, %v118, %v122
  %v132 = vsel %vm127, %v112, %v116
  %v133 = vsel %vm127, %v114, %v118
  %v134 = vsel %vm127, %v124, %v112
  %v135 = vsel %vm127, %v126, %v114
  %s136 = scalar_lea.vmem %s3, 1
  %v137 = vld [vmem:[%s136] ss:$8 sm:$0xf]
  %v139 = vlaneseq
  %v140 = vshrl.u32 %v139, 7
  %v141 = vsub.s32 0, %v140
  %v142 = vrot.slane %v137, %v141
  %v143 = vlaneseq
  %v144 = vshrl.u32 %v143, 7
  %v145 = vsub.s32 1, %v144
  %v146 = vrot.slane %v137, %v145
  %v147 = vlaneseq
  %v148 = vshrl.u32 %v147, 7
  %v149 = vsub.s32 2, %v148
  %v150 = vrot.slane %v137, %v149
  %v151 = vlaneseq
  %v152 = vshrl.u32 %v151, 7
  %v153 = vsub.s32 3, %v152
  %v154 = vrot.slane %v137, %v153
  %v159 = vmul.f32 %v134, %v142
  %v160 = vmul.f32 %v132, %v146
  %v161 = vmul.f32 %v130, %v150
  %v162 = vmul.f32 %v128, %v154
  %v163 = vmul.f32 %v135, %v142
  %v164 = vmul.f32 %v133, %v146
  %v165 = vmul.f32 %v131, %v150
  %v166 = vmul.f32 %v129, %v154
  %167 = vset.pattern.permute.xlu0 1
  %168 = vperm.xlu0 %167, %v34
  %v169 = vpop.permute.xlu0 %168
  %171 = vset.pattern.permute.xlu0 1
  %172 = vperm.xlu0 %171, %v35
  %v173 = vpop.permute.xlu0 %172
  %v175 = vmul.f32 %v159, %v169
  %v176 = vmul.f32 %v160, %v169
  %v177 = vmul.f32 %v161, %v169
  %v178 = vmul.f32 %v162, %v169
  %v179 = vmul.f32 %v163, %v173
  %v180 = vmul.f32 %v164, %v173
  %v181 = vmul.f32 %v165, %v173
  %v182 = vmul.f32 %v166, %v173
  %v183 = vadd.f32 %v103, %v175
  %v184 = vadd.f32 %v104, %v176
  %v185 = vadd.f32 %v105, %v177
  %v186 = vadd.f32 %v106, %v178
  %v187 = vadd.f32 %v107, %v179
  %v188 = vadd.f32 %v108, %v180
  %v189 = vadd.f32 %v109, %v181
  %v190 = vadd.f32 %v110, %v182
  %191 = vrot.lane.b32.xlu0 %v18, 15
  %v192 = vpop.permute.xlu0 %191
  %193 = vrot.lane.b32.xlu0 %v22, 15
  %v194 = vpop.permute.xlu0 %193
  %195 = vrot.lane.b32.xlu0 %v19, 15
  %v196 = vpop.permute.xlu0 %195
  %197 = vrot.lane.b32.xlu0 %v23, 15
  %v198 = vpop.permute.xlu0 %197
  %199 = vrot.lane.b32.xlu0 %v20, 15
  %v200 = vpop.permute.xlu0 %199
  %201 = vrot.lane.b32.xlu0 %v24, 15
  %v202 = vpop.permute.xlu0 %201
  %203 = vrot.lane.b32.xlu0 %v21, 15
  %v204 = vpop.permute.xlu0 %203
  %205 = vrot.lane.b32.xlu0 %v25, 15
  %v206 = vpop.permute.xlu0 %205
  %vm207 = vcmp.lt.s32.totalorder %v53, 15
  %v208 = vsel %vm207, %v200, %v204
  %v209 = vsel %vm207, %v202, %v206
  %v210 = vsel %vm207, %v196, %v200
  %v211 = vsel %vm207, %v198, %v202
  %v212 = vsel %vm207, %v192, %v196
  %v213 = vsel %vm207, %v194, %v198
  %v214 = vsel %vm207, %v204, %v192
  %v215 = vsel %vm207, %v206, %v194
  %s216 = scalar_lea.vmem %s3, 2
  %v217 = vld [vmem:[%s216] ss:$8 sm:$0xf]
  %v219 = vlaneseq
  %v220 = vshrl.u32 %v219, 7
  %v221 = vsub.s32 0, %v220
  %v222 = vrot.slane %v217, %v221
  %v223 = vlaneseq
  %v224 = vshrl.u32 %v223, 7
  %v225 = vsub.s32 1, %v224
  %v226 = vrot.slane %v217, %v225
  %v227 = vlaneseq
  %v228 = vshrl.u32 %v227, 7
  %v229 = vsub.s32 2, %v228
  %v230 = vrot.slane %v217, %v229
  %v231 = vlaneseq
  %v232 = vshrl.u32 %v231, 7
  %v233 = vsub.s32 3, %v232
  %v234 = vrot.slane %v217, %v233
  %v239 = vmul.f32 %v214, %v222
  %v240 = vmul.f32 %v212, %v226
  %v241 = vmul.f32 %v210, %v230
  %v242 = vmul.f32 %v208, %v234
  %v243 = vmul.f32 %v215, %v222
  %v244 = vmul.f32 %v213, %v226
  %v245 = vmul.f32 %v211, %v230
  %v246 = vmul.f32 %v209, %v234
  %247 = vset.pattern.permute.xlu0 2
  %248 = vperm.xlu0 %247, %v34
  %v249 = vpop.permute.xlu0 %248
  %251 = vset.pattern.permute.xlu0 2
  %252 = vperm.xlu0 %251, %v35
  %v253 = vpop.permute.xlu0 %252
  %v255 = vmul.f32 %v239, %v249
  %v256 = vmul.f32 %v240, %v249
  %v257 = vmul.f32 %v241, %v249
  %v258 = vmul.f32 %v242, %v249
  %v259 = vmul.f32 %v243, %v253
  %v260 = vmul.f32 %v244, %v253
  %v261 = vmul.f32 %v245, %v253
  %v262 = vmul.f32 %v246, %v253
  %v263 = vadd.f32 %v183, %v255
  %v264 = vadd.f32 %v184, %v256
  %v265 = vadd.f32 %v185, %v257
  %v266 = vadd.f32 %v186, %v258
  %v267 = vadd.f32 %v187, %v259
  %v268 = vadd.f32 %v188, %v260
  %v269 = vadd.f32 %v189, %v261
  %v270 = vadd.f32 %v190, %v262
  %271 = vrot.lane.b32.xlu0 %v18, 1
  %v272 = vpop.permute.xlu0 %271
  %273 = vrot.lane.b32.xlu0 %v22, 1
  %v274 = vpop.permute.xlu0 %273
  %275 = vrot.lane.b32.xlu0 %v19, 1
  %v276 = vpop.permute.xlu0 %275
  %277 = vrot.lane.b32.xlu0 %v23, 1
  %v278 = vpop.permute.xlu0 %277
  %279 = vrot.lane.b32.xlu0 %v20, 1
  %v280 = vpop.permute.xlu0 %279
  %281 = vrot.lane.b32.xlu0 %v24, 1
  %v282 = vpop.permute.xlu0 %281
  %283 = vrot.lane.b32.xlu0 %v21, 1
  %v284 = vpop.permute.xlu0 %283
  %285 = vrot.lane.b32.xlu0 %v25, 1
  %v286 = vpop.permute.xlu0 %285
  %vm287 = vcmp.lt.s32.totalorder %v53, 1
  %v288 = vsel %vm287, %v280, %v284
  %v289 = vsel %vm287, %v282, %v286
  %v290 = vsel %vm287, %v276, %v280
  %v291 = vsel %vm287, %v278, %v282
  %v292 = vsel %vm287, %v272, %v276
  %v293 = vsel %vm287, %v274, %v278
  %v294 = vsel %vm287, %v284, %v272
  %v295 = vsel %vm287, %v286, %v274
  %s296 = scalar_lea.vmem %s3, 3
  %v297 = vld [vmem:[%s296] ss:$8 sm:$0xf]
  %v299 = vlaneseq
  %v300 = vshrl.u32 %v299, 7
  %v301 = vsub.s32 0, %v300
  %v302 = vrot.slane %v297, %v301
  %v303 = vlaneseq
  %v304 = vshrl.u32 %v303, 7
  %v305 = vsub.s32 1, %v304
  %v306 = vrot.slane %v297, %v305
  %v307 = vlaneseq
  %v308 = vshrl.u32 %v307, 7
  %v309 = vsub.s32 2, %v308
  %v310 = vrot.slane %v297, %v309
  %v311 = vlaneseq
  %v312 = vshrl.u32 %v311, 7
  %v313 = vsub.s32 3, %v312
  %v314 = vrot.slane %v297, %v313
  %v319 = vmul.f32 %v294, %v302
  %v320 = vmul.f32 %v292, %v306
  %v321 = vmul.f32 %v290, %v310
  %v322 = vmul.f32 %v288, %v314
  %v323 = vmul.f32 %v295, %v302
  %v324 = vmul.f32 %v293, %v306
  %v325 = vmul.f32 %v291, %v310
  %v326 = vmul.f32 %v289, %v314
  %327 = vset.pattern.permute.xlu0 3
  %328 = vperm.xlu0 %327, %v34
  %v329 = vpop.permute.xlu0 %328
  %331 = vset.pattern.permute.xlu0 3
  %332 = vperm.xlu0 %331, %v35
  %v333 = vpop.permute.xlu0 %332
  %v335 = vmul.f32 %v319, %v329
  %v336 = vmul.f32 %v320, %v329
  %v337 = vmul.f32 %v321, %v329
  %v338 = vmul.f32 %v322, %v329
  %v339 = vmul.f32 %v323, %v333
  %v340 = vmul.f32 %v324, %v333
  %v341 = vmul.f32 %v325, %v333
  %v342 = vmul.f32 %v326, %v333
  %v343 = vadd.f32 %v263, %v335
  %v344 = vadd.f32 %v264, %v336
  %v345 = vadd.f32 %v265, %v337
  %v346 = vadd.f32 %v266, %v338
  %v347 = vadd.f32 %v267, %v339
  %v348 = vadd.f32 %v268, %v340
  %v349 = vadd.f32 %v269, %v341
  %v350 = vadd.f32 %v270, %v342
  %351 = vset.pattern.permute.xlu0 4
  %352 = vperm.xlu0 %351, %v34
  %v353 = vpop.permute.xlu0 %352
  %355 = vset.pattern.permute.xlu0 4
  %356 = vperm.xlu0 %355, %v35
  %v357 = vpop.permute.xlu0 %356
  %v359 = vmul.f32 %v18, %v353
  %v360 = vmul.f32 %v19, %v353
  %v361 = vmul.f32 %v20, %v353
  %v362 = vmul.f32 %v21, %v353
  %v363 = vmul.f32 %v22, %v357
  %v364 = vmul.f32 %v23, %v357
  %v365 = vmul.f32 %v24, %v357
  %v366 = vmul.f32 %v25, %v357
  %v367 = vadd.f32 %v343, %v359
  %v368 = vadd.f32 %v344, %v360
  %v369 = vadd.f32 %v345, %v361
  %v370 = vadd.f32 %v346, %v362
  %v371 = vadd.f32 %v347, %v363
  %v372 = vadd.f32 %v348, %v364
  %v373 = vadd.f32 %v349, %v365
  %v374 = vadd.f32 %v350, %v366
  %375 = vrot.lane.b32.xlu0 %v18, 127
  %v376 = vpop.permute.xlu0 %375
  %377 = vrot.lane.b32.xlu0 %v22, 127
  %v378 = vpop.permute.xlu0 %377
  %379 = vrot.lane.b32.xlu0 %v19, 127
  %v380 = vpop.permute.xlu0 %379
  %381 = vrot.lane.b32.xlu0 %v23, 127
  %v382 = vpop.permute.xlu0 %381
  %383 = vrot.lane.b32.xlu0 %v20, 127
  %v384 = vpop.permute.xlu0 %383
  %385 = vrot.lane.b32.xlu0 %v24, 127
  %v386 = vpop.permute.xlu0 %385
  %387 = vrot.lane.b32.xlu0 %v21, 127
  %v388 = vpop.permute.xlu0 %387
  %389 = vrot.lane.b32.xlu0 %v25, 127
  %v390 = vpop.permute.xlu0 %389
  %vm391 = vcmp.lt.s32.totalorder %v53, 127
  %v392 = vsel %vm391, %v384, %v388
  %v393 = vsel %vm391, %v386, %v390
  %v394 = vsel %vm391, %v380, %v384
  %v395 = vsel %vm391, %v382, %v386
  %v396 = vsel %vm391, %v376, %v380
  %v397 = vsel %vm391, %v378, %v382
  %v398 = vsel %vm391, %v388, %v376
  %v399 = vsel %vm391, %v390, %v378
  %s400 = scalar_lea.vmem %s3, 5
  %v401 = vld [vmem:[%s400] ss:$8 sm:$0xf]
  %v403 = vlaneseq
  %v404 = vshrl.u32 %v403, 7
  %v405 = vsub.s32 0, %v404
  %v406 = vrot.slane %v401, %v405
  %v407 = vlaneseq
  %v408 = vshrl.u32 %v407, 7
  %v409 = vsub.s32 1, %v408
  %v410 = vrot.slane %v401, %v409
  %v411 = vlaneseq
  %v412 = vshrl.u32 %v411, 7
  %v413 = vsub.s32 2, %v412
  %v414 = vrot.slane %v401, %v413
  %v415 = vlaneseq
  %v416 = vshrl.u32 %v415, 7
  %v417 = vsub.s32 3, %v416
  %v418 = vrot.slane %v401, %v417
  %v423 = vmul.f32 %v396, %v406
  %v424 = vmul.f32 %v394, %v410
  %v425 = vmul.f32 %v392, %v414
  %v426 = vmul.f32 %v398, %v418
  %v427 = vmul.f32 %v397, %v406
  %v428 = vmul.f32 %v395, %v410
  %v429 = vmul.f32 %v393, %v414
  %v430 = vmul.f32 %v399, %v418
  %431 = vset.pattern.permute.xlu0 5
  %432 = vperm.xlu0 %431, %v34
  %v433 = vpop.permute.xlu0 %432
  %435 = vset.pattern.permute.xlu0 5
  %436 = vperm.xlu0 %435, %v35
  %v437 = vpop.permute.xlu0 %436
  %v439 = vmul.f32 %v423, %v433
  %v440 = vmul.f32 %v424, %v433
  %v441 = vmul.f32 %v425, %v433
  %v442 = vmul.f32 %v426, %v433
  %v443 = vmul.f32 %v427, %v437
  %v444 = vmul.f32 %v428, %v437
  %v445 = vmul.f32 %v429, %v437
  %v446 = vmul.f32 %v430, %v437
  %v447 = vadd.f32 %v367, %v439
  %v448 = vadd.f32 %v368, %v440
  %v449 = vadd.f32 %v369, %v441
  %v450 = vadd.f32 %v370, %v442
  %v451 = vadd.f32 %v371, %v443
  %v452 = vadd.f32 %v372, %v444
  %v453 = vadd.f32 %v373, %v445
  %v454 = vadd.f32 %v374, %v446
  %455 = vrot.lane.b32.xlu0 %v18, 113
  %v456 = vpop.permute.xlu0 %455
  %457 = vrot.lane.b32.xlu0 %v22, 113
  %v458 = vpop.permute.xlu0 %457
  %459 = vrot.lane.b32.xlu0 %v19, 113
  %v460 = vpop.permute.xlu0 %459
  %461 = vrot.lane.b32.xlu0 %v23, 113
  %v462 = vpop.permute.xlu0 %461
  %463 = vrot.lane.b32.xlu0 %v20, 113
  %v464 = vpop.permute.xlu0 %463
  %465 = vrot.lane.b32.xlu0 %v24, 113
  %v466 = vpop.permute.xlu0 %465
  %467 = vrot.lane.b32.xlu0 %v21, 113
  %v468 = vpop.permute.xlu0 %467
  %469 = vrot.lane.b32.xlu0 %v25, 113
  %v470 = vpop.permute.xlu0 %469
  %vm471 = vcmp.lt.s32.totalorder %v53, 113
  %v472 = vsel %vm471, %v464, %v468
  %v473 = vsel %vm471, %v466, %v470
  %v474 = vsel %vm471, %v460, %v464
  %v475 = vsel %vm471, %v462, %v466
  %v476 = vsel %vm471, %v456, %v460
  %v477 = vsel %vm471, %v458, %v462
  %v478 = vsel %vm471, %v468, %v456
  %v479 = vsel %vm471, %v470, %v458
  %s480 = scalar_lea.vmem %s3, 6
  %v481 = vld [vmem:[%s480] ss:$8 sm:$0xf]
  %v483 = vlaneseq
  %v484 = vshrl.u32 %v483, 7
  %v485 = vsub.s32 0, %v484
  %v486 = vrot.slane %v481, %v485
  %v487 = vlaneseq
  %v488 = vshrl.u32 %v487, 7
  %v489 = vsub.s32 1, %v488
  %v490 = vrot.slane %v481, %v489
  %v491 = vlaneseq
  %v492 = vshrl.u32 %v491, 7
  %v493 = vsub.s32 2, %v492
  %v494 = vrot.slane %v481, %v493
  %v495 = vlaneseq
  %v496 = vshrl.u32 %v495, 7
  %v497 = vsub.s32 3, %v496
  %v498 = vrot.slane %v481, %v497
  %v503 = vmul.f32 %v476, %v486
  %v504 = vmul.f32 %v474, %v490
  %v505 = vmul.f32 %v472, %v494
  %v506 = vmul.f32 %v478, %v498
  %v507 = vmul.f32 %v477, %v486
  %v508 = vmul.f32 %v475, %v490
  %v509 = vmul.f32 %v473, %v494
  %v510 = vmul.f32 %v479, %v498
  %511 = vset.pattern.permute.xlu0 6
  %512 = vperm.xlu0 %511, %v34
  %v513 = vpop.permute.xlu0 %512
  %515 = vset.pattern.permute.xlu0 6
  %516 = vperm.xlu0 %515, %v35
  %v517 = vpop.permute.xlu0 %516
  %v519 = vmul.f32 %v503, %v513
  %v520 = vmul.f32 %v504, %v513
  %v521 = vmul.f32 %v505, %v513
  %v522 = vmul.f32 %v506, %v513
  %v523 = vmul.f32 %v507, %v517
  %v524 = vmul.f32 %v508, %v517
  %v525 = vmul.f32 %v509, %v517
  %v526 = vmul.f32 %v510, %v517
  %v527 = vadd.f32 %v447, %v519
  %v528 = vadd.f32 %v448, %v520
  %v529 = vadd.f32 %v449, %v521
  %v530 = vadd.f32 %v450, %v522
  %v531 = vadd.f32 %v451, %v523
  %v532 = vadd.f32 %v452, %v524
  %v533 = vadd.f32 %v453, %v525
  %v534 = vadd.f32 %v454, %v526
  %535 = vrot.lane.b32.xlu0 %v18, 112
  %v536 = vpop.permute.xlu0 %535
  %537 = vrot.lane.b32.xlu0 %v22, 112
  %v538 = vpop.permute.xlu0 %537
  %539 = vrot.lane.b32.xlu0 %v19, 112
  %v540 = vpop.permute.xlu0 %539
  %541 = vrot.lane.b32.xlu0 %v23, 112
  %v542 = vpop.permute.xlu0 %541
  %543 = vrot.lane.b32.xlu0 %v20, 112
  %v544 = vpop.permute.xlu0 %543
  %545 = vrot.lane.b32.xlu0 %v24, 112
  %v546 = vpop.permute.xlu0 %545
  %547 = vrot.lane.b32.xlu0 %v21, 112
  %v548 = vpop.permute.xlu0 %547
  %549 = vrot.lane.b32.xlu0 %v25, 112
  %v550 = vpop.permute.xlu0 %549
  %vm551 = vcmp.lt.s32.totalorder %v53, 112
  %v552 = vsel %vm551, %v544, %v548
  %v553 = vsel %vm551, %v546, %v550
  %v554 = vsel %vm551, %v540, %v544
  %v555 = vsel %vm551, %v542, %v546
  %v556 = vsel %vm551, %v536, %v540
  %v557 = vsel %vm551, %v538, %v542
  %v558 = vsel %vm551, %v548, %v536
  %v559 = vsel %vm551, %v550, %v538
  %s560 = scalar_lea.vmem %s3, 7
  %v561 = vld [vmem:[%s560] ss:$8 sm:$0xf]
  %v563 = vlaneseq
  %v564 = vshrl.u32 %v563, 7
  %v565 = vsub.s32 0, %v564
  %v566 = vrot.slane %v561, %v565
  %v567 = vlaneseq
  %v568 = vshrl.u32 %v567, 7
  %v569 = vsub.s32 1, %v568
  %v570 = vrot.slane %v561, %v569
  %v571 = vlaneseq
  %v572 = vshrl.u32 %v571, 7
  %v573 = vsub.s32 2, %v572
  %v574 = vrot.slane %v561, %v573
  %v575 = vlaneseq
  %v576 = vshrl.u32 %v575, 7
  %v577 = vsub.s32 3, %v576
  %v578 = vrot.slane %v561, %v577
  %v583 = vmul.f32 %v556, %v566
  %v584 = vmul.f32 %v554, %v570
  %v585 = vmul.f32 %v552, %v574
  %v586 = vmul.f32 %v558, %v578
  %v587 = vmul.f32 %v557, %v566
  %v588 = vmul.f32 %v555, %v570
  %v589 = vmul.f32 %v553, %v574
  %v590 = vmul.f32 %v559, %v578
  %591 = vset.pattern.permute.xlu0 7
  %592 = vperm.xlu0 %591, %v34
  %v593 = vpop.permute.xlu0 %592
  %595 = vset.pattern.permute.xlu0 7
  %596 = vperm.xlu0 %595, %v35
  %v597 = vpop.permute.xlu0 %596
  %v599 = vmul.f32 %v583, %v593
  %v600 = vmul.f32 %v584, %v593
  %v601 = vmul.f32 %v585, %v593
  %v602 = vmul.f32 %v586, %v593
  %v603 = vmul.f32 %v587, %v597
  %v604 = vmul.f32 %v588, %v597
  %v605 = vmul.f32 %v589, %v597
  %v606 = vmul.f32 %v590, %v597
  %v607 = vadd.f32 %v527, %v599
  %v608 = vadd.f32 %v528, %v600
  %v609 = vadd.f32 %v529, %v601
  %v610 = vadd.f32 %v530, %v602
  %v611 = vadd.f32 %v531, %v603
  %v612 = vadd.f32 %v532, %v604
  %v613 = vadd.f32 %v533, %v605
  %v614 = vadd.f32 %v534, %v606
  %615 = vrot.lane.b32.xlu0 %v18, 111
  %v616 = vpop.permute.xlu0 %615
  %617 = vrot.lane.b32.xlu0 %v22, 111
  %v618 = vpop.permute.xlu0 %617
  %619 = vrot.lane.b32.xlu0 %v19, 111
  %v620 = vpop.permute.xlu0 %619
  %621 = vrot.lane.b32.xlu0 %v23, 111
  %v622 = vpop.permute.xlu0 %621
  %623 = vrot.lane.b32.xlu0 %v20, 111
  %v624 = vpop.permute.xlu0 %623
  %625 = vrot.lane.b32.xlu0 %v24, 111
  %v626 = vpop.permute.xlu0 %625
  %627 = vrot.lane.b32.xlu0 %v21, 111
  %v628 = vpop.permute.xlu0 %627
  %629 = vrot.lane.b32.xlu0 %v25, 111
  %v630 = vpop.permute.xlu0 %629
  %vm631 = vcmp.lt.s32.totalorder %v53, 111
  %v632 = vsel %vm631, %v624, %v628
  %v633 = vsel %vm631, %v626, %v630
  %v634 = vsel %vm631, %v620, %v624
  %v635 = vsel %vm631, %v622, %v626
  %v636 = vsel %vm631, %v616, %v620
  %v637 = vsel %vm631, %v618, %v622
  %v638 = vsel %vm631, %v628, %v616
  %v639 = vsel %vm631, %v630, %v618
  %s640 = scalar_lea.vmem %s3, 32
  %v641 = vld [vmem:[%s640] ss:$8 sm:$0xf]
  %v643 = vlaneseq
  %v644 = vshrl.u32 %v643, 7
  %v645 = vsub.s32 0, %v644
  %v646 = vrot.slane %v641, %v645
  %v647 = vlaneseq
  %v648 = vshrl.u32 %v647, 7
  %v649 = vsub.s32 1, %v648
  %v650 = vrot.slane %v641, %v649
  %v651 = vlaneseq
  %v652 = vshrl.u32 %v651, 7
  %v653 = vsub.s32 2, %v652
  %v654 = vrot.slane %v641, %v653
  %v655 = vlaneseq
  %v656 = vshrl.u32 %v655, 7
  %v657 = vsub.s32 3, %v656
  %v658 = vrot.slane %v641, %v657
  %v663 = vmul.f32 %v636, %v646
  %v664 = vmul.f32 %v634, %v650
  %v665 = vmul.f32 %v632, %v654
  %v666 = vmul.f32 %v638, %v658
  %v667 = vmul.f32 %v637, %v646
  %v668 = vmul.f32 %v635, %v650
  %v669 = vmul.f32 %v633, %v654
  %v670 = vmul.f32 %v639, %v658
  %671 = vset.pattern.permute.xlu0 8
  %672 = vperm.xlu0 %671, %v34
  %v673 = vpop.permute.xlu0 %672
  %675 = vset.pattern.permute.xlu0 8
  %676 = vperm.xlu0 %675, %v35
  %v677 = vpop.permute.xlu0 %676
  %v679 = vmul.f32 %v663, %v673
  %v680 = vmul.f32 %v664, %v673
  %v681 = vmul.f32 %v665, %v673
  %v682 = vmul.f32 %v666, %v673
  %v683 = vmul.f32 %v667, %v677
  %v684 = vmul.f32 %v668, %v677
  %v685 = vmul.f32 %v669, %v677
  %v686 = vmul.f32 %v670, %v677
  %v687 = vadd.f32 %v607, %v679
  %v688 = vadd.f32 %v608, %v680
  %v689 = vadd.f32 %v609, %v681
  %v690 = vadd.f32 %v610, %v682
  %v691 = vadd.f32 %v611, %v683
  %v692 = vadd.f32 %v612, %v684
  %v693 = vadd.f32 %v613, %v685
  %v694 = vadd.f32 %v614, %v686
  %v695 = vld [vmem:[%s2 + $0x10] sm:$0xff]
  %696 = vrot.lane.b32.xlu0 %v22, 5
  %v697 = vpop.permute.xlu0 %696
  %698 = vrot.lane.b32.xlu0 %v23, 5
  %v699 = vpop.permute.xlu0 %698
  %700 = vrot.lane.b32.xlu0 %v24, 5
  %v701 = vpop.permute.xlu0 %700
  %702 = vrot.lane.b32.xlu0 %v25, 5
  %v703 = vpop.permute.xlu0 %702
  %vm704 = vcmp.lt.s32.totalorder %v53, 5
  %v705 = vsel %vm704, %v701, %v703
  %v706 = vsel %vm704, %v699, %v701
  %v707 = vsel %vm704, %v697, %v699
  %v708 = vsel %vm704, %v703, %v697
  %s709 = scalar_lea.vmem %s3, 33
  %v710 = vld [vmem:[%s709] ss:$8 sm:$0xf]
  %v712 = vlaneseq
  %v713 = vshrl.u32 %v712, 7
  %v714 = vsub.s32 0, %v713
  %v715 = vrot.slane %v710, %v714
  %v716 = vlaneseq
  %v717 = vshrl.u32 %v716, 7
  %v718 = vsub.s32 1, %v717
  %v719 = vrot.slane %v710, %v718
  %v720 = vlaneseq
  %v721 = vshrl.u32 %v720, 7
  %v722 = vsub.s32 2, %v721
  %v723 = vrot.slane %v710, %v722
  %v724 = vlaneseq
  %v725 = vshrl.u32 %v724, 7
  %v726 = vsub.s32 3, %v725
  %v727 = vrot.slane %v710, %v726
  %v732 = vmul.f32 %v708, %v715
  %v733 = vmul.f32 %v707, %v719
  %v734 = vmul.f32 %v706, %v723
  %v735 = vmul.f32 %v705, %v727
  %737 = vset.pattern.permute.xlu0 0
  %738 = vperm.xlu0 %737, %v695
  %v739 = vpop.permute.xlu0 %738
  %v741 = vmul.f32 %v732, %v739
  %v742 = vmul.f32 %v733, %v739
  %v743 = vmul.f32 %v734, %v739
  %v744 = vmul.f32 %v735, %v739
  %745 = vrot.lane.b32.xlu0 %v22, 4
  %v746 = vpop.permute.xlu0 %745
  %747 = vrot.lane.b32.xlu0 %v23, 4
  %v748 = vpop.permute.xlu0 %747
  %749 = vrot.lane.b32.xlu0 %v24, 4
  %v750 = vpop.permute.xlu0 %749
  %751 = vrot.lane.b32.xlu0 %v25, 4
  %v752 = vpop.permute.xlu0 %751
  %vm753 = vcmp.lt.s32.totalorder %v53, 4
  %v754 = vsel %vm753, %v750, %v752
  %v755 = vsel %vm753, %v748, %v750
  %v756 = vsel %vm753, %v746, %v748
  %v757 = vsel %vm753, %v752, %v746
  %s758 = scalar_lea.vmem %s3, 34
  %v759 = vld [vmem:[%s758] ss:$8 sm:$0xf]
  %v761 = vlaneseq
  %v762 = vshrl.u32 %v761, 7
  %v763 = vsub.s32 0, %v762
  %v764 = vrot.slane %v759, %v763
  %v765 = vlaneseq
  %v766 = vshrl.u32 %v765, 7
  %v767 = vsub.s32 1, %v766
  %v768 = vrot.slane %v759, %v767
  %v769 = vlaneseq
  %v770 = vshrl.u32 %v769, 7
  %v771 = vsub.s32 2, %v770
  %v772 = vrot.slane %v759, %v771
  %v773 = vlaneseq
  %v774 = vshrl.u32 %v773, 7
  %v775 = vsub.s32 3, %v774
  %v776 = vrot.slane %v759, %v775
  %v781 = vmul.f32 %v757, %v764
  %v782 = vmul.f32 %v756, %v768
  %v783 = vmul.f32 %v755, %v772
  %v784 = vmul.f32 %v754, %v776
  %785 = vset.pattern.permute.xlu0 1
  %786 = vperm.xlu0 %785, %v695
  %v787 = vpop.permute.xlu0 %786
  %v789 = vmul.f32 %v781, %v787
  %v790 = vmul.f32 %v782, %v787
  %v791 = vmul.f32 %v783, %v787
  %v792 = vmul.f32 %v784, %v787
  %v793 = vadd.f32 %v741, %v789
  %v794 = vadd.f32 %v742, %v790
  %v795 = vadd.f32 %v743, %v791
  %v796 = vadd.f32 %v744, %v792
  %797 = vrot.lane.b32.xlu0 %v22, 3
  %v798 = vpop.permute.xlu0 %797
  %799 = vrot.lane.b32.xlu0 %v23, 3
  %v800 = vpop.permute.xlu0 %799
  %801 = vrot.lane.b32.xlu0 %v24, 3
  %v802 = vpop.permute.xlu0 %801
  %803 = vrot.lane.b32.xlu0 %v25, 3
  %v804 = vpop.permute.xlu0 %803
  %vm805 = vcmp.lt.s32.totalorder %v53, 3
  %v806 = vsel %vm805, %v802, %v804
  %v807 = vsel %vm805, %v800, %v802
  %v808 = vsel %vm805, %v798, %v800
  %v809 = vsel %vm805, %v804, %v798
  %s810 = scalar_lea.vmem %s3, 35
  %v811 = vld [vmem:[%s810] ss:$8 sm:$0xf]
  %v813 = vlaneseq
  %v814 = vshrl.u32 %v813, 7
  %v815 = vsub.s32 0, %v814
  %v816 = vrot.slane %v811, %v815
  %v817 = vlaneseq
  %v818 = vshrl.u32 %v817, 7
  %v819 = vsub.s32 1, %v818
  %v820 = vrot.slane %v811, %v819
  %v821 = vlaneseq
  %v822 = vshrl.u32 %v821, 7
  %v823 = vsub.s32 2, %v822
  %v824 = vrot.slane %v811, %v823
  %v825 = vlaneseq
  %v826 = vshrl.u32 %v825, 7
  %v827 = vsub.s32 3, %v826
  %v828 = vrot.slane %v811, %v827
  %v833 = vmul.f32 %v809, %v816
  %v834 = vmul.f32 %v808, %v820
  %v835 = vmul.f32 %v807, %v824
  %v836 = vmul.f32 %v806, %v828
  %837 = vset.pattern.permute.xlu0 2
  %838 = vperm.xlu0 %837, %v695
  %v839 = vpop.permute.xlu0 %838
  %v841 = vmul.f32 %v833, %v839
  %v842 = vmul.f32 %v834, %v839
  %v843 = vmul.f32 %v835, %v839
  %v844 = vmul.f32 %v836, %v839
  %v845 = vadd.f32 %v793, %v841
  %v846 = vadd.f32 %v794, %v842
  %v847 = vadd.f32 %v795, %v843
  %v848 = vadd.f32 %v796, %v844
  %849 = vrot.lane.b32.xlu0 %v22, 2
  %v850 = vpop.permute.xlu0 %849
  %851 = vrot.lane.b32.xlu0 %v23, 2
  %v852 = vpop.permute.xlu0 %851
  %853 = vrot.lane.b32.xlu0 %v24, 2
  %v854 = vpop.permute.xlu0 %853
  %855 = vrot.lane.b32.xlu0 %v25, 2
  %v856 = vpop.permute.xlu0 %855
  %vm857 = vcmp.lt.s32.totalorder %v53, 2
  %v858 = vsel %vm857, %v854, %v856
  %v859 = vsel %vm857, %v852, %v854
  %v860 = vsel %vm857, %v850, %v852
  %v861 = vsel %vm857, %v856, %v850
  %s862 = scalar_lea.vmem %s3, 36
  %v863 = vld [vmem:[%s862] ss:$8 sm:$0xf]
  %v865 = vlaneseq
  %v866 = vshrl.u32 %v865, 7
  %v867 = vsub.s32 0, %v866
  %v868 = vrot.slane %v863, %v867
  %v869 = vlaneseq
  %v870 = vshrl.u32 %v869, 7
  %v871 = vsub.s32 1, %v870
  %v872 = vrot.slane %v863, %v871
  %v873 = vlaneseq
  %v874 = vshrl.u32 %v873, 7
  %v875 = vsub.s32 2, %v874
  %v876 = vrot.slane %v863, %v875
  %v877 = vlaneseq
  %v878 = vshrl.u32 %v877, 7
  %v879 = vsub.s32 3, %v878
  %v880 = vrot.slane %v863, %v879
  %v885 = vmul.f32 %v861, %v868
  %v886 = vmul.f32 %v860, %v872
  %v887 = vmul.f32 %v859, %v876
  %v888 = vmul.f32 %v858, %v880
  %889 = vset.pattern.permute.xlu0 3
  %890 = vperm.xlu0 %889, %v695
  %v891 = vpop.permute.xlu0 %890
  %v893 = vmul.f32 %v885, %v891
  %v894 = vmul.f32 %v886, %v891
  %v895 = vmul.f32 %v887, %v891
  %v896 = vmul.f32 %v888, %v891
  %v897 = vadd.f32 %v845, %v893
  %v898 = vadd.f32 %v846, %v894
  %v899 = vadd.f32 %v847, %v895
  %v900 = vadd.f32 %v848, %v896
  %901 = vrot.lane.b32.xlu0 %v22, 126
  %v902 = vpop.permute.xlu0 %901
  %903 = vrot.lane.b32.xlu0 %v23, 126
  %v904 = vpop.permute.xlu0 %903
  %905 = vrot.lane.b32.xlu0 %v24, 126
  %v906 = vpop.permute.xlu0 %905
  %907 = vrot.lane.b32.xlu0 %v25, 126
  %v908 = vpop.permute.xlu0 %907
  %vm909 = vcmp.lt.s32.totalorder %v53, 126
  %v910 = vsel %vm909, %v906, %v908
  %v911 = vsel %vm909, %v904, %v906
  %v912 = vsel %vm909, %v902, %v904
  %v913 = vsel %vm909, %v908, %v902
  %s914 = scalar_lea.vmem %s3, 37
  %v915 = vld [vmem:[%s914] ss:$8 sm:$0xf]
  %v917 = vlaneseq
  %v918 = vshrl.u32 %v917, 7
  %v919 = vsub.s32 0, %v918
  %v920 = vrot.slane %v915, %v919
  %v921 = vlaneseq
  %v922 = vshrl.u32 %v921, 7
  %v923 = vsub.s32 1, %v922
  %v924 = vrot.slane %v915, %v923
  %v925 = vlaneseq
  %v926 = vshrl.u32 %v925, 7
  %v927 = vsub.s32 2, %v926
  %v928 = vrot.slane %v915, %v927
  %v929 = vlaneseq
  %v930 = vshrl.u32 %v929, 7
  %v931 = vsub.s32 3, %v930
  %v932 = vrot.slane %v915, %v931
  %v937 = vmul.f32 %v912, %v920
  %v938 = vmul.f32 %v911, %v924
  %v939 = vmul.f32 %v910, %v928
  %v940 = vmul.f32 %v913, %v932
  %941 = vset.pattern.permute.xlu0 4
  %942 = vperm.xlu0 %941, %v695
  %v943 = vpop.permute.xlu0 %942
  %v945 = vmul.f32 %v937, %v943
  %v946 = vmul.f32 %v938, %v943
  %v947 = vmul.f32 %v939, %v943
  %v948 = vmul.f32 %v940, %v943
  %v949 = vadd.f32 %v897, %v945
  %v950 = vadd.f32 %v898, %v946
  %v951 = vadd.f32 %v899, %v947
  %v952 = vadd.f32 %v900, %v948
  %953 = vrot.lane.b32.xlu0 %v22, 125
  %v954 = vpop.permute.xlu0 %953
  %955 = vrot.lane.b32.xlu0 %v23, 125
  %v956 = vpop.permute.xlu0 %955
  %957 = vrot.lane.b32.xlu0 %v24, 125
  %v958 = vpop.permute.xlu0 %957
  %959 = vrot.lane.b32.xlu0 %v25, 125
  %v960 = vpop.permute.xlu0 %959
  %vm961 = vcmp.lt.s32.totalorder %v53, 125
  %v962 = vsel %vm961, %v958, %v960
  %v963 = vsel %vm961, %v956, %v958
  %v964 = vsel %vm961, %v954, %v956
  %v965 = vsel %vm961, %v960, %v954
  %s966 = scalar_lea.vmem %s3, 38
  %v967 = vld [vmem:[%s966] ss:$8 sm:$0xf]
  %v969 = vlaneseq
  %v970 = vshrl.u32 %v969, 7
  %v971 = vsub.s32 0, %v970
  %v972 = vrot.slane %v967, %v971
  %v973 = vlaneseq
  %v974 = vshrl.u32 %v973, 7
  %v975 = vsub.s32 1, %v974
  %v976 = vrot.slane %v967, %v975
  %v977 = vlaneseq
  %v978 = vshrl.u32 %v977, 7
  %v979 = vsub.s32 2, %v978
  %v980 = vrot.slane %v967, %v979
  %v981 = vlaneseq
  %v982 = vshrl.u32 %v981, 7
  %v983 = vsub.s32 3, %v982
  %v984 = vrot.slane %v967, %v983
  %v989 = vmul.f32 %v964, %v972
  %v990 = vmul.f32 %v963, %v976
  %v991 = vmul.f32 %v962, %v980
  %v992 = vmul.f32 %v965, %v984
  %993 = vset.pattern.permute.xlu0 5
  %994 = vperm.xlu0 %993, %v695
  %v995 = vpop.permute.xlu0 %994
  %v997 = vmul.f32 %v989, %v995
  %v998 = vmul.f32 %v990, %v995
  %v999 = vmul.f32 %v991, %v995
  %v1000 = vmul.f32 %v992, %v995
  %v1001 = vadd.f32 %v949, %v997
  %v1002 = vadd.f32 %v950, %v998
  %v1003 = vadd.f32 %v951, %v999
  %v1004 = vadd.f32 %v952, %v1000
  %1005 = vrot.lane.b32.xlu0 %v22, 124
  %v1006 = vpop.permute.xlu0 %1005
  %1007 = vrot.lane.b32.xlu0 %v23, 124
  %v1008 = vpop.permute.xlu0 %1007
  %1009 = vrot.lane.b32.xlu0 %v24, 124
  %v1010 = vpop.permute.xlu0 %1009
  %1011 = vrot.lane.b32.xlu0 %v25, 124
  %v1012 = vpop.permute.xlu0 %1011
  %vm1013 = vcmp.lt.s32.totalorder %v53, 124
  %v1014 = vsel %vm1013, %v1010, %v1012
  %v1015 = vsel %vm1013, %v1008, %v1010
  %v1016 = vsel %vm1013, %v1006, %v1008
  %v1017 = vsel %vm1013, %v1012, %v1006
  %s1018 = scalar_lea.vmem %s3, 39
  %v1019 = vld [vmem:[%s1018] ss:$8 sm:$0xf]
  %v1021 = vlaneseq
  %v1022 = vshrl.u32 %v1021, 7
  %v1023 = vsub.s32 0, %v1022
  %v1024 = vrot.slane %v1019, %v1023
  %v1025 = vlaneseq
  %v1026 = vshrl.u32 %v1025, 7
  %v1027 = vsub.s32 1, %v1026
  %v1028 = vrot.slane %v1019, %v1027
  %v1029 = vlaneseq
  %v1030 = vshrl.u32 %v1029, 7
  %v1031 = vsub.s32 2, %v1030
  %v1032 = vrot.slane %v1019, %v1031
  %v1033 = vlaneseq
  %v1034 = vshrl.u32 %v1033, 7
  %v1035 = vsub.s32 3, %v1034
  %v1036 = vrot.slane %v1019, %v1035
  %v1041 = vmul.f32 %v1016, %v1024
  %v1042 = vmul.f32 %v1015, %v1028
  %v1043 = vmul.f32 %v1014, %v1032
  %v1044 = vmul.f32 %v1017, %v1036
  %1045 = vset.pattern.permute.xlu0 6
  %1046 = vperm.xlu0 %1045, %v695
  %v1047 = vpop.permute.xlu0 %1046
  %v1049 = vmul.f32 %v1041, %v1047
  %v1050 = vmul.f32 %v1042, %v1047
  %v1051 = vmul.f32 %v1043, %v1047
  %v1052 = vmul.f32 %v1044, %v1047
  %v1053 = vadd.f32 %v1001, %v1049
  %v1054 = vadd.f32 %v1002, %v1050
  %v1055 = vadd.f32 %v1003, %v1051
  %v1056 = vadd.f32 %v1004, %v1052
  %1057 = vrot.lane.b32.xlu0 %v22, 123
  %v1058 = vpop.permute.xlu0 %1057
  %1059 = vrot.lane.b32.xlu0 %v23, 123
  %v1060 = vpop.permute.xlu0 %1059
  %1061 = vrot.lane.b32.xlu0 %v24, 123
  %v1062 = vpop.permute.xlu0 %1061
  %1063 = vrot.lane.b32.xlu0 %v25, 123
  %v1064 = vpop.permute.xlu0 %1063
  %vm1065 = vcmp.lt.s32.totalorder %v53, 123
  %v1066 = vsel %vm1065, %v1062, %v1064
  %v1067 = vsel %vm1065, %v1060, %v1062
  %v1068 = vsel %vm1065, %v1058, %v1060
  %v1069 = vsel %vm1065, %v1064, %v1058
  %s1070 = scalar_lea.vmem %s3, 64
  %v1071 = vld [vmem:[%s1070] ss:$8 sm:$0xf]
  %v1073 = vlaneseq
  %v1074 = vshrl.u32 %v1073, 7
  %v1075 = vsub.s32 0, %v1074
  %v1076 = vrot.slane %v1071, %v1075
  %v1077 = vlaneseq
  %v1078 = vshrl.u32 %v1077, 7
  %v1079 = vsub.s32 1, %v1078
  %v1080 = vrot.slane %v1071, %v1079
  %v1081 = vlaneseq
  %v1082 = vshrl.u32 %v1081, 7
  %v1083 = vsub.s32 2, %v1082
  %v1084 = vrot.slane %v1071, %v1083
  %v1085 = vlaneseq
  %v1086 = vshrl.u32 %v1085, 7
  %v1087 = vsub.s32 3, %v1086
  %v1088 = vrot.slane %v1071, %v1087
  %v1093 = vmul.f32 %v1068, %v1076
  %v1094 = vmul.f32 %v1067, %v1080
  %v1095 = vmul.f32 %v1066, %v1084
  %v1096 = vmul.f32 %v1069, %v1088
  %1097 = vset.pattern.permute.xlu0 7
  %1098 = vperm.xlu0 %1097, %v695
  %v1099 = vpop.permute.xlu0 %1098
  %v1101 = vmul.f32 %v1093, %v1099
  %v1102 = vmul.f32 %v1094, %v1099
  %v1103 = vmul.f32 %v1095, %v1099
  %v1104 = vmul.f32 %v1096, %v1099
  %v1105 = vadd.f32 %v1053, %v1101
  %v1106 = vadd.f32 %v1054, %v1102
  %v1107 = vadd.f32 %v1055, %v1103
  %v1108 = vadd.f32 %v1056, %v1104
  %1109 = vrot.lane.b32.xlu0 %v22, 80
  %v1110 = vpop.permute.xlu0 %1109
  %1111 = vrot.lane.b32.xlu0 %v23, 80
  %v1112 = vpop.permute.xlu0 %1111
  %1113 = vrot.lane.b32.xlu0 %v24, 80
  %v1114 = vpop.permute.xlu0 %1113
  %1115 = vrot.lane.b32.xlu0 %v25, 80
  %v1116 = vpop.permute.xlu0 %1115
  %vm1117 = vcmp.lt.s32.totalorder %v53, 80
  %v1118 = vsel %vm1117, %v1114, %v1116
  %v1119 = vsel %vm1117, %v1112, %v1114
  %v1120 = vsel %vm1117, %v1110, %v1112
  %v1121 = vsel %vm1117, %v1116, %v1110
  %s1122 = scalar_lea.vmem %s3, 65
  %v1123 = vld [vmem:[%s1122] ss:$8 sm:$0xf]
  %v1125 = vlaneseq
  %v1126 = vshrl.u32 %v1125, 7
  %v1127 = vsub.s32 0, %v1126
  %v1128 = vrot.slane %v1123, %v1127
  %v1129 = vlaneseq
  %v1130 = vshrl.u32 %v1129, 7
  %v1131 = vsub.s32 1, %v1130
  %v1132 = vrot.slane %v1123, %v1131
  %v1133 = vlaneseq
  %v1134 = vshrl.u32 %v1133, 7
  %v1135 = vsub.s32 2, %v1134
  %v1136 = vrot.slane %v1123, %v1135
  %v1137 = vlaneseq
  %v1138 = vshrl.u32 %v1137, 7
  %v1139 = vsub.s32 3, %v1138
  %v1140 = vrot.slane %v1123, %v1139
  %v1145 = vmul.f32 %v1121, %v1128
  %v1146 = vmul.f32 %v1120, %v1132
  %v1147 = vmul.f32 %v1119, %v1136
  %v1148 = vmul.f32 %v1118, %v1140
  %1149 = vset.pattern.permute.xlu0 8
  %1150 = vperm.xlu0 %1149, %v695
  %v1151 = vpop.permute.xlu0 %1150
  %v1153 = vmul.f32 %v1145, %v1151
  %v1154 = vmul.f32 %v1146, %v1151
  %v1155 = vmul.f32 %v1147, %v1151
  %v1156 = vmul.f32 %v1148, %v1151
  %v1157 = vadd.f32 %v1105, %v1153
  %v1158 = vadd.f32 %v1106, %v1154
  %v1159 = vadd.f32 %v1107, %v1155
  %v1160 = vadd.f32 %v1108, %v1156
  %1161 = vrot.lane.b32.xlu0 %v22, 64
  %v1162 = vpop.permute.xlu0 %1161
  %1163 = vrot.lane.b32.xlu0 %v23, 64
  %v1164 = vpop.permute.xlu0 %1163
  %1165 = vrot.lane.b32.xlu0 %v24, 64
  %v1166 = vpop.permute.xlu0 %1165
  %1167 = vrot.lane.b32.xlu0 %v25, 64
  %v1168 = vpop.permute.xlu0 %1167
  %vm1169 = vcmp.lt.s32.totalorder %v53, 64
  %v1170 = vsel %vm1169, %v1166, %v1168
  %v1171 = vsel %vm1169, %v1164, %v1166
  %v1172 = vsel %vm1169, %v1162, %v1164
  %v1173 = vsel %vm1169, %v1168, %v1162
  %s1174 = scalar_lea.vmem %s3, 66
  %v1175 = vld [vmem:[%s1174] ss:$8 sm:$0xf]
  %v1177 = vlaneseq
  %v1178 = vshrl.u32 %v1177, 7
  %v1179 = vsub.s32 0, %v1178
  %v1180 = vrot.slane %v1175, %v1179
  %v1181 = vlaneseq
  %v1182 = vshrl.u32 %v1181, 7
  %v1183 = vsub.s32 1, %v1182
  %v1184 = vrot.slane %v1175, %v1183
  %v1185 = vlaneseq
  %v1186 = vshrl.u32 %v1185, 7
  %v1187 = vsub.s32 2, %v1186
  %v1188 = vrot.slane %v1175, %v1187
  %v1189 = vlaneseq
  %v1190 = vshrl.u32 %v1189, 7
  %v1191 = vsub.s32 3, %v1190
  %v1192 = vrot.slane %v1175, %v1191
  %v1197 = vmul.f32 %v1173, %v1180
  %v1198 = vmul.f32 %v1172, %v1184
  %v1199 = vmul.f32 %v1171, %v1188
  %v1200 = vmul.f32 %v1170, %v1192
  %1201 = vset.pattern.permute.xlu0 9
  %1202 = vperm.xlu0 %1201, %v695
  %v1203 = vpop.permute.xlu0 %1202
  %v1205 = vmul.f32 %v1197, %v1203
  %v1206 = vmul.f32 %v1198, %v1203
  %v1207 = vmul.f32 %v1199, %v1203
  %v1208 = vmul.f32 %v1200, %v1203
  %v1209 = vadd.f32 %v1157, %v1205
  %v1210 = vadd.f32 %v1158, %v1206
  %v1211 = vadd.f32 %v1159, %v1207
  %v1212 = vadd.f32 %v1160, %v1208
  %1213 = vrot.lane.b32.xlu0 %v22, 48
  %v1214 = vpop.permute.xlu0 %1213
  %1215 = vrot.lane.b32.xlu0 %v23, 48
  %v1216 = vpop.permute.xlu0 %1215
  %1217 = vrot.lane.b32.xlu0 %v24, 48
  %v1218 = vpop.permute.xlu0 %1217
  %1219 = vrot.lane.b32.xlu0 %v25, 48
  %v1220 = vpop.permute.xlu0 %1219
  %vm1221 = vcmp.lt.s32.totalorder %v53, 48
  %v1222 = vsel %vm1221, %v1218, %v1220
  %v1223 = vsel %vm1221, %v1216, %v1218
  %v1224 = vsel %vm1221, %v1214, %v1216
  %v1225 = vsel %vm1221, %v1220, %v1214
  %s1226 = scalar_lea.vmem %s3, 67
  %v1227 = vld [vmem:[%s1226] ss:$8 sm:$0xf]
  %v1229 = vlaneseq
  %v1230 = vshrl.u32 %v1229, 7
  %v1231 = vsub.s32 0, %v1230
  %v1232 = vrot.slane %v1227, %v1231
  %v1233 = vlaneseq
  %v1234 = vshrl.u32 %v1233, 7
  %v1235 = vsub.s32 1, %v1234
  %v1236 = vrot.slane %v1227, %v1235
  %v1237 = vlaneseq
  %v1238 = vshrl.u32 %v1237, 7
  %v1239 = vsub.s32 2, %v1238
  %v1240 = vrot.slane %v1227, %v1239
  %v1241 = vlaneseq
  %v1242 = vshrl.u32 %v1241, 7
  %v1243 = vsub.s32 3, %v1242
  %v1244 = vrot.slane %v1227, %v1243
  %v1249 = vmul.f32 %v1225, %v1232
  %v1250 = vmul.f32 %v1224, %v1236
  %v1251 = vmul.f32 %v1223, %v1240
  %v1252 = vmul.f32 %v1222, %v1244
  %1253 = vset.pattern.permute.xlu0 10
  %1254 = vperm.xlu0 %1253, %v695
  %v1255 = vpop.permute.xlu0 %1254
  %v1257 = vmul.f32 %v1249, %v1255
  %v1258 = vmul.f32 %v1250, %v1255
  %v1259 = vmul.f32 %v1251, %v1255
  %v1260 = vmul.f32 %v1252, %v1255
  %v1261 = vadd.f32 %v1209, %v1257
  %v1262 = vadd.f32 %v1210, %v1258
  %v1263 = vadd.f32 %v1211, %v1259
  %v1264 = vadd.f32 %v1212, %v1260
  %1265 = vrot.lane.b32.xlu0 %v22, 32
  %v1266 = vpop.permute.xlu0 %1265
  %1267 = vrot.lane.b32.xlu0 %v23, 32
  %v1268 = vpop.permute.xlu0 %1267
  %1269 = vrot.lane.b32.xlu0 %v24, 32
  %v1270 = vpop.permute.xlu0 %1269
  %1271 = vrot.lane.b32.xlu0 %v25, 32
  %v1272 = vpop.permute.xlu0 %1271
  %vm1273 = vcmp.lt.s32.totalorder %v53, 32
  %v1274 = vsel %vm1273, %v1270, %v1272
  %v1275 = vsel %vm1273, %v1268, %v1270
  %v1276 = vsel %vm1273, %v1266, %v1268
  %v1277 = vsel %vm1273, %v1272, %v1266
  %s1278 = scalar_lea.vmem %s3, 68
  %v1279 = vld [vmem:[%s1278] ss:$8 sm:$0xf]
  %v1281 = vlaneseq
  %v1282 = vshrl.u32 %v1281, 7
  %v1283 = vsub.s32 0, %v1282
  %v1284 = vrot.slane %v1279, %v1283
  %v1285 = vlaneseq
  %v1286 = vshrl.u32 %v1285, 7
  %v1287 = vsub.s32 1, %v1286
  %v1288 = vrot.slane %v1279, %v1287
  %v1289 = vlaneseq
  %v1290 = vshrl.u32 %v1289, 7
  %v1291 = vsub.s32 2, %v1290
  %v1292 = vrot.slane %v1279, %v1291
  %v1293 = vlaneseq
  %v1294 = vshrl.u32 %v1293, 7
  %v1295 = vsub.s32 3, %v1294
  %v1296 = vrot.slane %v1279, %v1295
  %v1301 = vmul.f32 %v1277, %v1284
  %v1302 = vmul.f32 %v1276, %v1288
  %v1303 = vmul.f32 %v1275, %v1292
  %v1304 = vmul.f32 %v1274, %v1296
  %1305 = vset.pattern.permute.xlu0 11
  %1306 = vperm.xlu0 %1305, %v695
  %v1307 = vpop.permute.xlu0 %1306
  %v1309 = vmul.f32 %v1301, %v1307
  %v1310 = vmul.f32 %v1302, %v1307
  %v1311 = vmul.f32 %v1303, %v1307
  %v1312 = vmul.f32 %v1304, %v1307
  %v1313 = vadd.f32 %v1261, %v1309
  %v1314 = vadd.f32 %v1262, %v1310
  %v1315 = vadd.f32 %v1263, %v1311
  %v1316 = vadd.f32 %v1264, %v1312
  %1317 = vrot.lane.b32.xlu0 %v22, 96
  %v1318 = vpop.permute.xlu0 %1317
  %1319 = vrot.lane.b32.xlu0 %v23, 96
  %v1320 = vpop.permute.xlu0 %1319
  %1321 = vrot.lane.b32.xlu0 %v24, 96
  %v1322 = vpop.permute.xlu0 %1321
  %1323 = vrot.lane.b32.xlu0 %v25, 96
  %v1324 = vpop.permute.xlu0 %1323
  %vm1325 = vcmp.lt.s32.totalorder %v53, 96
  %v1326 = vsel %vm1325, %v1322, %v1324
  %v1327 = vsel %vm1325, %v1320, %v1322
  %v1328 = vsel %vm1325, %v1318, %v1320
  %v1329 = vsel %vm1325, %v1324, %v1318
  %s1330 = scalar_lea.vmem %s3, 69
  %v1331 = vld [vmem:[%s1330] ss:$8 sm:$0xf]
  %v1333 = vlaneseq
  %v1334 = vshrl.u32 %v1333, 7
  %v1335 = vsub.s32 0, %v1334
  %v1336 = vrot.slane %v1331, %v1335
  %v1337 = vlaneseq
  %v1338 = vshrl.u32 %v1337, 7
  %v1339 = vsub.s32 1, %v1338
  %v1340 = vrot.slane %v1331, %v1339
  %v1341 = vlaneseq
  %v1342 = vshrl.u32 %v1341, 7
  %v1343 = vsub.s32 2, %v1342
  %v1344 = vrot.slane %v1331, %v1343
  %v1345 = vlaneseq
  %v1346 = vshrl.u32 %v1345, 7
  %v1347 = vsub.s32 3, %v1346
  %v1348 = vrot.slane %v1331, %v1347
  %v1353 = vmul.f32 %v1328, %v1336
  %v1354 = vmul.f32 %v1327, %v1340
  %v1355 = vmul.f32 %v1326, %v1344
  %v1356 = vmul.f32 %v1329, %v1348
  %1357 = vset.pattern.permute.xlu0 12
  %1358 = vperm.xlu0 %1357, %v695
  %v1359 = vpop.permute.xlu0 %1358
  %v1361 = vmul.f32 %v1353, %v1359
  %v1362 = vmul.f32 %v1354, %v1359
  %v1363 = vmul.f32 %v1355, %v1359
  %v1364 = vmul.f32 %v1356, %v1359
  %v1365 = vadd.f32 %v1313, %v1361
  %v1366 = vadd.f32 %v1314, %v1362
  %v1367 = vadd.f32 %v1315, %v1363
  %v1368 = vadd.f32 %v1316, %v1364
  %s1369 = scalar_lea.vmem %s3, 70
  %v1370 = vld [vmem:[%s1369] ss:$8 sm:$0xf]
  %v1372 = vlaneseq
  %v1373 = vshrl.u32 %v1372, 7
  %v1374 = vsub.s32 0, %v1373
  %v1375 = vrot.slane %v1370, %v1374
  %v1376 = vlaneseq
  %v1377 = vshrl.u32 %v1376, 7
  %v1378 = vsub.s32 1, %v1377
  %v1379 = vrot.slane %v1370, %v1378
  %v1380 = vlaneseq
  %v1381 = vshrl.u32 %v1380, 7
  %v1382 = vsub.s32 2, %v1381
  %v1383 = vrot.slane %v1370, %v1382
  %v1384 = vlaneseq
  %v1385 = vshrl.u32 %v1384, 7
  %v1386 = vsub.s32 3, %v1385
  %v1387 = vrot.slane %v1370, %v1386
  %v1392 = vmul.f32 %v1120, %v1375
  %v1393 = vmul.f32 %v1119, %v1379
  %v1394 = vmul.f32 %v1118, %v1383
  %v1395 = vmul.f32 %v1121, %v1387
  %1396 = vset.pattern.permute.xlu0 13
  %1397 = vperm.xlu0 %1396, %v695
  %v1398 = vpop.permute.xlu0 %1397
  %v1400 = vmul.f32 %v1392, %v1398
  %v1401 = vmul.f32 %v1393, %v1398
  %v1402 = vmul.f32 %v1394, %v1398
  %v1403 = vmul.f32 %v1395, %v1398
  %v1404 = vadd.f32 %v1365, %v1400
  %v1405 = vadd.f32 %v1366, %v1401
  %v1406 = vadd.f32 %v1367, %v1402
  %v1407 = vadd.f32 %v1368, %v1403
  %s1408 = scalar_lea.vmem %s3, 71
  %v1409 = vld [vmem:[%s1408] ss:$8 sm:$0xf]
  %v1411 = vlaneseq
  %v1412 = vshrl.u32 %v1411, 7
  %v1413 = vsub.s32 0, %v1412
  %v1414 = vrot.slane %v1409, %v1413
  %v1415 = vlaneseq
  %v1416 = vshrl.u32 %v1415, 7
  %v1417 = vsub.s32 1, %v1416
  %v1418 = vrot.slane %v1409, %v1417
  %v1419 = vlaneseq
  %v1420 = vshrl.u32 %v1419, 7
  %v1421 = vsub.s32 2, %v1420
  %v1422 = vrot.slane %v1409, %v1421
  %v1423 = vlaneseq
  %v1424 = vshrl.u32 %v1423, 7
  %v1425 = vsub.s32 3, %v1424
  %v1426 = vrot.slane %v1409, %v1425
  %v1431 = vmul.f32 %v1172, %v1414
  %v1432 = vmul.f32 %v1171, %v1418
  %v1433 = vmul.f32 %v1170, %v1422
  %v1434 = vmul.f32 %v1173, %v1426
  %1435 = vset.pattern.permute.xlu0 14
  %1436 = vperm.xlu0 %1435, %v695
  %v1437 = vpop.permute.xlu0 %1436
  %v1439 = vmul.f32 %v1431, %v1437
  %v1440 = vmul.f32 %v1432, %v1437
  %v1441 = vmul.f32 %v1433, %v1437
  %v1442 = vmul.f32 %v1434, %v1437
  %v1443 = vadd.f32 %v1404, %v1439
  %v1444 = vadd.f32 %v1405, %v1440
  %v1445 = vadd.f32 %v1406, %v1441
  %v1446 = vadd.f32 %v1407, %v1442
  %s1447 = scalar_lea.vmem %s3, 96
  %v1448 = vld [vmem:[%s1447] ss:$8 sm:$0xf]
  %v1450 = vlaneseq
  %v1451 = vshrl.u32 %v1450, 7
  %v1452 = vsub.s32 0, %v1451
  %v1453 = vrot.slane %v1448, %v1452
  %v1454 = vlaneseq
  %v1455 = vshrl.u32 %v1454, 7
  %v1456 = vsub.s32 1, %v1455
  %v1457 = vrot.slane %v1448, %v1456
  %v1458 = vlaneseq
  %v1459 = vshrl.u32 %v1458, 7
  %v1460 = vsub.s32 2, %v1459
  %v1461 = vrot.slane %v1448, %v1460
  %v1462 = vlaneseq
  %v1463 = vshrl.u32 %v1462, 7
  %v1464 = vsub.s32 3, %v1463
  %v1465 = vrot.slane %v1448, %v1464
  %v1470 = vmul.f32 %v1224, %v1453
  %v1471 = vmul.f32 %v1223, %v1457
  %v1472 = vmul.f32 %v1222, %v1461
  %v1473 = vmul.f32 %v1225, %v1465
  %1474 = vset.pattern.permute.xlu0 15
  %1475 = vperm.xlu0 %1474, %v695
  %v1476 = vpop.permute.xlu0 %1475
  %v1478 = vmul.f32 %v1470, %v1476
  %v1479 = vmul.f32 %v1471, %v1476
  %v1480 = vmul.f32 %v1472, %v1476
  %v1481 = vmul.f32 %v1473, %v1476
  %v1482 = vadd.f32 %v1443, %v1478
  %v1483 = vadd.f32 %v1444, %v1479
  %v1484 = vadd.f32 %v1445, %v1480
  %v1485 = vadd.f32 %v1446, %v1481
  %v1486 = vadd.f32 %v691, %v1482
  %v1487 = vadd.f32 %v692, %v1483
  %v1488 = vadd.f32 %v693, %v1484
  %v1489 = vadd.f32 %v694, %v1485
  %v1490 = vld [vmem:[%s2 + $0x48] sm:$0xff]
  %v1491 = vld [vmem:[%s2 + $0x50] sm:$0xff]
  %1493 = vset.pattern.permute.xlu0 0
  %1494 = vperm.xlu0 %1493, %v1490
  %v1495 = vpop.permute.xlu0 %1494
  %1498 = vset.pattern.permute.xlu0 0
  %1499 = vperm.xlu0 %1498, %v1491
  %v1500 = vpop.permute.xlu0 %1499
  %v1502 = vadd.f32 %v687, %v1495
  %v1503 = vadd.f32 %v688, %v1495
  %v1504 = vadd.f32 %v689, %v1495
  %v1505 = vadd.f32 %v690, %v1495
  %v1506 = vadd.f32 %v1486, %v1500
  %v1507 = vadd.f32 %v1487, %v1500
  %v1508 = vadd.f32 %v1488, %v1500
  %v1509 = vadd.f32 %v1489, %v1500
  %v1510 = vld [vmem:[%s1] sm:$0xf]
  %v1511 = vld [vmem:[%s1 + $0x4] sm:$0xf]
  %v1512 = vld [vmem:[%s1 + $0x8] sm:$0xf]
  %v1513 = vld [vmem:[%s1 + $0xc] sm:$0xf]
  %v1514 = vld [vmem:[%s1 + $0x10] sm:$0xf]
  %v1515 = vld [vmem:[%s1 + $0x14] sm:$0xf]
  %v1516 = vld [vmem:[%s1 + $0x18] sm:$0xf]
  %v1517 = vld [vmem:[%s1 + $0x1c] sm:$0xf]
  %v1518 = vpack.c.bf16 %v1506, %v1502
  %v1519 = vpack.c.bf16 %v1507, %v1503
  %v1520 = vpack.c.bf16 %v1508, %v1504
  %v1521 = vpack.c.bf16 %v1509, %v1505
  %v1522 = vpack.c.bf16 %v30, %v26
  %v1523 = vpack.c.bf16 %v31, %v27
  %v1524 = vpack.c.bf16 %v32, %v28
  %v1525 = vpack.c.bf16 %v33, %v29
  %v1526 = vld [vmem:[%s2 + $0x58] sm:$0xff]
  %v1527 = vld [vmem:[%s2 + $0x60] sm:$0xff]
  %v1528 = vld [vmem:[%s2 + $0x68] sm:$0xff]
  %v1529 = vld [vmem:[%s2 + $0x70] sm:$0xff]
  %v1530 = vld [vmem:[%s2 + $0x78] sm:$0xff]
  %v1531 = vld [vmem:[%s2 + $0x80] sm:$0xff]
  %v1532 = vld [vmem:[%s2 + $0x88] sm:$0xff]
  %v1533 = vld [vmem:[%s2 + $0x90] sm:$0xff]
  %1535 = vset.pattern.permute.xlu0 0
  %1536 = vperm.xlu0 %1535, %v1526
  %v1537 = vpop.permute.xlu0 %1536
  %1540 = vset.pattern.permute.xlu0 0
  %1541 = vperm.xlu0 %1540, %v1527
  %v1542 = vpop.permute.xlu0 %1541
  %1545 = vset.pattern.permute.xlu0 0
  %1546 = vperm.xlu0 %1545, %v1528
  %v1547 = vpop.permute.xlu0 %1546
  %1550 = vset.pattern.permute.xlu0 0
  %1551 = vperm.xlu0 %1550, %v1529
  %v1552 = vpop.permute.xlu0 %1551
  %1555 = vset.pattern.permute.xlu0 0
  %1556 = vperm.xlu0 %1555, %v1530
  %v1557 = vpop.permute.xlu0 %1556
  %1560 = vset.pattern.permute.xlu0 0
  %1561 = vperm.xlu0 %1560, %v1531
  %v1562 = vpop.permute.xlu0 %1561
  %1565 = vset.pattern.permute.xlu0 0
  %1566 = vperm.xlu0 %1565, %v1532
  %v1567 = vpop.permute.xlu0 %1566
  %1570 = vset.pattern.permute.xlu0 0
  %1571 = vperm.xlu0 %1570, %v1533
  %v1572 = vpop.permute.xlu0 %1571
  %v1582 = vunpack.c.l.b16 %v1510
  %v1583 = vunpack.c.l.b16 %v1511
  %v1584 = vunpack.c.l.b16 %v1512
  %v1585 = vunpack.c.l.b16 %v1513
  %v1586 = vunpack.c.l.b16 %v1514
  %v1587 = vunpack.c.l.b16 %v1515
  %v1588 = vunpack.c.l.b16 %v1516
  %v1589 = vunpack.c.l.b16 %v1517
  %v1590 = vpack.c.b16 %v1583, %v1582
  %v1591 = vpack.c.b16 %v1585, %v1584
  %v1592 = vpack.c.b16 %v1587, %v1586
  %v1593 = vpack.c.b16 %v1589, %v1588
  %vm1594 = vcmask 261120
  %v1596 = vsel %vm1594, %v1590, 0
  %v1599 = vsel %vm1594, %v1591, 0
  %v1602 = vsel %vm1594, %v1592, 0
  %v1605 = vsel %vm1594, %v1593, 0
  %1607 = vmatprep.subr.bf16.mxu0 0
  %1608 = vmatpush1.bf16.msra.mxu0 0
  %1609 = vmatprep.subr.bf16.mxu0 0
  %1610 = vmatpush1.bf16.msra.mxu0 0
  %1611 = vmatprep.subr.bf16.mxu0 0
  %1612 = vmatpush1.bf16.msra.mxu0 0
  %1613 = vmatprep.subr.bf16.mxu0 0
  %1614 = vmatpush1.bf16.msra.mxu0 0
  %1615 = vmatprep.subr.bf16.mxu0 0
  %1616 = vmatpush1.bf16.msra.mxu0 0
  %1617 = vmatprep.subr.bf16.mxu0 0
  %1618 = vmatpush1.bf16.msra.mxu0 0
  %1619 = vmatprep.subr.bf16.mxu0 %v1523
  %1620 = vmatpush1.bf16.msra.mxu0 %v1522
  %1621 = vmatprep.subr.bf16.mxu0 %v1519
  %1622 = vmatpush1.bf16.msra.mxu0 %v1518
  %1623 = vmatprep.subr.bf16.mxu0 0
  %1624 = vmatpush2.bf16.msra.mxu0 0
  %1625 = vmatprep.subr.bf16.mxu0 0
  %1626 = vmatpush2.bf16.msra.mxu0 0
  %1627 = vmatprep.subr.bf16.mxu0 0
  %1628 = vmatpush2.bf16.msra.mxu0 0
  %1629 = vmatprep.subr.bf16.mxu0 0
  %1630 = vmatpush2.bf16.msra.mxu0 0
  %1631 = vmatprep.subr.bf16.mxu0 0
  %1632 = vmatpush2.bf16.msra.mxu0 0
  %1633 = vmatprep.subr.bf16.mxu0 0
  %1634 = vmatpush2.bf16.msra.mxu0 0
  %1635 = vmatprep.subr.bf16.mxu0 0
  %1636 = vmatpush2.bf16.msra.mxu0 0
  %1637 = vmatprep.subr.bf16.mxu0 0
  %1638 = vmatpush2.bf16.msra.mxu0 0
  %1639 = vmatprep.mubr.bf16.mxu0 0
  %1640 = vmatmul.mubr.bf16.gmra.mxu0 %v1596
  %v1641 = vpop.f32.mrf.mxu0
  %v1642 = vadd.f32 %v1537, %v1641
  %v1643 = vpop.f32.mrf.mxu0
  %v1644 = vadd.f32 %v1537, %v1643
  %v1645 = vpop.f32.mrf.mxu0
  %v1646 = vadd.f32 %v1542, %v1645
  %v1647 = vpop.f32.mrf.mxu0
  %v1648 = vadd.f32 %v1542, %v1647
  %1649 = vmatprep.mubr.bf16.mxu0 0
  %1650 = vmatmul.mubr.bf16.gmra.mxu0 %v1599
  %v1651 = vpop.f32.mrf.mxu0
  %v1652 = vadd.f32 %v1547, %v1651
  %v1653 = vpop.f32.mrf.mxu0
  %v1654 = vadd.f32 %v1547, %v1653
  %v1655 = vpop.f32.mrf.mxu0
  %v1656 = vadd.f32 %v1552, %v1655
  %v1657 = vpop.f32.mrf.mxu0
  %v1658 = vadd.f32 %v1552, %v1657
  %1659 = vmatprep.mubr.bf16.mxu0 0
  %1660 = vmatmul.mubr.bf16.gmra.mxu0 %v1602
  %v1661 = vpop.f32.mrf.mxu0
  %v1662 = vadd.f32 %v1557, %v1661
  %v1663 = vpop.f32.mrf.mxu0
  %v1664 = vadd.f32 %v1557, %v1663
  %v1665 = vpop.f32.mrf.mxu0
  %v1666 = vadd.f32 %v1562, %v1665
  %v1667 = vpop.f32.mrf.mxu0
  %v1668 = vadd.f32 %v1562, %v1667
  %1669 = vmatprep.mubr.bf16.mxu0 0
  %1670 = vmatmul.mubr.bf16.gmra.mxu0 %v1605
  %v1671 = vpop.f32.mrf.mxu0
  %v1672 = vadd.f32 %v1567, %v1671
  %v1673 = vpop.f32.mrf.mxu0
  %v1674 = vadd.f32 %v1567, %v1673
  %v1675 = vpop.f32.mrf.mxu0
  %v1676 = vadd.f32 %v1572, %v1675
  %v1677 = vpop.f32.mrf.mxu0
  %v1678 = vadd.f32 %v1572, %v1677
  %1679 = vdwg.mxu0
  %1680 = vmatprep.subr.bf16.mxu0 0
  %1681 = vmatpush1.bf16.msra.mxu0 0
  %1682 = vmatprep.subr.bf16.mxu0 0
  %1683 = vmatpush1.bf16.msra.mxu0 0
  %1684 = vmatprep.subr.bf16.mxu0 0
  %1685 = vmatpush1.bf16.msra.mxu0 0
  %1686 = vmatprep.subr.bf16.mxu0 0
  %1687 = vmatpush1.bf16.msra.mxu0 0
  %1688 = vmatprep.subr.bf16.mxu0 0
  %1689 = vmatpush1.bf16.msra.mxu0 0
  %1690 = vmatprep.subr.bf16.mxu0 0
  %1691 = vmatpush1.bf16.msra.mxu0 0
  %1692 = vmatprep.subr.bf16.mxu0 %v1525
  %1693 = vmatpush1.bf16.msra.mxu0 %v1524
  %1694 = vmatprep.subr.bf16.mxu0 %v1521
  %1695 = vmatpush1.bf16.msra.mxu0 %v1520
  %1696 = vmatprep.subr.bf16.mxu0 0
  %1697 = vmatpush2.bf16.msra.mxu0 0
  %1698 = vmatprep.subr.bf16.mxu0 0
  %1699 = vmatpush2.bf16.msra.mxu0 0
  %1700 = vmatprep.subr.bf16.mxu0 0
  %1701 = vmatpush2.bf16.msra.mxu0 0
  %1702 = vmatprep.subr.bf16.mxu0 0
  %1703 = vmatpush2.bf16.msra.mxu0 0
  %1704 = vmatprep.subr.bf16.mxu0 0
  %1705 = vmatpush2.bf16.msra.mxu0 0
  %1706 = vmatprep.subr.bf16.mxu0 0
  %1707 = vmatpush2.bf16.msra.mxu0 0
  %1708 = vmatprep.subr.bf16.mxu0 0
  %1709 = vmatpush2.bf16.msra.mxu0 0
  %1710 = vmatprep.subr.bf16.mxu0 0
  %1711 = vmatpush2.bf16.msra.mxu0 0
  %1712 = vmatprep.mubr.bf16.mxu0 0
  %1713 = vmatmul.mubr.bf16.gmra.mxu0 %v1596
  %v1714 = vpop.f32.mrf.mxu0
  %v1715 = vadd.f32 %v1537, %v1714
  %v1716 = vpop.f32.mrf.mxu0
  %v1717 = vadd.f32 %v1537, %v1716
  %v1718 = vpop.f32.mrf.mxu0
  %v1719 = vadd.f32 %v1542, %v1718
  %v1720 = vpop.f32.mrf.mxu0
  %v1721 = vadd.f32 %v1542, %v1720
  %1722 = vmatprep.mubr.bf16.mxu0 0
  %1723 = vmatmul.mubr.bf16.gmra.mxu0 %v1599
  %v1724 = vpop.f32.mrf.mxu0
  %v1725 = vadd.f32 %v1547, %v1724
  %v1726 = vpop.f32.mrf.mxu0
  %v1727 = vadd.f32 %v1547, %v1726
  %v1728 = vpop.f32.mrf.mxu0
  %v1729 = vadd.f32 %v1552, %v1728
  %v1730 = vpop.f32.mrf.mxu0
  %v1731 = vadd.f32 %v1552, %v1730
  %1732 = vmatprep.mubr.bf16.mxu0 0
  %1733 = vmatmul.mubr.bf16.gmra.mxu0 %v1602
  %v1734 = vpop.f32.mrf.mxu0
  %v1735 = vadd.f32 %v1557, %v1734
  %v1736 = vpop.f32.mrf.mxu0
  %v1737 = vadd.f32 %v1557, %v1736
  %v1738 = vpop.f32.mrf.mxu0
  %v1739 = vadd.f32 %v1562, %v1738
  %v1740 = vpop.f32.mrf.mxu0
  %v1741 = vadd.f32 %v1562, %v1740
  %1742 = vmatprep.mubr.bf16.mxu0 0
  %1743 = vmatmul.mubr.bf16.gmra.mxu0 %v1605
  %v1744 = vpop.f32.mrf.mxu0
  %v1745 = vadd.f32 %v1567, %v1744
  %v1746 = vpop.f32.mrf.mxu0
  %v1747 = vadd.f32 %v1567, %v1746
  %v1748 = vpop.f32.mrf.mxu0
  %v1749 = vadd.f32 %v1572, %v1748
  %v1750 = vpop.f32.mrf.mxu0
  %v1751 = vadd.f32 %v1572, %v1750
  %1752 = vdwg.mxu0
  %v1753 = vxor.u32 %v1642, 2147483648
  %v1754 = vxor.u32 %v1644, 2147483648
  %v1755 = vxor.u32 %v1715, 2147483648
  %v1756 = vxor.u32 %v1717, 2147483648
  %v1757 = vxor.u32 %v1646, 2147483648
  %v1758 = vxor.u32 %v1648, 2147483648
  %v1759 = vxor.u32 %v1719, 2147483648
  %v1760 = vxor.u32 %v1721, 2147483648
  %v1761 = vmul.f32 %v1753, 1.442695
  %v1762 = vpow.pop %v1761
  %v1763 = vmul.f32 %v1754, 1.442695
  %v1764 = vpow.pop %v1763
  %v1765 = vmul.f32 %v1755, 1.442695
  %v1766 = vpow.pop %v1765
  %v1767 = vmul.f32 %v1756, 1.442695
  %v1768 = vpow.pop %v1767
  %v1769 = vmul.f32 %v1757, 1.442695
  %v1770 = vpow.pop %v1769
  %v1771 = vmul.f32 %v1758, 1.442695
  %v1772 = vpow.pop %v1771
  %v1773 = vmul.f32 %v1759, 1.442695
  %v1774 = vpow.pop %v1773
  %v1775 = vmul.f32 %v1760, 1.442695
  %v1776 = vpow.pop %v1775
  %v1777 = vadd.f32 %v1762, 1.0
  %v1778 = vadd.f32 %v1764, 1.0
  %v1779 = vadd.f32 %v1766, 1.0
  %v1780 = vadd.f32 %v1768, 1.0
  %v1781 = vadd.f32 %v1770, 1.0
  %v1782 = vadd.f32 %v1772, 1.0
  %v1783 = vadd.f32 %v1774, 1.0
  %v1784 = vadd.f32 %v1776, 1.0
  %v1785 = vrcp.pop %v1777
  %v1786 = vmul.f32 1.0, %v1785
  %v1787 = vrcp.pop %v1778
  %v1788 = vmul.f32 1.0, %v1787
  %v1789 = vrcp.pop %v1779
  %v1790 = vmul.f32 1.0, %v1789
  %v1791 = vrcp.pop %v1780
  %v1792 = vmul.f32 1.0, %v1791
  %v1793 = vrcp.pop %v1781
  %v1794 = vmul.f32 1.0, %v1793
  %v1795 = vrcp.pop %v1782
  %v1796 = vmul.f32 1.0, %v1795
  %v1797 = vrcp.pop %v1783
  %v1798 = vmul.f32 1.0, %v1797
  %v1799 = vrcp.pop %v1784
  %v1800 = vmul.f32 1.0, %v1799
  %v1801 = vmul.f32 %v1642, %v1786
  %v1802 = vmul.f32 %v1644, %v1788
  %v1803 = vmul.f32 %v1715, %v1790
  %v1804 = vmul.f32 %v1717, %v1792
  %v1805 = vmul.f32 %v1646, %v1794
  %v1806 = vmul.f32 %v1648, %v1796
  %v1807 = vmul.f32 %v1719, %v1798
  %v1808 = vmul.f32 %v1721, %v1800
  %v1809 = vld [vmem:[%s2 + $0x18] sm:$0xff]
  %v1810 = vld [vmem:[%s2 + $0x20] sm:$0xff]
  %v1811 = vld [vmem:[%s2 + $0x28] sm:$0xff]
  %v1812 = vld [vmem:[%s2 + $0x30] sm:$0xff]
  %v1813 = vld [vmem:[%s2 + $0x38] sm:$0xff]
  %v1814 = vld [vmem:[%s2 + $0x40] sm:$0xff]
  %1815 = vrot.lane.b32.xlu0 %v1652, 17
  %v1816 = vpop.permute.xlu0 %1815
  %1817 = vrot.lane.b32.xlu0 %v1656, 17
  %v1818 = vpop.permute.xlu0 %1817
  %1819 = vrot.lane.b32.xlu0 %v1662, 17
  %v1820 = vpop.permute.xlu0 %1819
  %1821 = vrot.lane.b32.xlu0 %v1666, 17
  %v1822 = vpop.permute.xlu0 %1821
  %1823 = vrot.lane.b32.xlu0 %v1672, 17
  %v1824 = vpop.permute.xlu0 %1823
  %1825 = vrot.lane.b32.xlu0 %v1676, 17
  %v1826 = vpop.permute.xlu0 %1825
  %1827 = vrot.lane.b32.xlu0 %v1654, 17
  %v1828 = vpop.permute.xlu0 %1827
  %1829 = vrot.lane.b32.xlu0 %v1658, 17
  %v1830 = vpop.permute.xlu0 %1829
  %1831 = vrot.lane.b32.xlu0 %v1664, 17
  %v1832 = vpop.permute.xlu0 %1831
  %1833 = vrot.lane.b32.xlu0 %v1668, 17
  %v1834 = vpop.permute.xlu0 %1833
  %1835 = vrot.lane.b32.xlu0 %v1674, 17
  %v1836 = vpop.permute.xlu0 %1835
  %1837 = vrot.lane.b32.xlu0 %v1678, 17
  %v1838 = vpop.permute.xlu0 %1837
  %1839 = vrot.lane.b32.xlu0 %v1725, 17
  %v1840 = vpop.permute.xlu0 %1839
  %1841 = vrot.lane.b32.xlu0 %v1729, 17
  %v1842 = vpop.permute.xlu0 %1841
  %1843 = vrot.lane.b32.xlu0 %v1735, 17
  %v1844 = vpop.permute.xlu0 %1843
  %1845 = vrot.lane.b32.xlu0 %v1739, 17
  %v1846 = vpop.permute.xlu0 %1845
  %1847 = vrot.lane.b32.xlu0 %v1745, 17
  %v1848 = vpop.permute.xlu0 %1847
  %1849 = vrot.lane.b32.xlu0 %v1749, 17
  %v1850 = vpop.permute.xlu0 %1849
  %1851 = vrot.lane.b32.xlu0 %v1727, 17
  %v1852 = vpop.permute.xlu0 %1851
  %1853 = vrot.lane.b32.xlu0 %v1731, 17
  %v1854 = vpop.permute.xlu0 %1853
  %1855 = vrot.lane.b32.xlu0 %v1737, 17
  %v1856 = vpop.permute.xlu0 %1855
  %1857 = vrot.lane.b32.xlu0 %v1741, 17
  %v1858 = vpop.permute.xlu0 %1857
  %1859 = vrot.lane.b32.xlu0 %v1747, 17
  %v1860 = vpop.permute.xlu0 %1859
  %1861 = vrot.lane.b32.xlu0 %v1751, 17
  %v1862 = vpop.permute.xlu0 %1861
  %v1863 = vsel %vm54, %v1840, %v1852
  %v1864 = vsel %vm54, %v1842, %v1854
  %v1865 = vsel %vm54, %v1844, %v1856
  %v1866 = vsel %vm54, %v1846, %v1858
  %v1867 = vsel %vm54, %v1848, %v1860
  %v1868 = vsel %vm54, %v1850, %v1862
  %v1869 = vsel %vm54, %v1828, %v1840
  %v1870 = vsel %vm54, %v1830, %v1842
  %v1871 = vsel %vm54, %v1832, %v1844
  %v1872 = vsel %vm54, %v1834, %v1846
  %v1873 = vsel %vm54, %v1836, %v1848
  %v1874 = vsel %vm54, %v1838, %v1850
  %v1875 = vsel %vm54, %v1816, %v1828
  %v1876 = vsel %vm54, %v1818, %v1830
  %v1877 = vsel %vm54, %v1820, %v1832
  %v1878 = vsel %vm54, %v1822, %v1834
  %v1879 = vsel %vm54, %v1824, %v1836
  %v1880 = vsel %vm54, %v1826, %v1838
  %v1881 = vsel %vm54, %v1852, %v1816
  %v1882 = vsel %vm54, %v1854, %v1818
  %v1883 = vsel %vm54, %v1856, %v1820
  %v1884 = vsel %vm54, %v1858, %v1822
  %v1885 = vsel %vm54, %v1860, %v1824
  %v1886 = vsel %vm54, %v1862, %v1826
  %v1887 = vmul.f32 %v1881, %v68
  %v1888 = vmul.f32 %v1875, %v72
  %v1889 = vmul.f32 %v1869, %v76
  %v1890 = vmul.f32 %v1863, %v80
  %v1891 = vmul.f32 %v1882, %v68
  %v1892 = vmul.f32 %v1876, %v72
  %v1893 = vmul.f32 %v1870, %v76
  %v1894 = vmul.f32 %v1864, %v80
  %v1895 = vmul.f32 %v1883, %v68
  %v1896 = vmul.f32 %v1877, %v72
  %v1897 = vmul.f32 %v1871, %v76
  %v1898 = vmul.f32 %v1865, %v80
  %v1899 = vmul.f32 %v1884, %v68
  %v1900 = vmul.f32 %v1878, %v72
  %v1901 = vmul.f32 %v1872, %v76
  %v1902 = vmul.f32 %v1866, %v80
  %v1903 = vmul.f32 %v1885, %v68
  %v1904 = vmul.f32 %v1879, %v72
  %v1905 = vmul.f32 %v1873, %v76
  %v1906 = vmul.f32 %v1867, %v80
  %v1907 = vmul.f32 %v1886, %v68
  %v1908 = vmul.f32 %v1880, %v72
  %v1909 = vmul.f32 %v1874, %v76
  %v1910 = vmul.f32 %v1868, %v80
  %1912 = vset.pattern.permute.xlu0 0
  %1913 = vperm.xlu0 %1912, %v1809
  %v1914 = vpop.permute.xlu0 %1913
  %1917 = vset.pattern.permute.xlu0 0
  %1918 = vperm.xlu0 %1917, %v1810
  %v1919 = vpop.permute.xlu0 %1918
  %1922 = vset.pattern.permute.xlu0 0
  %1923 = vperm.xlu0 %1922, %v1811
  %v1924 = vpop.permute.xlu0 %1923
  %1927 = vset.pattern.permute.xlu0 0
  %1928 = vperm.xlu0 %1927, %v1812
  %v1929 = vpop.permute.xlu0 %1928
  %1932 = vset.pattern.permute.xlu0 0
  %1933 = vperm.xlu0 %1932, %v1813
  %v1934 = vpop.permute.xlu0 %1933
  %1937 = vset.pattern.permute.xlu0 0
  %1938 = vperm.xlu0 %1937, %v1814
  %v1939 = vpop.permute.xlu0 %1938
  %v1941 = vmul.f32 %v1887, %v1914
  %v1942 = vmul.f32 %v1888, %v1914
  %v1943 = vmul.f32 %v1889, %v1914
  %v1944 = vmul.f32 %v1890, %v1914
  %v1945 = vmul.f32 %v1891, %v1919
  %v1946 = vmul.f32 %v1892, %v1919
  %v1947 = vmul.f32 %v1893, %v1919
  %v1948 = vmul.f32 %v1894, %v1919
  %v1949 = vmul.f32 %v1895, %v1924
  %v1950 = vmul.f32 %v1896, %v1924
  %v1951 = vmul.f32 %v1897, %v1924
  %v1952 = vmul.f32 %v1898, %v1924
  %v1953 = vmul.f32 %v1899, %v1929
  %v1954 = vmul.f32 %v1900, %v1929
  %v1955 = vmul.f32 %v1901, %v1929
  %v1956 = vmul.f32 %v1902, %v1929
  %v1957 = vmul.f32 %v1903, %v1934
  %v1958 = vmul.f32 %v1904, %v1934
  %v1959 = vmul.f32 %v1905, %v1934
  %v1960 = vmul.f32 %v1906, %v1934
  %v1961 = vmul.f32 %v1907, %v1939
  %v1962 = vmul.f32 %v1908, %v1939
  %v1963 = vmul.f32 %v1909, %v1939
  %v1964 = vmul.f32 %v1910, %v1939
  %1965 = vrot.lane.b32.xlu0 %v1652, 16
  %v1966 = vpop.permute.xlu0 %1965
  %1967 = vrot.lane.b32.xlu0 %v1656, 16
  %v1968 = vpop.permute.xlu0 %1967
  %1969 = vrot.lane.b32.xlu0 %v1662, 16
  %v1970 = vpop.permute.xlu0 %1969
  %1971 = vrot.lane.b32.xlu0 %v1666, 16
  %v1972 = vpop.permute.xlu0 %1971
  %1973 = vrot.lane.b32.xlu0 %v1672, 16
  %v1974 = vpop.permute.xlu0 %1973
  %1975 = vrot.lane.b32.xlu0 %v1676, 16
  %v1976 = vpop.permute.xlu0 %1975
  %1977 = vrot.lane.b32.xlu0 %v1654, 16
  %v1978 = vpop.permute.xlu0 %1977
  %1979 = vrot.lane.b32.xlu0 %v1658, 16
  %v1980 = vpop.permute.xlu0 %1979
  %1981 = vrot.lane.b32.xlu0 %v1664, 16
  %v1982 = vpop.permute.xlu0 %1981
  %1983 = vrot.lane.b32.xlu0 %v1668, 16
  %v1984 = vpop.permute.xlu0 %1983
  %1985 = vrot.lane.b32.xlu0 %v1674, 16
  %v1986 = vpop.permute.xlu0 %1985
  %1987 = vrot.lane.b32.xlu0 %v1678, 16
  %v1988 = vpop.permute.xlu0 %1987
  %1989 = vrot.lane.b32.xlu0 %v1725, 16
  %v1990 = vpop.permute.xlu0 %1989
  %1991 = vrot.lane.b32.xlu0 %v1729, 16
  %v1992 = vpop.permute.xlu0 %1991
  %1993 = vrot.lane.b32.xlu0 %v1735, 16
  %v1994 = vpop.permute.xlu0 %1993
  %1995 = vrot.lane.b32.xlu0 %v1739, 16
  %v1996 = vpop.permute.xlu0 %1995
  %1997 = vrot.lane.b32.xlu0 %v1745, 16
  %v1998 = vpop.permute.xlu0 %1997
  %1999 = vrot.lane.b32.xlu0 %v1749, 16
  %v2000 = vpop.permute.xlu0 %1999
  %2001 = vrot.lane.b32.xlu0 %v1727, 16
  %v2002 = vpop.permute.xlu0 %2001
  %2003 = vrot.lane.b32.xlu0 %v1731, 16
  %v2004 = vpop.permute.xlu0 %2003
  %2005 = vrot.lane.b32.xlu0 %v1737, 16
  %v2006 = vpop.permute.xlu0 %2005
  %2007 = vrot.lane.b32.xlu0 %v1741, 16
  %v2008 = vpop.permute.xlu0 %2007
  %2009 = vrot.lane.b32.xlu0 %v1747, 16
  %v2010 = vpop.permute.xlu0 %2009
  %2011 = vrot.lane.b32.xlu0 %v1751, 16
  %v2012 = vpop.permute.xlu0 %2011
  %v2013 = vsel %vm127, %v1990, %v2002
  %v2014 = vsel %vm127, %v1992, %v2004
  %v2015 = vsel %vm127, %v1994, %v2006
  %v2016 = vsel %vm127, %v1996, %v2008
  %v2017 = vsel %vm127, %v1998, %v2010
  %v2018 = vsel %vm127, %v2000, %v2012
  %v2019 = vsel %vm127, %v1978, %v1990
  %v2020 = vsel %vm127, %v1980, %v1992
  %v2021 = vsel %vm127, %v1982, %v1994
  %v2022 = vsel %vm127, %v1984, %v1996
  %v2023 = vsel %vm127, %v1986, %v1998
  %v2024 = vsel %vm127, %v1988, %v2000
  %v2025 = vsel %vm127, %v1966, %v1978
  %v2026 = vsel %vm127, %v1968, %v1980
  %v2027 = vsel %vm127, %v1970, %v1982
  %v2028 = vsel %vm127, %v1972, %v1984
  %v2029 = vsel %vm127, %v1974, %v1986
  %v2030 = vsel %vm127, %v1976, %v1988
  %v2031 = vsel %vm127, %v2002, %v1966
  %v2032 = vsel %vm127, %v2004, %v1968
  %v2033 = vsel %vm127, %v2006, %v1970
  %v2034 = vsel %vm127, %v2008, %v1972
  %v2035 = vsel %vm127, %v2010, %v1974
  %v2036 = vsel %vm127, %v2012, %v1976
  %v2037 = vmul.f32 %v2031, %v142
  %v2038 = vmul.f32 %v2025, %v146
  %v2039 = vmul.f32 %v2019, %v150
  %v2040 = vmul.f32 %v2013, %v154
  %v2041 = vmul.f32 %v2032, %v142
  %v2042 = vmul.f32 %v2026, %v146
  %v2043 = vmul.f32 %v2020, %v150
  %v2044 = vmul.f32 %v2014, %v154
  %v2045 = vmul.f32 %v2033, %v142
  %v2046 = vmul.f32 %v2027, %v146
  %v2047 = vmul.f32 %v2021, %v150
  %v2048 = vmul.f32 %v2015, %v154
  %v2049 = vmul.f32 %v2034, %v142
  %v2050 = vmul.f32 %v2028, %v146
  %v2051 = vmul.f32 %v2022, %v150
  %v2052 = vmul.f32 %v2016, %v154
  %v2053 = vmul.f32 %v2035, %v142
  %v2054 = vmul.f32 %v2029, %v146
  %v2055 = vmul.f32 %v2023, %v150
  %v2056 = vmul.f32 %v2017, %v154
  %v2057 = vmul.f32 %v2036, %v142
  %v2058 = vmul.f32 %v2030, %v146
  %v2059 = vmul.f32 %v2024, %v150
  %v2060 = vmul.f32 %v2018, %v154
  %2061 = vset.pattern.permute.xlu0 1
  %2062 = vperm.xlu0 %2061, %v1809
  %v2063 = vpop.permute.xlu0 %2062
  %2065 = vset.pattern.permute.xlu0 1
  %2066 = vperm.xlu0 %2065, %v1810
  %v2067 = vpop.permute.xlu0 %2066
  %2069 = vset.pattern.permute.xlu0 1
  %2070 = vperm.xlu0 %2069, %v1811
  %v2071 = vpop.permute.xlu0 %2070
  %2073 = vset.pattern.permute.xlu0 1
  %2074 = vperm.xlu0 %2073, %v1812
  %v2075 = vpop.permute.xlu0 %2074
  %2077 = vset.pattern.permute.xlu0 1
  %2078 = vperm.xlu0 %2077, %v1813
  %v2079 = vpop.permute.xlu0 %2078
  %2081 = vset.pattern.permute.xlu0 1
  %2082 = vperm.xlu0 %2081, %v1814
  %v2083 = vpop.permute.xlu0 %2082
  %v2085 = vmul.f32 %v2037, %v2063
  %v2086 = vmul.f32 %v2038, %v2063
  %v2087 = vmul.f32 %v2039, %v2063
  %v2088 = vmul.f32 %v2040, %v2063
  %v2089 = vmul.f32 %v2041, %v2067
  %v2090 = vmul.f32 %v2042, %v2067
  %v2091 = vmul.f32 %v2043, %v2067
  %v2092 = vmul.f32 %v2044, %v2067
  %v2093 = vmul.f32 %v2045, %v2071
  %v2094 = vmul.f32 %v2046, %v2071
  %v2095 = vmul.f32 %v2047, %v2071
  %v2096 = vmul.f32 %v2048, %v2071
  %v2097 = vmul.f32 %v2049, %v2075
  %v2098 = vmul.f32 %v2050, %v2075
  %v2099 = vmul.f32 %v2051, %v2075
  %v2100 = vmul.f32 %v2052, %v2075
  %v2101 = vmul.f32 %v2053, %v2079
  %v2102 = vmul.f32 %v2054, %v2079
  %v2103 = vmul.f32 %v2055, %v2079
  %v2104 = vmul.f32 %v2056, %v2079
  %v2105 = vmul.f32 %v2057, %v2083
  %v2106 = vmul.f32 %v2058, %v2083
  %v2107 = vmul.f32 %v2059, %v2083
  %v2108 = vmul.f32 %v2060, %v2083
  %v2109 = vadd.f32 %v1941, %v2085
  %v2110 = vadd.f32 %v1942, %v2086
  %v2111 = vadd.f32 %v1943, %v2087
  %v2112 = vadd.f32 %v1944, %v2088
  %v2113 = vadd.f32 %v1945, %v2089
  %v2114 = vadd.f32 %v1946, %v2090
  %v2115 = vadd.f32 %v1947, %v2091
  %v2116 = vadd.f32 %v1948, %v2092
  %v2117 = vadd.f32 %v1949, %v2093
  %v2118 = vadd.f32 %v1950, %v2094
  %v2119 = vadd.f32 %v1951, %v2095
  %v2120 = vadd.f32 %v1952, %v2096
  %v2121 = vadd.f32 %v1953, %v2097
  %v2122 = vadd.f32 %v1954, %v2098
  %v2123 = vadd.f32 %v1955, %v2099
  %v2124 = vadd.f32 %v1956, %v2100
  %v2125 = vadd.f32 %v1957, %v2101
  %v2126 = vadd.f32 %v1958, %v2102
  %v2127 = vadd.f32 %v1959, %v2103
  %v2128 = vadd.f32 %v1960, %v2104
  %v2129 = vadd.f32 %v1961, %v2105
  %v2130 = vadd.f32 %v1962, %v2106
  %v2131 = vadd.f32 %v1963, %v2107
  %v2132 = vadd.f32 %v1964, %v2108
  %2133 = vrot.lane.b32.xlu0 %v1652, 15
  %v2134 = vpop.permute.xlu0 %2133
  %2135 = vrot.lane.b32.xlu0 %v1656, 15
  %v2136 = vpop.permute.xlu0 %2135
  %2137 = vrot.lane.b32.xlu0 %v1662, 15
  %v2138 = vpop.permute.xlu0 %2137
  %2139 = vrot.lane.b32.xlu0 %v1666, 15
  %v2140 = vpop.permute.xlu0 %2139
  %2141 = vrot.lane.b32.xlu0 %v1672, 15
  %v2142 = vpop.permute.xlu0 %2141
  %2143 = vrot.lane.b32.xlu0 %v1676, 15
  %v2144 = vpop.permute.xlu0 %2143
  %2145 = vrot.lane.b32.xlu0 %v1654, 15
  %v2146 = vpop.permute.xlu0 %2145
  %2147 = vrot.lane.b32.xlu0 %v1658, 15
  %v2148 = vpop.permute.xlu0 %2147
  %2149 = vrot.lane.b32.xlu0 %v1664, 15
  %v2150 = vpop.permute.xlu0 %2149
  %2151 = vrot.lane.b32.xlu0 %v1668, 15
  %v2152 = vpop.permute.xlu0 %2151
  %2153 = vrot.lane.b32.xlu0 %v1674, 15
  %v2154 = vpop.permute.xlu0 %2153
  %2155 = vrot.lane.b32.xlu0 %v1678, 15
  %v2156 = vpop.permute.xlu0 %2155
  %2157 = vrot.lane.b32.xlu0 %v1725, 15
  %v2158 = vpop.permute.xlu0 %2157
  %2159 = vrot.lane.b32.xlu0 %v1729, 15
  %v2160 = vpop.permute.xlu0 %2159
  %2161 = vrot.lane.b32.xlu0 %v1735, 15
  %v2162 = vpop.permute.xlu0 %2161
  %2163 = vrot.lane.b32.xlu0 %v1739, 15
  %v2164 = vpop.permute.xlu0 %2163
  %2165 = vrot.lane.b32.xlu0 %v1745, 15
  %v2166 = vpop.permute.xlu0 %2165
  %2167 = vrot.lane.b32.xlu0 %v1749, 15
  %v2168 = vpop.permute.xlu0 %2167
  %2169 = vrot.lane.b32.xlu0 %v1727, 15
  %v2170 = vpop.permute.xlu0 %2169
  %2171 = vrot.lane.b32.xlu0 %v1731, 15
  %v2172 = vpop.permute.xlu0 %2171
  %2173 = vrot.lane.b32.xlu0 %v1737, 15
  %v2174 = vpop.permute.xlu0 %2173
  %2175 = vrot.lane.b32.xlu0 %v1741, 15
  %v2176 = vpop.permute.xlu0 %2175
  %2177 = vrot.lane.b32.xlu0 %v1747, 15
  %v2178 = vpop.permute.xlu0 %2177
  %2179 = vrot.lane.b32.xlu0 %v1751, 15
  %v2180 = vpop.permute.xlu0 %2179
  %v2181 = vsel %vm207, %v2158, %v2170
  %v2182 = vsel %vm207, %v2160, %v2172
  %v2183 = vsel %vm207, %v2162, %v2174
  %v2184 = vsel %vm207, %v2164, %v2176
  %v2185 = vsel %vm207, %v2166, %v2178
  %v2186 = vsel %vm207, %v2168, %v2180
  %v2187 = vsel %vm207, %v2146, %v2158
  %v2188 = vsel %vm207, %v2148, %v2160
  %v2189 = vsel %vm207, %v2150, %v2162
  %v2190 = vsel %vm207, %v2152, %v2164
  %v2191 = vsel %vm207, %v2154, %v2166
  %v2192 = vsel %vm207, %v2156, %v2168
  %v2193 = vsel %vm207, %v2134, %v2146
  %v2194 = vsel %vm207, %v2136, %v2148
  %v2195 = vsel %vm207, %v2138, %v2150
  %v2196 = vsel %vm207, %v2140, %v2152
  %v2197 = vsel %vm207, %v2142, %v2154
  %v2198 = vsel %vm207, %v2144, %v2156
  %v2199 = vsel %vm207, %v2170, %v2134
  %v2200 = vsel %vm207, %v2172, %v2136
  %v2201 = vsel %vm207, %v2174, %v2138
  %v2202 = vsel %vm207, %v2176, %v2140
  %v2203 = vsel %vm207, %v2178, %v2142
  %v2204 = vsel %vm207, %v2180, %v2144
  %v2205 = vmul.f32 %v2199, %v222
  %v2206 = vmul.f32 %v2193, %v226
  %v2207 = vmul.f32 %v2187, %v230
  %v2208 = vmul.f32 %v2181, %v234
  %v2209 = vmul.f32 %v2200, %v222
  %v2210 = vmul.f32 %v2194, %v226
  %v2211 = vmul.f32 %v2188, %v230
  %v2212 = vmul.f32 %v2182, %v234
  %v2213 = vmul.f32 %v2201, %v222
  %v2214 = vmul.f32 %v2195, %v226
  %v2215 = vmul.f32 %v2189, %v230
  %v2216 = vmul.f32 %v2183, %v234
  %v2217 = vmul.f32 %v2202, %v222
  %v2218 = vmul.f32 %v2196, %v226
  %v2219 = vmul.f32 %v2190, %v230
  %v2220 = vmul.f32 %v2184, %v234
  %v2221 = vmul.f32 %v2203, %v222
  %v2222 = vmul.f32 %v2197, %v226
  %v2223 = vmul.f32 %v2191, %v230
  %v2224 = vmul.f32 %v2185, %v234
  %v2225 = vmul.f32 %v2204, %v222
  %v2226 = vmul.f32 %v2198, %v226
  %v2227 = vmul.f32 %v2192, %v230
  %v2228 = vmul.f32 %v2186, %v234
  %2229 = vset.pattern.permute.xlu0 2
  %2230 = vperm.xlu0 %2229, %v1809
  %v2231 = vpop.permute.xlu0 %2230
  %2233 = vset.pattern.permute.xlu0 2
  %2234 = vperm.xlu0 %2233, %v1810
  %v2235 = vpop.permute.xlu0 %2234
  %2237 = vset.pattern.permute.xlu0 2
  %2238 = vperm.xlu0 %2237, %v1811
  %v2239 = vpop.permute.xlu0 %2238
  %2241 = vset.pattern.permute.xlu0 2
  %2242 = vperm.xlu0 %2241, %v1812
  %v2243 = vpop.permute.xlu0 %2242
  %2245 = vset.pattern.permute.xlu0 2
  %2246 = vperm.xlu0 %2245, %v1813
  %v2247 = vpop.permute.xlu0 %2246
  %2249 = vset.pattern.permute.xlu0 2
  %2250 = vperm.xlu0 %2249, %v1814
  %v2251 = vpop.permute.xlu0 %2250
  %v2253 = vmul.f32 %v2205, %v2231
  %v2254 = vmul.f32 %v2206, %v2231
  %v2255 = vmul.f32 %v2207, %v2231
  %v2256 = vmul.f32 %v2208, %v2231
  %v2257 = vmul.f32 %v2209, %v2235
  %v2258 = vmul.f32 %v2210, %v2235
  %v2259 = vmul.f32 %v2211, %v2235
  %v2260 = vmul.f32 %v2212, %v2235
  %v2261 = vmul.f32 %v2213, %v2239
  %v2262 = vmul.f32 %v2214, %v2239
  %v2263 = vmul.f32 %v2215, %v2239
  %v2264 = vmul.f32 %v2216, %v2239
  %v2265 = vmul.f32 %v2217, %v2243
  %v2266 = vmul.f32 %v2218, %v2243
  %v2267 = vmul.f32 %v2219, %v2243
  %v2268 = vmul.f32 %v2220, %v2243
  %v2269 = vmul.f32 %v2221, %v2247
  %v2270 = vmul.f32 %v2222, %v2247
  %v2271 = vmul.f32 %v2223, %v2247
  %v2272 = vmul.f32 %v2224, %v2247
  %v2273 = vmul.f32 %v2225, %v2251
  %v2274 = vmul.f32 %v2226, %v2251
  %v2275 = vmul.f32 %v2227, %v2251
  %v2276 = vmul.f32 %v2228, %v2251
  %v2277 = vadd.f32 %v2109, %v2253
  %v2278 = vadd.f32 %v2110, %v2254
  %v2279 = vadd.f32 %v2111, %v2255
  %v2280 = vadd.f32 %v2112, %v2256
  %v2281 = vadd.f32 %v2113, %v2257
  %v2282 = vadd.f32 %v2114, %v2258
  %v2283 = vadd.f32 %v2115, %v2259
  %v2284 = vadd.f32 %v2116, %v2260
  %v2285 = vadd.f32 %v2117, %v2261
  %v2286 = vadd.f32 %v2118, %v2262
  %v2287 = vadd.f32 %v2119, %v2263
  %v2288 = vadd.f32 %v2120, %v2264
  %v2289 = vadd.f32 %v2121, %v2265
  %v2290 = vadd.f32 %v2122, %v2266
  %v2291 = vadd.f32 %v2123, %v2267
  %v2292 = vadd.f32 %v2124, %v2268
  %v2293 = vadd.f32 %v2125, %v2269
  %v2294 = vadd.f32 %v2126, %v2270
  %v2295 = vadd.f32 %v2127, %v2271
  %v2296 = vadd.f32 %v2128, %v2272
  %v2297 = vadd.f32 %v2129, %v2273
  %v2298 = vadd.f32 %v2130, %v2274
  %v2299 = vadd.f32 %v2131, %v2275
  %v2300 = vadd.f32 %v2132, %v2276
  %2301 = vrot.lane.b32.xlu0 %v1652, 1
  %v2302 = vpop.permute.xlu0 %2301
  %2303 = vrot.lane.b32.xlu0 %v1656, 1
  %v2304 = vpop.permute.xlu0 %2303
  %2305 = vrot.lane.b32.xlu0 %v1662, 1
  %v2306 = vpop.permute.xlu0 %2305
  %2307 = vrot.lane.b32.xlu0 %v1666, 1
  %v2308 = vpop.permute.xlu0 %2307
  %2309 = vrot.lane.b32.xlu0 %v1672, 1
  %v2310 = vpop.permute.xlu0 %2309
  %2311 = vrot.lane.b32.xlu0 %v1676, 1
  %v2312 = vpop.permute.xlu0 %2311
  %2313 = vrot.lane.b32.xlu0 %v1654, 1
  %v2314 = vpop.permute.xlu0 %2313
  %2315 = vrot.lane.b32.xlu0 %v1658, 1
  %v2316 = vpop.permute.xlu0 %2315
  %2317 = vrot.lane.b32.xlu0 %v1664, 1
  %v2318 = vpop.permute.xlu0 %2317
  %2319 = vrot.lane.b32.xlu0 %v1668, 1
  %v2320 = vpop.permute.xlu0 %2319
  %2321 = vrot.lane.b32.xlu0 %v1674, 1
  %v2322 = vpop.permute.xlu0 %2321
  %2323 = vrot.lane.b32.xlu0 %v1678, 1
  %v2324 = vpop.permute.xlu0 %2323
  %2325 = vrot.lane.b32.xlu0 %v1725, 1
  %v2326 = vpop.permute.xlu0 %2325
  %2327 = vrot.lane.b32.xlu0 %v1729, 1
  %v2328 = vpop.permute.xlu0 %2327
  %2329 = vrot.lane.b32.xlu0 %v1735, 1
  %v2330 = vpop.permute.xlu0 %2329
  %2331 = vrot.lane.b32.xlu0 %v1739, 1
  %v2332 = vpop.permute.xlu0 %2331
  %2333 = vrot.lane.b32.xlu0 %v1745, 1
  %v2334 = vpop.permute.xlu0 %2333
  %2335 = vrot.lane.b32.xlu0 %v1749, 1
  %v2336 = vpop.permute.xlu0 %2335
  %2337 = vrot.lane.b32.xlu0 %v1727, 1
  %v2338 = vpop.permute.xlu0 %2337
  %2339 = vrot.lane.b32.xlu0 %v1731, 1
  %v2340 = vpop.permute.xlu0 %2339
  %2341 = vrot.lane.b32.xlu0 %v1737, 1
  %v2342 = vpop.permute.xlu0 %2341
  %2343 = vrot.lane.b32.xlu0 %v1741, 1
  %v2344 = vpop.permute.xlu0 %2343
  %2345 = vrot.lane.b32.xlu0 %v1747, 1
  %v2346 = vpop.permute.xlu0 %2345
  %2347 = vrot.lane.b32.xlu0 %v1751, 1
  %v2348 = vpop.permute.xlu0 %2347
  %v2349 = vsel %vm287, %v2326, %v2338
  %v2350 = vsel %vm287, %v2328, %v2340
  %v2351 = vsel %vm287, %v2330, %v2342
  %v2352 = vsel %vm287, %v2332, %v2344
  %v2353 = vsel %vm287, %v2334, %v2346
  %v2354 = vsel %vm287, %v2336, %v2348
  %v2355 = vsel %vm287, %v2314, %v2326
  %v2356 = vsel %vm287, %v2316, %v2328
  %v2357 = vsel %vm287, %v2318, %v2330
  %v2358 = vsel %vm287, %v2320, %v2332
  %v2359 = vsel %vm287, %v2322, %v2334
  %v2360 = vsel %vm287, %v2324, %v2336
  %v2361 = vsel %vm287, %v2302, %v2314
  %v2362 = vsel %vm287, %v2304, %v2316
  %v2363 = vsel %vm287, %v2306, %v2318
  %v2364 = vsel %vm287, %v2308, %v2320
  %v2365 = vsel %vm287, %v2310, %v2322
  %v2366 = vsel %vm287, %v2312, %v2324
  %v2367 = vsel %vm287, %v2338, %v2302
  %v2368 = vsel %vm287, %v2340, %v2304
  %v2369 = vsel %vm287, %v2342, %v2306
  %v2370 = vsel %vm287, %v2344, %v2308
  %v2371 = vsel %vm287, %v2346, %v2310
  %v2372 = vsel %vm287, %v2348, %v2312
  %v2373 = vmul.f32 %v2367, %v302
  %v2374 = vmul.f32 %v2361, %v306
  %v2375 = vmul.f32 %v2355, %v310
  %v2376 = vmul.f32 %v2349, %v314
  %v2377 = vmul.f32 %v2368, %v302
  %v2378 = vmul.f32 %v2362, %v306
  %v2379 = vmul.f32 %v2356, %v310
  %v2380 = vmul.f32 %v2350, %v314
  %v2381 = vmul.f32 %v2369, %v302
  %v2382 = vmul.f32 %v2363, %v306
  %v2383 = vmul.f32 %v2357, %v310
  %v2384 = vmul.f32 %v2351, %v314
  %v2385 = vmul.f32 %v2370, %v302
  %v2386 = vmul.f32 %v2364, %v306
  %v2387 = vmul.f32 %v2358, %v310
  %v2388 = vmul.f32 %v2352, %v314
  %v2389 = vmul.f32 %v2371, %v302
  %v2390 = vmul.f32 %v2365, %v306
  %v2391 = vmul.f32 %v2359, %v310
  %v2392 = vmul.f32 %v2353, %v314
  %v2393 = vmul.f32 %v2372, %v302
  %v2394 = vmul.f32 %v2366, %v306
  %v2395 = vmul.f32 %v2360, %v310
  %v2396 = vmul.f32 %v2354, %v314
  %2397 = vset.pattern.permute.xlu0 3
  %2398 = vperm.xlu0 %2397, %v1809
  %v2399 = vpop.permute.xlu0 %2398
  %2401 = vset.pattern.permute.xlu0 3
  %2402 = vperm.xlu0 %2401, %v1810
  %v2403 = vpop.permute.xlu0 %2402
  %2405 = vset.pattern.permute.xlu0 3
  %2406 = vperm.xlu0 %2405, %v1811
  %v2407 = vpop.permute.xlu0 %2406
  %2409 = vset.pattern.permute.xlu0 3
  %2410 = vperm.xlu0 %2409, %v1812
  %v2411 = vpop.permute.xlu0 %2410
  %2413 = vset.pattern.permute.xlu0 3
  %2414 = vperm.xlu0 %2413, %v1813
  %v2415 = vpop.permute.xlu0 %2414
  %2417 = vset.pattern.permute.xlu0 3
  %2418 = vperm.xlu0 %2417, %v1814
  %v2419 = vpop.permute.xlu0 %2418
  %v2421 = vmul.f32 %v2373, %v2399
  %v2422 = vmul.f32 %v2374, %v2399
  %v2423 = vmul.f32 %v2375, %v2399
  %v2424 = vmul.f32 %v2376, %v2399
  %v2425 = vmul.f32 %v2377, %v2403
  %v2426 = vmul.f32 %v2378, %v2403
  %v2427 = vmul.f32 %v2379, %v2403
  %v2428 = vmul.f32 %v2380, %v2403
  %v2429 = vmul.f32 %v2381, %v2407
  %v2430 = vmul.f32 %v2382, %v2407
  %v2431 = vmul.f32 %v2383, %v2407
  %v2432 = vmul.f32 %v2384, %v2407
  %v2433 = vmul.f32 %v2385, %v2411
  %v2434 = vmul.f32 %v2386, %v2411
  %v2435 = vmul.f32 %v2387, %v2411
  %v2436 = vmul.f32 %v2388, %v2411
  %v2437 = vmul.f32 %v2389, %v2415
  %v2438 = vmul.f32 %v2390, %v2415
  %v2439 = vmul.f32 %v2391, %v2415
  %v2440 = vmul.f32 %v2392, %v2415
  %v2441 = vmul.f32 %v2393, %v2419
  %v2442 = vmul.f32 %v2394, %v2419
  %v2443 = vmul.f32 %v2395, %v2419
  %v2444 = vmul.f32 %v2396, %v2419
  %v2445 = vadd.f32 %v2277, %v2421
  %v2446 = vadd.f32 %v2278, %v2422
  %v2447 = vadd.f32 %v2279, %v2423
  %v2448 = vadd.f32 %v2280, %v2424
  %v2449 = vadd.f32 %v2281, %v2425
  %v2450 = vadd.f32 %v2282, %v2426
  %v2451 = vadd.f32 %v2283, %v2427
  %v2452 = vadd.f32 %v2284, %v2428
  %v2453 = vadd.f32 %v2285, %v2429
  %v2454 = vadd.f32 %v2286, %v2430
  %v2455 = vadd.f32 %v2287, %v2431
  %v2456 = vadd.f32 %v2288, %v2432
  %v2457 = vadd.f32 %v2289, %v2433
  %v2458 = vadd.f32 %v2290, %v2434
  %v2459 = vadd.f32 %v2291, %v2435
  %v2460 = vadd.f32 %v2292, %v2436
  %v2461 = vadd.f32 %v2293, %v2437
  %v2462 = vadd.f32 %v2294, %v2438
  %v2463 = vadd.f32 %v2295, %v2439
  %v2464 = vadd.f32 %v2296, %v2440
  %v2465 = vadd.f32 %v2297, %v2441
  %v2466 = vadd.f32 %v2298, %v2442
  %v2467 = vadd.f32 %v2299, %v2443
  %v2468 = vadd.f32 %v2300, %v2444
  %2469 = vset.pattern.permute.xlu0 4
  %2470 = vperm.xlu0 %2469, %v1809
  %v2471 = vpop.permute.xlu0 %2470
  %2473 = vset.pattern.permute.xlu0 4
  %2474 = vperm.xlu0 %2473, %v1810
  %v2475 = vpop.permute.xlu0 %2474
  %2477 = vset.pattern.permute.xlu0 4
  %2478 = vperm.xlu0 %2477, %v1811
  %v2479 = vpop.permute.xlu0 %2478
  %2481 = vset.pattern.permute.xlu0 4
  %2482 = vperm.xlu0 %2481, %v1812
  %v2483 = vpop.permute.xlu0 %2482
  %2485 = vset.pattern.permute.xlu0 4
  %2486 = vperm.xlu0 %2485, %v1813
  %v2487 = vpop.permute.xlu0 %2486
  %2489 = vset.pattern.permute.xlu0 4
  %2490 = vperm.xlu0 %2489, %v1814
  %v2491 = vpop.permute.xlu0 %2490
  %v2493 = vmul.f32 %v1652, %v2471
  %v2494 = vmul.f32 %v1654, %v2471
  %v2495 = vmul.f32 %v1725, %v2471
  %v2496 = vmul.f32 %v1727, %v2471
  %v2497 = vmul.f32 %v1656, %v2475
  %v2498 = vmul.f32 %v1658, %v2475
  %v2499 = vmul.f32 %v1729, %v2475
  %v2500 = vmul.f32 %v1731, %v2475
  %v2501 = vmul.f32 %v1662, %v2479
  %v2502 = vmul.f32 %v1664, %v2479
  %v2503 = vmul.f32 %v1735, %v2479
  %v2504 = vmul.f32 %v1737, %v2479
  %v2505 = vmul.f32 %v1666, %v2483
  %v2506 = vmul.f32 %v1668, %v2483
  %v2507 = vmul.f32 %v1739, %v2483
  %v2508 = vmul.f32 %v1741, %v2483
  %v2509 = vmul.f32 %v1672, %v2487
  %v2510 = vmul.f32 %v1674, %v2487
  %v2511 = vmul.f32 %v1745, %v2487
  %v2512 = vmul.f32 %v1747, %v2487
  %v2513 = vmul.f32 %v1676, %v2491
  %v2514 = vmul.f32 %v1678, %v2491
  %v2515 = vmul.f32 %v1749, %v2491
  %v2516 = vmul.f32 %v1751, %v2491
  %v2517 = vadd.f32 %v2445, %v2493
  %v2518 = vadd.f32 %v2446, %v2494
  %v2519 = vadd.f32 %v2447, %v2495
  %v2520 = vadd.f32 %v2448, %v2496
  %v2521 = vadd.f32 %v2449, %v2497
  %v2522 = vadd.f32 %v2450, %v2498
  %v2523 = vadd.f32 %v2451, %v2499
  %v2524 = vadd.f32 %v2452, %v2500
  %v2525 = vadd.f32 %v2453, %v2501
  %v2526 = vadd.f32 %v2454, %v2502
  %v2527 = vadd.f32 %v2455, %v2503
  %v2528 = vadd.f32 %v2456, %v2504
  %v2529 = vadd.f32 %v2457, %v2505
  %v2530 = vadd.f32 %v2458, %v2506
  %v2531 = vadd.f32 %v2459, %v2507
  %v2532 = vadd.f32 %v2460, %v2508
  %v2533 = vadd.f32 %v2461, %v2509
  %v2534 = vadd.f32 %v2462, %v2510
  %v2535 = vadd.f32 %v2463, %v2511
  %v2536 = vadd.f32 %v2464, %v2512
  %v2537 = vadd.f32 %v2465, %v2513
  %v2538 = vadd.f32 %v2466, %v2514
  %v2539 = vadd.f32 %v2467, %v2515
  %v2540 = vadd.f32 %v2468, %v2516
  %2541 = vrot.lane.b32.xlu0 %v1652, 127
  %v2542 = vpop.permute.xlu0 %2541
  %2543 = vrot.lane.b32.xlu0 %v1656, 127
  %v2544 = vpop.permute.xlu0 %2543
  %2545 = vrot.lane.b32.xlu0 %v1662, 127
  %v2546 = vpop.permute.xlu0 %2545
  %2547 = vrot.lane.b32.xlu0 %v1666, 127
  %v2548 = vpop.permute.xlu0 %2547
  %2549 = vrot.lane.b32.xlu0 %v1672, 127
  %v2550 = vpop.permute.xlu0 %2549
  %2551 = vrot.lane.b32.xlu0 %v1676, 127
  %v2552 = vpop.permute.xlu0 %2551
  %2553 = vrot.lane.b32.xlu0 %v1654, 127
  %v2554 = vpop.permute.xlu0 %2553
  %2555 = vrot.lane.b32.xlu0 %v1658, 127
  %v2556 = vpop.permute.xlu0 %2555
  %2557 = vrot.lane.b32.xlu0 %v1664, 127
  %v2558 = vpop.permute.xlu0 %2557
  %2559 = vrot.lane.b32.xlu0 %v1668, 127
  %v2560 = vpop.permute.xlu0 %2559
  %2561 = vrot.lane.b32.xlu0 %v1674, 127
  %v2562 = vpop.permute.xlu0 %2561
  %2563 = vrot.lane.b32.xlu0 %v1678, 127
  %v2564 = vpop.permute.xlu0 %2563
  %2565 = vrot.lane.b32.xlu0 %v1725, 127
  %v2566 = vpop.permute.xlu0 %2565
  %2567 = vrot.lane.b32.xlu0 %v1729, 127
  %v2568 = vpop.permute.xlu0 %2567
  %2569 = vrot.lane.b32.xlu0 %v1735, 127
  %v2570 = vpop.permute.xlu0 %2569
  %2571 = vrot.lane.b32.xlu0 %v1739, 127
  %v2572 = vpop.permute.xlu0 %2571
  %2573 = vrot.lane.b32.xlu0 %v1745, 127
  %v2574 = vpop.permute.xlu0 %2573
  %2575 = vrot.lane.b32.xlu0 %v1749, 127
  %v2576 = vpop.permute.xlu0 %2575
  %2577 = vrot.lane.b32.xlu0 %v1727, 127
  %v2578 = vpop.permute.xlu0 %2577
  %2579 = vrot.lane.b32.xlu0 %v1731, 127
  %v2580 = vpop.permute.xlu0 %2579
  %2581 = vrot.lane.b32.xlu0 %v1737, 127
  %v2582 = vpop.permute.xlu0 %2581
  %2583 = vrot.lane.b32.xlu0 %v1741, 127
  %v2584 = vpop.permute.xlu0 %2583
  %2585 = vrot.lane.b32.xlu0 %v1747, 127
  %v2586 = vpop.permute.xlu0 %2585
  %2587 = vrot.lane.b32.xlu0 %v1751, 127
  %v2588 = vpop.permute.xlu0 %2587
  %v2589 = vsel %vm391, %v2566, %v2578
  %v2590 = vsel %vm391, %v2568, %v2580
  %v2591 = vsel %vm391, %v2570, %v2582
  %v2592 = vsel %vm391, %v2572, %v2584
  %v2593 = vsel %vm391, %v2574, %v2586
  %v2594 = vsel %vm391, %v2576, %v2588
  %v2595 = vsel %vm391, %v2554, %v2566
  %v2596 = vsel %vm391, %v2556, %v2568
  %v2597 = vsel %vm391, %v2558, %v2570
  %v2598 = vsel %vm391, %v2560, %v2572
  %v2599 = vsel %vm391, %v2562, %v2574
  %v2600 = vsel %vm391, %v2564, %v2576
  %v2601 = vsel %vm391, %v2542, %v2554
  %v2602 = vsel %vm391, %v2544, %v2556
  %v2603 = vsel %vm391, %v2546, %v2558
  %v2604 = vsel %vm391, %v2548, %v2560
  %v2605 = vsel %vm391, %v2550, %v2562
  %v2606 = vsel %vm391, %v2552, %v2564
  %v2607 = vsel %vm391, %v2578, %v2542
  %v2608 = vsel %vm391, %v2580, %v2544
  %v2609 = vsel %vm391, %v2582, %v2546
  %v2610 = vsel %vm391, %v2584, %v2548
  %v2611 = vsel %vm391, %v2586, %v2550
  %v2612 = vsel %vm391, %v2588, %v2552
  %v2613 = vmul.f32 %v2601, %v406
  %v2614 = vmul.f32 %v2595, %v410
  %v2615 = vmul.f32 %v2589, %v414
  %v2616 = vmul.f32 %v2607, %v418
  %v2617 = vmul.f32 %v2602, %v406
  %v2618 = vmul.f32 %v2596, %v410
  %v2619 = vmul.f32 %v2590, %v414
  %v2620 = vmul.f32 %v2608, %v418
  %v2621 = vmul.f32 %v2603, %v406
  %v2622 = vmul.f32 %v2597, %v410
  %v2623 = vmul.f32 %v2591, %v414
  %v2624 = vmul.f32 %v2609, %v418
  %v2625 = vmul.f32 %v2604, %v406
  %v2626 = vmul.f32 %v2598, %v410
  %v2627 = vmul.f32 %v2592, %v414
  %v2628 = vmul.f32 %v2610, %v418
  %v2629 = vmul.f32 %v2605, %v406
  %v2630 = vmul.f32 %v2599, %v410
  %v2631 = vmul.f32 %v2593, %v414
  %v2632 = vmul.f32 %v2611, %v418
  %v2633 = vmul.f32 %v2606, %v406
  %v2634 = vmul.f32 %v2600, %v410
  %v2635 = vmul.f32 %v2594, %v414
  %v2636 = vmul.f32 %v2612, %v418
  %2637 = vset.pattern.permute.xlu0 5
  %2638 = vperm.xlu0 %2637, %v1809
  %v2639 = vpop.permute.xlu0 %2638
  %2641 = vset.pattern.permute.xlu0 5
  %2642 = vperm.xlu0 %2641, %v1810
  %v2643 = vpop.permute.xlu0 %2642
  %2645 = vset.pattern.permute.xlu0 5
  %2646 = vperm.xlu0 %2645, %v1811
  %v2647 = vpop.permute.xlu0 %2646
  %2649 = vset.pattern.permute.xlu0 5
  %2650 = vperm.xlu0 %2649, %v1812
  %v2651 = vpop.permute.xlu0 %2650
  %2653 = vset.pattern.permute.xlu0 5
  %2654 = vperm.xlu0 %2653, %v1813
  %v2655 = vpop.permute.xlu0 %2654
  %2657 = vset.pattern.permute.xlu0 5
  %2658 = vperm.xlu0 %2657, %v1814
  %v2659 = vpop.permute.xlu0 %2658
  %v2661 = vmul.f32 %v2613, %v2639
  %v2662 = vmul.f32 %v2614, %v2639
  %v2663 = vmul.f32 %v2615, %v2639
  %v2664 = vmul.f32 %v2616, %v2639
  %v2665 = vmul.f32 %v2617, %v2643
  %v2666 = vmul.f32 %v2618, %v2643
  %v2667 = vmul.f32 %v2619, %v2643
  %v2668 = vmul.f32 %v2620, %v2643
  %v2669 = vmul.f32 %v2621, %v2647
  %v2670 = vmul.f32 %v2622, %v2647
  %v2671 = vmul.f32 %v2623, %v2647
  %v2672 = vmul.f32 %v2624, %v2647
  %v2673 = vmul.f32 %v2625, %v2651
  %v2674 = vmul.f32 %v2626, %v2651
  %v2675 = vmul.f32 %v2627, %v2651
  %v2676 = vmul.f32 %v2628, %v2651
  %v2677 = vmul.f32 %v2629, %v2655
  %v2678 = vmul.f32 %v2630, %v2655
  %v2679 = vmul.f32 %v2631, %v2655
  %v2680 = vmul.f32 %v2632, %v2655
  %v2681 = vmul.f32 %v2633, %v2659
  %v2682 = vmul.f32 %v2634, %v2659
  %v2683 = vmul.f32 %v2635, %v2659
  %v2684 = vmul.f32 %v2636, %v2659
  %v2685 = vadd.f32 %v2517, %v2661
  %v2686 = vadd.f32 %v2518, %v2662
  %v2687 = vadd.f32 %v2519, %v2663
  %v2688 = vadd.f32 %v2520, %v2664
  %v2689 = vadd.f32 %v2521, %v2665
  %v2690 = vadd.f32 %v2522, %v2666
  %v2691 = vadd.f32 %v2523, %v2667
  %v2692 = vadd.f32 %v2524, %v2668
  %v2693 = vadd.f32 %v2525, %v2669
  %v2694 = vadd.f32 %v2526, %v2670
  %v2695 = vadd.f32 %v2527, %v2671
  %v2696 = vadd.f32 %v2528, %v2672
  %v2697 = vadd.f32 %v2529, %v2673
  %v2698 = vadd.f32 %v2530, %v2674
  %v2699 = vadd.f32 %v2531, %v2675
  %v2700 = vadd.f32 %v2532, %v2676
  %v2701 = vadd.f32 %v2533, %v2677
  %v2702 = vadd.f32 %v2534, %v2678
  %v2703 = vadd.f32 %v2535, %v2679
  %v2704 = vadd.f32 %v2536, %v2680
  %v2705 = vadd.f32 %v2537, %v2681
  %v2706 = vadd.f32 %v2538, %v2682
  %v2707 = vadd.f32 %v2539, %v2683
  %v2708 = vadd.f32 %v2540, %v2684
  %2709 = vrot.lane.b32.xlu0 %v1652, 113
  %v2710 = vpop.permute.xlu0 %2709
  %2711 = vrot.lane.b32.xlu0 %v1656, 113
  %v2712 = vpop.permute.xlu0 %2711
  %2713 = vrot.lane.b32.xlu0 %v1662, 113
  %v2714 = vpop.permute.xlu0 %2713
  %2715 = vrot.lane.b32.xlu0 %v1666, 113
  %v2716 = vpop.permute.xlu0 %2715
  %2717 = vrot.lane.b32.xlu0 %v1672, 113
  %v2718 = vpop.permute.xlu0 %2717
  %2719 = vrot.lane.b32.xlu0 %v1676, 113
  %v2720 = vpop.permute.xlu0 %2719
  %2721 = vrot.lane.b32.xlu0 %v1654, 113
  %v2722 = vpop.permute.xlu0 %2721
  %2723 = vrot.lane.b32.xlu0 %v1658, 113
  %v2724 = vpop.permute.xlu0 %2723
  %2725 = vrot.lane.b32.xlu0 %v1664, 113
  %v2726 = vpop.permute.xlu0 %2725
  %2727 = vrot.lane.b32.xlu0 %v1668, 113
  %v2728 = vpop.permute.xlu0 %2727
  %2729 = vrot.lane.b32.xlu0 %v1674, 113
  %v2730 = vpop.permute.xlu0 %2729
  %2731 = vrot.lane.b32.xlu0 %v1678, 113
  %v2732 = vpop.permute.xlu0 %2731
  %2733 = vrot.lane.b32.xlu0 %v1725, 113
  %v2734 = vpop.permute.xlu0 %2733
  %2735 = vrot.lane.b32.xlu0 %v1729, 113
  %v2736 = vpop.permute.xlu0 %2735
  %2737 = vrot.lane.b32.xlu0 %v1735, 113
  %v2738 = vpop.permute.xlu0 %2737
  %2739 = vrot.lane.b32.xlu0 %v1739, 113
  %v2740 = vpop.permute.xlu0 %2739
  %2741 = vrot.lane.b32.xlu0 %v1745, 113
  %v2742 = vpop.permute.xlu0 %2741
  %2743 = vrot.lane.b32.xlu0 %v1749, 113
  %v2744 = vpop.permute.xlu0 %2743
  %2745 = vrot.lane.b32.xlu0 %v1727, 113
  %v2746 = vpop.permute.xlu0 %2745
  %2747 = vrot.lane.b32.xlu0 %v1731, 113
  %v2748 = vpop.permute.xlu0 %2747
  %2749 = vrot.lane.b32.xlu0 %v1737, 113
  %v2750 = vpop.permute.xlu0 %2749
  %2751 = vrot.lane.b32.xlu0 %v1741, 113
  %v2752 = vpop.permute.xlu0 %2751
  %2753 = vrot.lane.b32.xlu0 %v1747, 113
  %v2754 = vpop.permute.xlu0 %2753
  %2755 = vrot.lane.b32.xlu0 %v1751, 113
  %v2756 = vpop.permute.xlu0 %2755
  %v2757 = vsel %vm471, %v2734, %v2746
  %v2758 = vsel %vm471, %v2736, %v2748
  %v2759 = vsel %vm471, %v2738, %v2750
  %v2760 = vsel %vm471, %v2740, %v2752
  %v2761 = vsel %vm471, %v2742, %v2754
  %v2762 = vsel %vm471, %v2744, %v2756
  %v2763 = vsel %vm471, %v2722, %v2734
  %v2764 = vsel %vm471, %v2724, %v2736
  %v2765 = vsel %vm471, %v2726, %v2738
  %v2766 = vsel %vm471, %v2728, %v2740
  %v2767 = vsel %vm471, %v2730, %v2742
  %v2768 = vsel %vm471, %v2732, %v2744
  %v2769 = vsel %vm471, %v2710, %v2722
  %v2770 = vsel %vm471, %v2712, %v2724
  %v2771 = vsel %vm471, %v2714, %v2726
  %v2772 = vsel %vm471, %v2716, %v2728
  %v2773 = vsel %vm471, %v2718, %v2730
  %v2774 = vsel %vm471, %v2720, %v2732
  %v2775 = vsel %vm471, %v2746, %v2710
  %v2776 = vsel %vm471, %v2748, %v2712
  %v2777 = vsel %vm471, %v2750, %v2714
  %v2778 = vsel %vm471, %v2752, %v2716
  %v2779 = vsel %vm471, %v2754, %v2718
  %v2780 = vsel %vm471, %v2756, %v2720
  %v2781 = vmul.f32 %v2769, %v486
  %v2782 = vmul.f32 %v2763, %v490
  %v2783 = vmul.f32 %v2757, %v494
  %v2784 = vmul.f32 %v2775, %v498
  %v2785 = vmul.f32 %v2770, %v486
  %v2786 = vmul.f32 %v2764, %v490
  %v2787 = vmul.f32 %v2758, %v494
  %v2788 = vmul.f32 %v2776, %v498
  %v2789 = vmul.f32 %v2771, %v486
  %v2790 = vmul.f32 %v2765, %v490
  %v2791 = vmul.f32 %v2759, %v494
  %v2792 = vmul.f32 %v2777, %v498
  %v2793 = vmul.f32 %v2772, %v486
  %v2794 = vmul.f32 %v2766, %v490
  %v2795 = vmul.f32 %v2760, %v494
  %v2796 = vmul.f32 %v2778, %v498
  %v2797 = vmul.f32 %v2773, %v486
  %v2798 = vmul.f32 %v2767, %v490
  %v2799 = vmul.f32 %v2761, %v494
  %v2800 = vmul.f32 %v2779, %v498
  %v2801 = vmul.f32 %v2774, %v486
  %v2802 = vmul.f32 %v2768, %v490
  %v2803 = vmul.f32 %v2762, %v494
  %v2804 = vmul.f32 %v2780, %v498
  %2805 = vset.pattern.permute.xlu0 6
  %2806 = vperm.xlu0 %2805, %v1809
  %v2807 = vpop.permute.xlu0 %2806
  %2809 = vset.pattern.permute.xlu0 6
  %2810 = vperm.xlu0 %2809, %v1810
  %v2811 = vpop.permute.xlu0 %2810
  %2813 = vset.pattern.permute.xlu0 6
  %2814 = vperm.xlu0 %2813, %v1811
  %v2815 = vpop.permute.xlu0 %2814
  %2817 = vset.pattern.permute.xlu0 6
  %2818 = vperm.xlu0 %2817, %v1812
  %v2819 = vpop.permute.xlu0 %2818
  %2821 = vset.pattern.permute.xlu0 6
  %2822 = vperm.xlu0 %2821, %v1813
  %v2823 = vpop.permute.xlu0 %2822
  %2825 = vset.pattern.permute.xlu0 6
  %2826 = vperm.xlu0 %2825, %v1814
  %v2827 = vpop.permute.xlu0 %2826
  %v2829 = vmul.f32 %v2781, %v2807
  %v2830 = vmul.f32 %v2782, %v2807
  %v2831 = vmul.f32 %v2783, %v2807
  %v2832 = vmul.f32 %v2784, %v2807
  %v2833 = vmul.f32 %v2785, %v2811
  %v2834 = vmul.f32 %v2786, %v2811
  %v2835 = vmul.f32 %v2787, %v2811
  %v2836 = vmul.f32 %v2788, %v2811
  %v2837 = vmul.f32 %v2789, %v2815
  %v2838 = vmul.f32 %v2790, %v2815
  %v2839 = vmul.f32 %v2791, %v2815
  %v2840 = vmul.f32 %v2792, %v2815
  %v2841 = vmul.f32 %v2793, %v2819
  %v2842 = vmul.f32 %v2794, %v2819
  %v2843 = vmul.f32 %v2795, %v2819
  %v2844 = vmul.f32 %v2796, %v2819
  %v2845 = vmul.f32 %v2797, %v2823
  %v2846 = vmul.f32 %v2798, %v2823
  %v2847 = vmul.f32 %v2799, %v2823
  %v2848 = vmul.f32 %v2800, %v2823
  %v2849 = vmul.f32 %v2801, %v2827
  %v2850 = vmul.f32 %v2802, %v2827
  %v2851 = vmul.f32 %v2803, %v2827
  %v2852 = vmul.f32 %v2804, %v2827
  %v2853 = vadd.f32 %v2685, %v2829
  %v2854 = vadd.f32 %v2686, %v2830
  %v2855 = vadd.f32 %v2687, %v2831
  %v2856 = vadd.f32 %v2688, %v2832
  %v2857 = vadd.f32 %v2689, %v2833
  %v2858 = vadd.f32 %v2690, %v2834
  %v2859 = vadd.f32 %v2691, %v2835
  %v2860 = vadd.f32 %v2692, %v2836
  %v2861 = vadd.f32 %v2693, %v2837
  %v2862 = vadd.f32 %v2694, %v2838
  %v2863 = vadd.f32 %v2695, %v2839
  %v2864 = vadd.f32 %v2696, %v2840
  %v2865 = vadd.f32 %v2697, %v2841
  %v2866 = vadd.f32 %v2698, %v2842
  %v2867 = vadd.f32 %v2699, %v2843
  %v2868 = vadd.f32 %v2700, %v2844
  %v2869 = vadd.f32 %v2701, %v2845
  %v2870 = vadd.f32 %v2702, %v2846
  %v2871 = vadd.f32 %v2703, %v2847
  %v2872 = vadd.f32 %v2704, %v2848
  %v2873 = vadd.f32 %v2705, %v2849
  %v2874 = vadd.f32 %v2706, %v2850
  %v2875 = vadd.f32 %v2707, %v2851
  %v2876 = vadd.f32 %v2708, %v2852
  %2877 = vrot.lane.b32.xlu0 %v1652, 112
  %v2878 = vpop.permute.xlu0 %2877
  %2879 = vrot.lane.b32.xlu0 %v1656, 112
  %v2880 = vpop.permute.xlu0 %2879
  %2881 = vrot.lane.b32.xlu0 %v1662, 112
  %v2882 = vpop.permute.xlu0 %2881
  %2883 = vrot.lane.b32.xlu0 %v1666, 112
  %v2884 = vpop.permute.xlu0 %2883
  %2885 = vrot.lane.b32.xlu0 %v1672, 112
  %v2886 = vpop.permute.xlu0 %2885
  %2887 = vrot.lane.b32.xlu0 %v1676, 112
  %v2888 = vpop.permute.xlu0 %2887
  %2889 = vrot.lane.b32.xlu0 %v1654, 112
  %v2890 = vpop.permute.xlu0 %2889
  %2891 = vrot.lane.b32.xlu0 %v1658, 112
  %v2892 = vpop.permute.xlu0 %2891
  %2893 = vrot.lane.b32.xlu0 %v1664, 112
  %v2894 = vpop.permute.xlu0 %2893
  %2895 = vrot.lane.b32.xlu0 %v1668, 112
  %v2896 = vpop.permute.xlu0 %2895
  %2897 = vrot.lane.b32.xlu0 %v1674, 112
  %v2898 = vpop.permute.xlu0 %2897
  %2899 = vrot.lane.b32.xlu0 %v1678, 112
  %v2900 = vpop.permute.xlu0 %2899
  %2901 = vrot.lane.b32.xlu0 %v1725, 112
  %v2902 = vpop.permute.xlu0 %2901
  %2903 = vrot.lane.b32.xlu0 %v1729, 112
  %v2904 = vpop.permute.xlu0 %2903
  %2905 = vrot.lane.b32.xlu0 %v1735, 112
  %v2906 = vpop.permute.xlu0 %2905
  %2907 = vrot.lane.b32.xlu0 %v1739, 112
  %v2908 = vpop.permute.xlu0 %2907
  %2909 = vrot.lane.b32.xlu0 %v1745, 112
  %v2910 = vpop.permute.xlu0 %2909
  %2911 = vrot.lane.b32.xlu0 %v1749, 112
  %v2912 = vpop.permute.xlu0 %2911
  %2913 = vrot.lane.b32.xlu0 %v1727, 112
  %v2914 = vpop.permute.xlu0 %2913
  %2915 = vrot.lane.b32.xlu0 %v1731, 112
  %v2916 = vpop.permute.xlu0 %2915
  %2917 = vrot.lane.b32.xlu0 %v1737, 112
  %v2918 = vpop.permute.xlu0 %2917
  %2919 = vrot.lane.b32.xlu0 %v1741, 112
  %v2920 = vpop.permute.xlu0 %2919
  %2921 = vrot.lane.b32.xlu0 %v1747, 112
  %v2922 = vpop.permute.xlu0 %2921
  %2923 = vrot.lane.b32.xlu0 %v1751, 112
  %v2924 = vpop.permute.xlu0 %2923
  %v2925 = vsel %vm551, %v2902, %v2914
  %v2926 = vsel %vm551, %v2904, %v2916
  %v2927 = vsel %vm551, %v2906, %v2918
  %v2928 = vsel %vm551, %v2908, %v2920
  %v2929 = vsel %vm551, %v2910, %v2922
  %v2930 = vsel %vm551, %v2912, %v2924
  %v2931 = vsel %vm551, %v2890, %v2902
  %v2932 = vsel %vm551, %v2892, %v2904
  %v2933 = vsel %vm551, %v2894, %v2906
  %v2934 = vsel %vm551, %v2896, %v2908
  %v2935 = vsel %vm551, %v2898, %v2910
  %v2936 = vsel %vm551, %v2900, %v2912
  %v2937 = vsel %vm551, %v2878, %v2890
  %v2938 = vsel %vm551, %v2880, %v2892
  %v2939 = vsel %vm551, %v2882, %v2894
  %v2940 = vsel %vm551, %v2884, %v2896
  %v2941 = vsel %vm551, %v2886, %v2898
  %v2942 = vsel %vm551, %v2888, %v2900
  %v2943 = vsel %vm551, %v2914, %v2878
  %v2944 = vsel %vm551, %v2916, %v2880
  %v2945 = vsel %vm551, %v2918, %v2882
  %v2946 = vsel %vm551, %v2920, %v2884
  %v2947 = vsel %vm551, %v2922, %v2886
  %v2948 = vsel %vm551, %v2924, %v2888
  %v2949 = vmul.f32 %v2937, %v566
  %v2950 = vmul.f32 %v2931, %v570
  %v2951 = vmul.f32 %v2925, %v574
  %v2952 = vmul.f32 %v2943, %v578
  %v2953 = vmul.f32 %v2938, %v566
  %v2954 = vmul.f32 %v2932, %v570
  %v2955 = vmul.f32 %v2926, %v574
  %v2956 = vmul.f32 %v2944, %v578
  %v2957 = vmul.f32 %v2939, %v566
  %v2958 = vmul.f32 %v2933, %v570
  %v2959 = vmul.f32 %v2927, %v574
  %v2960 = vmul.f32 %v2945, %v578
  %v2961 = vmul.f32 %v2940, %v566
  %v2962 = vmul.f32 %v2934, %v570
  %v2963 = vmul.f32 %v2928, %v574
  %v2964 = vmul.f32 %v2946, %v578
  %v2965 = vmul.f32 %v2941, %v566
  %v2966 = vmul.f32 %v2935, %v570
  %v2967 = vmul.f32 %v2929, %v574
  %v2968 = vmul.f32 %v2947, %v578
  %v2969 = vmul.f32 %v2942, %v566
  %v2970 = vmul.f32 %v2936, %v570
  %v2971 = vmul.f32 %v2930, %v574
  %v2972 = vmul.f32 %v2948, %v578
  %2973 = vset.pattern.permute.xlu0 7
  %2974 = vperm.xlu0 %2973, %v1809
  %v2975 = vpop.permute.xlu0 %2974
  %2977 = vset.pattern.permute.xlu0 7
  %2978 = vperm.xlu0 %2977, %v1810
  %v2979 = vpop.permute.xlu0 %2978
  %2981 = vset.pattern.permute.xlu0 7
  %2982 = vperm.xlu0 %2981, %v1811
  %v2983 = vpop.permute.xlu0 %2982
  %2985 = vset.pattern.permute.xlu0 7
  %2986 = vperm.xlu0 %2985, %v1812
  %v2987 = vpop.permute.xlu0 %2986
  %2989 = vset.pattern.permute.xlu0 7
  %2990 = vperm.xlu0 %2989, %v1813
  %v2991 = vpop.permute.xlu0 %2990
  %2993 = vset.pattern.permute.xlu0 7
  %2994 = vperm.xlu0 %2993, %v1814
  %v2995 = vpop.permute.xlu0 %2994
  %v2997 = vmul.f32 %v2949, %v2975
  %v2998 = vmul.f32 %v2950, %v2975
  %v2999 = vmul.f32 %v2951, %v2975
  %v3000 = vmul.f32 %v2952, %v2975
  %v3001 = vmul.f32 %v2953, %v2979
  %v3002 = vmul.f32 %v2954, %v2979
  %v3003 = vmul.f32 %v2955, %v2979
  %v3004 = vmul.f32 %v2956, %v2979
  %v3005 = vmul.f32 %v2957, %v2983
  %v3006 = vmul.f32 %v2958, %v2983
  %v3007 = vmul.f32 %v2959, %v2983
  %v3008 = vmul.f32 %v2960, %v2983
  %v3009 = vmul.f32 %v2961, %v2987
  %v3010 = vmul.f32 %v2962, %v2987
  %v3011 = vmul.f32 %v2963, %v2987
  %v3012 = vmul.f32 %v2964, %v2987
  %v3013 = vmul.f32 %v2965, %v2991
  %v3014 = vmul.f32 %v2966, %v2991
  %v3015 = vmul.f32 %v2967, %v2991
  %v3016 = vmul.f32 %v2968, %v2991
  %v3017 = vmul.f32 %v2969, %v2995
  %v3018 = vmul.f32 %v2970, %v2995
  %v3019 = vmul.f32 %v2971, %v2995
  %v3020 = vmul.f32 %v2972, %v2995
  %v3021 = vadd.f32 %v2853, %v2997
  %v3022 = vadd.f32 %v2854, %v2998
  %v3023 = vadd.f32 %v2855, %v2999
  %v3024 = vadd.f32 %v2856, %v3000
  %v3025 = vadd.f32 %v2857, %v3001
  %v3026 = vadd.f32 %v2858, %v3002
  %v3027 = vadd.f32 %v2859, %v3003
  %v3028 = vadd.f32 %v2860, %v3004
  %v3029 = vadd.f32 %v2861, %v3005
  %v3030 = vadd.f32 %v2862, %v3006
  %v3031 = vadd.f32 %v2863, %v3007
  %v3032 = vadd.f32 %v2864, %v3008
  %v3033 = vadd.f32 %v2865, %v3009
  %v3034 = vadd.f32 %v2866, %v3010
  %v3035 = vadd.f32 %v2867, %v3011
  %v3036 = vadd.f32 %v2868, %v3012
  %v3037 = vadd.f32 %v2869, %v3013
  %v3038 = vadd.f32 %v2870, %v3014
  %v3039 = vadd.f32 %v2871, %v3015
  %v3040 = vadd.f32 %v2872, %v3016
  %v3041 = vadd.f32 %v2873, %v3017
  %v3042 = vadd.f32 %v2874, %v3018
  %v3043 = vadd.f32 %v2875, %v3019
  %v3044 = vadd.f32 %v2876, %v3020
  %3045 = vrot.lane.b32.xlu0 %v1652, 111
  %v3046 = vpop.permute.xlu0 %3045
  %3047 = vrot.lane.b32.xlu0 %v1656, 111
  %v3048 = vpop.permute.xlu0 %3047
  %3049 = vrot.lane.b32.xlu0 %v1662, 111
  %v3050 = vpop.permute.xlu0 %3049
  %3051 = vrot.lane.b32.xlu0 %v1666, 111
  %v3052 = vpop.permute.xlu0 %3051
  %3053 = vrot.lane.b32.xlu0 %v1672, 111
  %v3054 = vpop.permute.xlu0 %3053
  %3055 = vrot.lane.b32.xlu0 %v1676, 111
  %v3056 = vpop.permute.xlu0 %3055
  %3057 = vrot.lane.b32.xlu0 %v1654, 111
  %v3058 = vpop.permute.xlu0 %3057
  %3059 = vrot.lane.b32.xlu0 %v1658, 111
  %v3060 = vpop.permute.xlu0 %3059
  %3061 = vrot.lane.b32.xlu0 %v1664, 111
  %v3062 = vpop.permute.xlu0 %3061
  %3063 = vrot.lane.b32.xlu0 %v1668, 111
  %v3064 = vpop.permute.xlu0 %3063
  %3065 = vrot.lane.b32.xlu0 %v1674, 111
  %v3066 = vpop.permute.xlu0 %3065
  %3067 = vrot.lane.b32.xlu0 %v1678, 111
  %v3068 = vpop.permute.xlu0 %3067
  %3069 = vrot.lane.b32.xlu0 %v1725, 111
  %v3070 = vpop.permute.xlu0 %3069
  %3071 = vrot.lane.b32.xlu0 %v1729, 111
  %v3072 = vpop.permute.xlu0 %3071
  %3073 = vrot.lane.b32.xlu0 %v1735, 111
  %v3074 = vpop.permute.xlu0 %3073
  %3075 = vrot.lane.b32.xlu0 %v1739, 111
  %v3076 = vpop.permute.xlu0 %3075
  %3077 = vrot.lane.b32.xlu0 %v1745, 111
  %v3078 = vpop.permute.xlu0 %3077
  %3079 = vrot.lane.b32.xlu0 %v1749, 111
  %v3080 = vpop.permute.xlu0 %3079
  %3081 = vrot.lane.b32.xlu0 %v1727, 111
  %v3082 = vpop.permute.xlu0 %3081
  %3083 = vrot.lane.b32.xlu0 %v1731, 111
  %v3084 = vpop.permute.xlu0 %3083
  %3085 = vrot.lane.b32.xlu0 %v1737, 111
  %v3086 = vpop.permute.xlu0 %3085
  %3087 = vrot.lane.b32.xlu0 %v1741, 111
  %v3088 = vpop.permute.xlu0 %3087
  %3089 = vrot.lane.b32.xlu0 %v1747, 111
  %v3090 = vpop.permute.xlu0 %3089
  %3091 = vrot.lane.b32.xlu0 %v1751, 111
  %v3092 = vpop.permute.xlu0 %3091
  %v3093 = vsel %vm631, %v3070, %v3082
  %v3094 = vsel %vm631, %v3072, %v3084
  %v3095 = vsel %vm631, %v3074, %v3086
  %v3096 = vsel %vm631, %v3076, %v3088
  %v3097 = vsel %vm631, %v3078, %v3090
  %v3098 = vsel %vm631, %v3080, %v3092
  %v3099 = vsel %vm631, %v3058, %v3070
  %v3100 = vsel %vm631, %v3060, %v3072
  %v3101 = vsel %vm631, %v3062, %v3074
  %v3102 = vsel %vm631, %v3064, %v3076
  %v3103 = vsel %vm631, %v3066, %v3078
  %v3104 = vsel %vm631, %v3068, %v3080
  %v3105 = vsel %vm631, %v3046, %v3058
  %v3106 = vsel %vm631, %v3048, %v3060
  %v3107 = vsel %vm631, %v3050, %v3062
  %v3108 = vsel %vm631, %v3052, %v3064
  %v3109 = vsel %vm631, %v3054, %v3066
  %v3110 = vsel %vm631, %v3056, %v3068
  %v3111 = vsel %vm631, %v3082, %v3046
  %v3112 = vsel %vm631, %v3084, %v3048
  %v3113 = vsel %vm631, %v3086, %v3050
  %v3114 = vsel %vm631, %v3088, %v3052
  %v3115 = vsel %vm631, %v3090, %v3054
  %v3116 = vsel %vm631, %v3092, %v3056
  %v3117 = vmul.f32 %v3105, %v646
  %v3118 = vmul.f32 %v3099, %v650
  %v3119 = vmul.f32 %v3093, %v654
  %v3120 = vmul.f32 %v3111, %v658
  %v3121 = vmul.f32 %v3106, %v646
  %v3122 = vmul.f32 %v3100, %v650
  %v3123 = vmul.f32 %v3094, %v654
  %v3124 = vmul.f32 %v3112, %v658
  %v3125 = vmul.f32 %v3107, %v646
  %v3126 = vmul.f32 %v3101, %v650
  %v3127 = vmul.f32 %v3095, %v654
  %v3128 = vmul.f32 %v3113, %v658
  %v3129 = vmul.f32 %v3108, %v646
  %v3130 = vmul.f32 %v3102, %v650
  %v3131 = vmul.f32 %v3096, %v654
  %v3132 = vmul.f32 %v3114, %v658
  %v3133 = vmul.f32 %v3109, %v646
  %v3134 = vmul.f32 %v3103, %v650
  %v3135 = vmul.f32 %v3097, %v654
  %v3136 = vmul.f32 %v3115, %v658
  %v3137 = vmul.f32 %v3110, %v646
  %v3138 = vmul.f32 %v3104, %v650
  %v3139 = vmul.f32 %v3098, %v654
  %v3140 = vmul.f32 %v3116, %v658
  %3141 = vset.pattern.permute.xlu0 8
  %3142 = vperm.xlu0 %3141, %v1809
  %v3143 = vpop.permute.xlu0 %3142
  %3145 = vset.pattern.permute.xlu0 8
  %3146 = vperm.xlu0 %3145, %v1810
  %v3147 = vpop.permute.xlu0 %3146
  %3149 = vset.pattern.permute.xlu0 8
  %3150 = vperm.xlu0 %3149, %v1811
  %v3151 = vpop.permute.xlu0 %3150
  %3153 = vset.pattern.permute.xlu0 8
  %3154 = vperm.xlu0 %3153, %v1812
  %v3155 = vpop.permute.xlu0 %3154
  %3157 = vset.pattern.permute.xlu0 8
  %3158 = vperm.xlu0 %3157, %v1813
  %v3159 = vpop.permute.xlu0 %3158
  %3161 = vset.pattern.permute.xlu0 8
  %3162 = vperm.xlu0 %3161, %v1814
  %v3163 = vpop.permute.xlu0 %3162
  %v3165 = vmul.f32 %v3117, %v3143
  %v3166 = vmul.f32 %v3118, %v3143
  %v3167 = vmul.f32 %v3119, %v3143
  %v3168 = vmul.f32 %v3120, %v3143
  %v3169 = vmul.f32 %v3121, %v3147
  %v3170 = vmul.f32 %v3122, %v3147
  %v3171 = vmul.f32 %v3123, %v3147
  %v3172 = vmul.f32 %v3124, %v3147
  %v3173 = vmul.f32 %v3125, %v3151
  %v3174 = vmul.f32 %v3126, %v3151
  %v3175 = vmul.f32 %v3127, %v3151
  %v3176 = vmul.f32 %v3128, %v3151
  %v3177 = vmul.f32 %v3129, %v3155
  %v3178 = vmul.f32 %v3130, %v3155
  %v3179 = vmul.f32 %v3131, %v3155
  %v3180 = vmul.f32 %v3132, %v3155
  %v3181 = vmul.f32 %v3133, %v3159
  %v3182 = vmul.f32 %v3134, %v3159
  %v3183 = vmul.f32 %v3135, %v3159
  %v3184 = vmul.f32 %v3136, %v3159
  %v3185 = vmul.f32 %v3137, %v3163
  %v3186 = vmul.f32 %v3138, %v3163
  %v3187 = vmul.f32 %v3139, %v3163
  %v3188 = vmul.f32 %v3140, %v3163
  %v3189 = vadd.f32 %v3021, %v3165
  %v3190 = vadd.f32 %v3022, %v3166
  %v3191 = vadd.f32 %v3023, %v3167
  %v3192 = vadd.f32 %v3024, %v3168
  %v3193 = vadd.f32 %v3025, %v3169
  %v3194 = vadd.f32 %v3026, %v3170
  %v3195 = vadd.f32 %v3027, %v3171
  %v3196 = vadd.f32 %v3028, %v3172
  %v3197 = vadd.f32 %v3029, %v3173
  %v3198 = vadd.f32 %v3030, %v3174
  %v3199 = vadd.f32 %v3031, %v3175
  %v3200 = vadd.f32 %v3032, %v3176
  %v3201 = vadd.f32 %v3033, %v3177
  %v3202 = vadd.f32 %v3034, %v3178
  %v3203 = vadd.f32 %v3035, %v3179
  %v3204 = vadd.f32 %v3036, %v3180
  %v3205 = vadd.f32 %v3037, %v3181
  %v3206 = vadd.f32 %v3038, %v3182
  %v3207 = vadd.f32 %v3039, %v3183
  %v3208 = vadd.f32 %v3040, %v3184
  %v3209 = vadd.f32 %v3041, %v3185
  %v3210 = vadd.f32 %v3042, %v3186
  %v3211 = vadd.f32 %v3043, %v3187
  %v3212 = vadd.f32 %v3044, %v3188
  %v3213 = vld [vmem:[%s2 + $0x98] sm:$0xff]
  %v3214 = vld [vmem:[%s2 + $0xa0] sm:$0xff]
  %v3215 = vld [vmem:[%s2 + $0xa8] sm:$0xff]
  %v3216 = vld [vmem:[%s2 + $0xb0] sm:$0xff]
  %v3217 = vld [vmem:[%s2 + $0xb8] sm:$0xff]
  %v3218 = vld [vmem:[%s2 + $0xc0] sm:$0xff]
  %3220 = vset.pattern.permute.xlu0 0
  %3221 = vperm.xlu0 %3220, %v3213
  %v3222 = vpop.permute.xlu0 %3221
  %3225 = vset.pattern.permute.xlu0 0
  %3226 = vperm.xlu0 %3225, %v3214
  %v3227 = vpop.permute.xlu0 %3226
  %3230 = vset.pattern.permute.xlu0 0
  %3231 = vperm.xlu0 %3230, %v3215
  %v3232 = vpop.permute.xlu0 %3231
  %3235 = vset.pattern.permute.xlu0 0
  %3236 = vperm.xlu0 %3235, %v3216
  %v3237 = vpop.permute.xlu0 %3236
  %3240 = vset.pattern.permute.xlu0 0
  %3241 = vperm.xlu0 %3240, %v3217
  %v3242 = vpop.permute.xlu0 %3241
  %3245 = vset.pattern.permute.xlu0 0
  %3246 = vperm.xlu0 %3245, %v3218
  %v3247 = vpop.permute.xlu0 %3246
  %v3249 = vadd.f32 %v3189, %v3222
  %v3250 = vadd.f32 %v3190, %v3222
  %v3251 = vadd.f32 %v3191, %v3222
  %v3252 = vadd.f32 %v3192, %v3222
  %v3253 = vadd.f32 %v3193, %v3227
  %v3254 = vadd.f32 %v3194, %v3227
  %v3255 = vadd.f32 %v3195, %v3227
  %v3256 = vadd.f32 %v3196, %v3227
  %v3257 = vadd.f32 %v3197, %v3232
  %v3258 = vadd.f32 %v3198, %v3232
  %v3259 = vadd.f32 %v3199, %v3232
  %v3260 = vadd.f32 %v3200, %v3232
  %v3261 = vadd.f32 %v3201, %v3237
  %v3262 = vadd.f32 %v3202, %v3237
  %v3263 = vadd.f32 %v3203, %v3237
  %v3264 = vadd.f32 %v3204, %v3237
  %v3265 = vadd.f32 %v3205, %v3242
  %v3266 = vadd.f32 %v3206, %v3242
  %v3267 = vadd.f32 %v3207, %v3242
  %v3268 = vadd.f32 %v3208, %v3242
  %v3269 = vadd.f32 %v3209, %v3247
  %v3270 = vadd.f32 %v3210, %v3247
  %v3271 = vadd.f32 %v3211, %v3247
  %v3272 = vadd.f32 %v3212, %v3247
  %v3273 = vmul.f32 %v3265, %v1801
  %v3274 = vmul.f32 %v3266, %v1802
  %v3275 = vmul.f32 %v3267, %v1803
  %v3276 = vmul.f32 %v3268, %v1804
  %v3277 = vmul.f32 %v3269, %v1805
  %v3278 = vmul.f32 %v3270, %v1806
  %v3279 = vmul.f32 %v3271, %v1807
  %v3280 = vmul.f32 %v3272, %v1808
  %v3281 = vld [vmem:[%s2 + $0x108] sm:$0xff]
  %v3282 = vld [vmem:[%s2 + $0x110] sm:$0xff]
  %v3283 = vld [vmem:[%s2 + $0x118] sm:$0xff]
  %v3284 = vld [vmem:[%s2 + $0x120] sm:$0xff]
  %v3285 = vmul.f32 %v3249, %v3249
  %v3286 = vmul.f32 %v3250, %v3250
  %v3287 = vmul.f32 %v3253, %v3253
  %v3288 = vmul.f32 %v3254, %v3254
  %v3289 = vadd.f32 %v3285, %v3286
  %3290 = vadd.xlane.f32.xlu0 %v3289
  %v3291 = vpop.xlane.xlu0 %3290
  %v3292 = vadd.f32 %v3287, %v3288
  %3293 = vadd.xlane.f32.xlu0 %v3292
  %v3294 = vpop.xlane.xlu0 %3293
  %v3295 = vmax.f32 %v3291, 1e-24
  %v3296 = vmax.f32 %v3294, 1e-24
  %v3297 = vrsqrt.pop %v3295
  %v3298 = vrsqrt.pop %v3296
  %v3299 = vmul.f32 %v3249, %v3297
  %v3300 = vmul.f32 %v3250, %v3297
  %v3301 = vmul.f32 %v3253, %v3298
  %v3302 = vmul.f32 %v3254, %v3298
  %v3303 = vmul.f32 %v3257, %v3257
  %v3304 = vmul.f32 %v3258, %v3258
  %v3305 = vmul.f32 %v3261, %v3261
  %v3306 = vmul.f32 %v3262, %v3262
  %v3307 = vadd.f32 %v3303, %v3304
  %3308 = vadd.xlane.f32.xlu0 %v3307
  %v3309 = vpop.xlane.xlu0 %3308
  %v3310 = vadd.f32 %v3305, %v3306
  %3311 = vadd.xlane.f32.xlu0 %v3310
  %v3312 = vpop.xlane.xlu0 %3311
  %v3313 = vmax.f32 %v3309, 1e-24
  %v3314 = vmax.f32 %v3312, 1e-24
  %v3315 = vrsqrt.pop %v3313
  %v3316 = vrsqrt.pop %v3314
  %v3317 = vmul.f32 %v3257, %v3315
  %v3318 = vmul.f32 %v3258, %v3315
  %v3319 = vmul.f32 %v3261, %v3316
  %v3320 = vmul.f32 %v3262, %v3316
  %3321 = vmatprep.subr.mxu0 0.0
  %3322 = vmatpush1.xpose.msra.mxu0 0.0
  %3323 = vmatprep.subr.mxu0 0.0
  %3324 = vmatpush1.xpose.msra.mxu0 0.0
  %3325 = vmatprep.subr.mxu0 0.0
  %3326 = vmatpush1.xpose.msra.mxu0 0.0
  %3327 = vmatprep.subr.mxu0 0.0
  %3328 = vmatpush1.xpose.msra.mxu0 0.0
  %3329 = vmatprep.subr.mxu0 0.0
  %3330 = vmatpush1.xpose.msra.mxu0 0.0
  %3331 = vmatprep.subr.mxu0 0.0
  %3332 = vmatpush1.xpose.msra.mxu0 0.0
  %3333 = vmatprep.subr.mxu0 0.0
  %3334 = vmatpush1.xpose.msra.mxu0 0.0
  %3335 = vmatprep.subr.mxu0 0.0
  %3336 = vmatpush1.xpose.msra.mxu0 0.0
  %3337 = vmatprep.subr.mxu0 0.0
  %3338 = vmatpush1.xpose.msra.mxu0 0.0
  %3339 = vmatprep.subr.mxu0 0.0
  %3340 = vmatpush1.xpose.msra.mxu0 0.0
  %3341 = vmatprep.subr.mxu0 0.0
  %3342 = vmatpush1.xpose.msra.mxu0 0.0
  %3343 = vmatprep.subr.mxu0 0.0
  %3344 = vmatpush1.xpose.msra.mxu0 0.0
  %3345 = vmatprep.subr.mxu0 0.0
  %3346 = vmatpush1.xpose.msra.mxu0 0.0
  %3347 = vmatprep.subr.mxu0 0.0
  %3348 = vmatpush1.xpose.msra.mxu0 0.0
  %3349 = vmatprep.subr.mxu0 %v3320
  %3350 = vmatpush1.xpose.msra.mxu0 %v3319
  %3351 = vmatprep.subr.mxu0 %v3318
  %3352 = vmatpush1.xpose.msra.mxu0 %v3317
  %3353 = vmatprep.subr.mxu0 0.0
  %3354 = vmatpush2.xpose.msra.mxu0 0.0
  %3355 = vmatprep.subr.mxu0 0.0
  %3356 = vmatpush2.xpose.msra.mxu0 0.0
  %3357 = vmatprep.subr.mxu0 0.0
  %3358 = vmatpush2.xpose.msra.mxu0 0.0
  %3359 = vmatprep.subr.mxu0 0.0
  %3360 = vmatpush2.xpose.msra.mxu0 0.0
  %3361 = vmatprep.subr.mxu0 0.0
  %3362 = vmatpush2.xpose.msra.mxu0 0.0
  %3363 = vmatprep.subr.mxu0 0.0
  %3364 = vmatpush2.xpose.msra.mxu0 0.0
  %3365 = vmatprep.subr.mxu0 0.0
  %3366 = vmatpush2.xpose.msra.mxu0 0.0
  %3367 = vmatprep.subr.mxu0 0.0
  %3368 = vmatpush2.xpose.msra.mxu0 0.0
  %3369 = vmatprep.subr.mxu0 0.0
  %3370 = vmatpush2.xpose.msra.mxu0 0.0
  %3371 = vmatprep.subr.mxu0 0.0
  %3372 = vmatpush2.xpose.msra.mxu0 0.0
  %3373 = vmatprep.subr.mxu0 0.0
  %3374 = vmatpush2.xpose.msra.mxu0 0.0
  %3375 = vmatprep.subr.mxu0 0.0
  %3376 = vmatpush2.xpose.msra.mxu0 0.0
  %3377 = vmatprep.subr.mxu0 0.0
  %3378 = vmatpush2.xpose.msra.mxu0 0.0
  %3379 = vmatprep.subr.mxu0 0.0
  %3380 = vmatpush2.xpose.msra.mxu0 0.0
  %3381 = vmatprep.subr.mxu0 0.0
  %3382 = vmatpush2.xpose.msra.mxu0 0.0
  %3383 = vmatprep.subr.mxu0 0.0
  %3384 = vmatpush2.xpose.msra.mxu0 0.0
  %3385 = vmatprep.mubr.f32.mxu0 %v3300
  %3386 = vmatmul.mubr.f32.gmra.mxu0 %v3299
  %v3387 = vpop.f32.mrf.mxu0
  %v3388 = vadd.f32 0.0, %v3387
  %v3389 = vpop.f32.mrf.mxu0
  %3390 = vmatprep.mubr.f32.mxu0 %v3302
  %3391 = vmatmul.mubr.f32.gmra.mxu0 %v3301
  %v3392 = vpop.f32.mrf.mxu0
  %v3393 = vadd.f32 0.0, %v3392
  %v3394 = vpop.f32.mrf.mxu0
  %3395 = vdwg.mxu0
  %3397 = vset.pattern.permute.xlu0 0
  %3398 = vperm.xlu0 %3397, %v3281
  %v3399 = vpop.permute.xlu0 %3398
  %3402 = vset.pattern.permute.xlu0 0
  %3403 = vperm.xlu0 %3402, %v3282
  %v3404 = vpop.permute.xlu0 %3403
  %v3406 = vmul.f32 %v3388, %v3399
  %v3407 = vmul.f32 %v3393, %v3404
  %v3408 = vadd.f32 %v3406, %v3283
  %v3409 = vadd.f32 %v3407, %v3284
  %vm3410 = vcmask 130048
  %v3411 = vsel %vm3410, %v3408, -inf
  %3412 = vmax.xlane.f32.xlu0 %v3411
  %v3413 = vpop.xlane.xlu0 %3412
  %v3414 = vsel %vm3410, %v3409, -inf
  %3415 = vmax.xlane.f32.xlu0 %v3414
  %v3416 = vpop.xlane.xlu0 %3415
  %v3417 = vsub.f32 %v3408, %v3413
  %v3418 = vsub.f32 %v3409, %v3416
  %v3419 = vmul.f32 %v3417, 1.442695
  %v3420 = vpow.pop %v3419
  %v3421 = vmul.f32 %v3418, 1.442695
  %v3422 = vpow.pop %v3421
  %v3423 = vsel %vm3410, %v3420, 0.0
  %3424 = vadd.xlane.f32.xlu0 %v3423
  %v3425 = vpop.xlane.xlu0 %3424
  %v3426 = vsel %vm3410, %v3422, 0.0
  %3427 = vadd.xlane.f32.xlu0 %v3426
  %v3428 = vpop.xlane.xlu0 %3427
  %v3429 = vrcp.pop %v3425
  %v3430 = vmul.f32 %v3420, %v3429
  %v3431 = vrcp.pop %v3428
  %v3432 = vmul.f32 %v3422, %v3431
  %v3434 = vsel %vm3410, %v3430, 0
  %v3437 = vsel %vm3410, %v3432, 0
  %3439 = vmatprep.subr.mxu0 0.0
  %3440 = vmatpush1.msra.mxu0 0.0
  %3441 = vmatprep.subr.mxu0 0.0
  %3442 = vmatpush1.msra.mxu0 0.0
  %3443 = vmatprep.subr.mxu0 0.0
  %3444 = vmatpush1.msra.mxu0 0.0
  %3445 = vmatprep.subr.mxu0 0.0
  %3446 = vmatpush1.msra.mxu0 0.0
  %3447 = vmatprep.subr.mxu0 0.0
  %3448 = vmatpush1.msra.mxu0 0.0
  %3449 = vmatprep.subr.mxu0 0.0
  %3450 = vmatpush1.msra.mxu0 0.0
  %3451 = vmatprep.subr.mxu0 0.0
  %3452 = vmatpush1.msra.mxu0 0.0
  %3453 = vmatprep.subr.mxu0 0.0
  %3454 = vmatpush1.msra.mxu0 0.0
  %3455 = vmatprep.subr.mxu0 0.0
  %3456 = vmatpush1.msra.mxu0 0.0
  %3457 = vmatprep.subr.mxu0 0.0
  %3458 = vmatpush1.msra.mxu0 0.0
  %3459 = vmatprep.subr.mxu0 0.0
  %3460 = vmatpush1.msra.mxu0 0.0
  %3461 = vmatprep.subr.mxu0 0.0
  %3462 = vmatpush1.msra.mxu0 0.0
  %3463 = vmatprep.subr.mxu0 0.0
  %3464 = vmatpush1.msra.mxu0 0.0
  %3465 = vmatprep.subr.mxu0 0.0
  %3466 = vmatpush1.msra.mxu0 0.0
  %3467 = vmatprep.subr.mxu0 %v3278
  %3468 = vmatpush1.msra.mxu0 %v3277
  %3469 = vmatprep.subr.mxu0 %v3274
  %3470 = vmatpush1.msra.mxu0 %v3273
  %3471 = vmatprep.subr.mxu0 0.0
  %3472 = vmatpush2.msra.mxu0 0.0
  %3473 = vmatprep.subr.mxu0 0.0
  %3474 = vmatpush2.msra.mxu0 0.0
  %3475 = vmatprep.subr.mxu0 0.0
  %3476 = vmatpush2.msra.mxu0 0.0
  %3477 = vmatprep.subr.mxu0 0.0
  %3478 = vmatpush2.msra.mxu0 0.0
  %3479 = vmatprep.subr.mxu0 0.0
  %3480 = vmatpush2.msra.mxu0 0.0
  %3481 = vmatprep.subr.mxu0 0.0
  %3482 = vmatpush2.msra.mxu0 0.0
  %3483 = vmatprep.subr.mxu0 0.0
  %3484 = vmatpush2.msra.mxu0 0.0
  %3485 = vmatprep.subr.mxu0 0.0
  %3486 = vmatpush2.msra.mxu0 0.0
  %3487 = vmatprep.subr.mxu0 0.0
  %3488 = vmatpush2.msra.mxu0 0.0
  %3489 = vmatprep.subr.mxu0 0.0
  %3490 = vmatpush2.msra.mxu0 0.0
  %3491 = vmatprep.subr.mxu0 0.0
  %3492 = vmatpush2.msra.mxu0 0.0
  %3493 = vmatprep.subr.mxu0 0.0
  %3494 = vmatpush2.msra.mxu0 0.0
  %3495 = vmatprep.subr.mxu0 0.0
  %3496 = vmatpush2.msra.mxu0 0.0
  %3497 = vmatprep.subr.mxu0 0.0
  %3498 = vmatpush2.msra.mxu0 0.0
  %3499 = vmatprep.subr.mxu0 0.0
  %3500 = vmatpush2.msra.mxu0 0.0
  %3501 = vmatprep.subr.mxu0 0.0
  %3502 = vmatpush2.msra.mxu0 0.0
  %3503 = vmatprep.mubr.f32.mxu0 0.0
  %3504 = vmatmul.mubr.f32.gmra.mxu0 %v3434
  %v3505 = vpop.f32.mrf.mxu0
  %v3506 = vadd.f32 0.0, %v3505
  %v3507 = vpop.f32.mrf.mxu0
  %v3508 = vadd.f32 0.0, %v3507
  %3509 = vmatprep.mubr.f32.mxu0 0.0
  %3510 = vmatmul.mubr.f32.gmra.mxu0 %v3437
  %v3511 = vpop.f32.mrf.mxu0
  %v3512 = vadd.f32 0.0, %v3511
  %v3513 = vpop.f32.mrf.mxu0
  %v3514 = vadd.f32 0.0, %v3513
  %3515 = vdwg.mxu0
  %v3516 = vmul.f32 %v3251, %v3251
  %v3517 = vmul.f32 %v3252, %v3252
  %v3518 = vmul.f32 %v3255, %v3255
  %v3519 = vmul.f32 %v3256, %v3256
  %v3520 = vadd.f32 %v3516, %v3517
  %3521 = vadd.xlane.f32.xlu0 %v3520
  %v3522 = vpop.xlane.xlu0 %3521
  %v3523 = vadd.f32 %v3518, %v3519
  %3524 = vadd.xlane.f32.xlu0 %v3523
  %v3525 = vpop.xlane.xlu0 %3524
  %v3526 = vmax.f32 %v3522, 1e-24
  %v3527 = vmax.f32 %v3525, 1e-24
  %v3528 = vrsqrt.pop %v3526
  %v3529 = vrsqrt.pop %v3527
  %v3530 = vmul.f32 %v3251, %v3528
  %v3531 = vmul.f32 %v3252, %v3528
  %v3532 = vmul.f32 %v3255, %v3529
  %v3533 = vmul.f32 %v3256, %v3529
  %v3534 = vmul.f32 %v3259, %v3259
  %v3535 = vmul.f32 %v3260, %v3260
  %v3536 = vmul.f32 %v3263, %v3263
  %v3537 = vmul.f32 %v3264, %v3264
  %v3538 = vadd.f32 %v3534, %v3535
  %3539 = vadd.xlane.f32.xlu0 %v3538
  %v3540 = vpop.xlane.xlu0 %3539
  %v3541 = vadd.f32 %v3536, %v3537
  %3542 = vadd.xlane.f32.xlu0 %v3541
  %v3543 = vpop.xlane.xlu0 %3542
  %v3544 = vmax.f32 %v3540, 1e-24
  %v3545 = vmax.f32 %v3543, 1e-24
  %v3546 = vrsqrt.pop %v3544
  %v3547 = vrsqrt.pop %v3545
  %v3548 = vmul.f32 %v3259, %v3546
  %v3549 = vmul.f32 %v3260, %v3546
  %v3550 = vmul.f32 %v3263, %v3547
  %v3551 = vmul.f32 %v3264, %v3547
  %3552 = vmatprep.subr.mxu0 0.0
  %3553 = vmatpush1.xpose.msra.mxu0 0.0
  %3554 = vmatprep.subr.mxu0 0.0
  %3555 = vmatpush1.xpose.msra.mxu0 0.0
  %3556 = vmatprep.subr.mxu0 0.0
  %3557 = vmatpush1.xpose.msra.mxu0 0.0
  %3558 = vmatprep.subr.mxu0 0.0
  %3559 = vmatpush1.xpose.msra.mxu0 0.0
  %3560 = vmatprep.subr.mxu0 0.0
  %3561 = vmatpush1.xpose.msra.mxu0 0.0
  %3562 = vmatprep.subr.mxu0 0.0
  %3563 = vmatpush1.xpose.msra.mxu0 0.0
  %3564 = vmatprep.subr.mxu0 0.0
  %3565 = vmatpush1.xpose.msra.mxu0 0.0
  %3566 = vmatprep.subr.mxu0 0.0
  %3567 = vmatpush1.xpose.msra.mxu0 0.0
  %3568 = vmatprep.subr.mxu0 0.0
  %3569 = vmatpush1.xpose.msra.mxu0 0.0
  %3570 = vmatprep.subr.mxu0 0.0
  %3571 = vmatpush1.xpose.msra.mxu0 0.0
  %3572 = vmatprep.subr.mxu0 0.0
  %3573 = vmatpush1.xpose.msra.mxu0 0.0
  %3574 = vmatprep.subr.mxu0 0.0
  %3575 = vmatpush1.xpose.msra.mxu0 0.0
  %3576 = vmatprep.subr.mxu0 0.0
  %3577 = vmatpush1.xpose.msra.mxu0 0.0
  %3578 = vmatprep.subr.mxu0 0.0
  %3579 = vmatpush1.xpose.msra.mxu0 0.0
  %3580 = vmatprep.subr.mxu0 %v3551
  %3581 = vmatpush1.xpose.msra.mxu0 %v3550
  %3582 = vmatprep.subr.mxu0 %v3549
  %3583 = vmatpush1.xpose.msra.mxu0 %v3548
  %3584 = vmatprep.subr.mxu0 0.0
  %3585 = vmatpush2.xpose.msra.mxu0 0.0
  %3586 = vmatprep.subr.mxu0 0.0
  %3587 = vmatpush2.xpose.msra.mxu0 0.0
  %3588 = vmatprep.subr.mxu0 0.0
  %3589 = vmatpush2.xpose.msra.mxu0 0.0
  %3590 = vmatprep.subr.mxu0 0.0
  %3591 = vmatpush2.xpose.msra.mxu0 0.0
  %3592 = vmatprep.subr.mxu0 0.0
  %3593 = vmatpush2.xpose.msra.mxu0 0.0
  %3594 = vmatprep.subr.mxu0 0.0
  %3595 = vmatpush2.xpose.msra.mxu0 0.0
  %3596 = vmatprep.subr.mxu0 0.0
  %3597 = vmatpush2.xpose.msra.mxu0 0.0
  %3598 = vmatprep.subr.mxu0 0.0
  %3599 = vmatpush2.xpose.msra.mxu0 0.0
  %3600 = vmatprep.subr.mxu0 0.0
  %3601 = vmatpush2.xpose.msra.mxu0 0.0
  %3602 = vmatprep.subr.mxu0 0.0
  %3603 = vmatpush2.xpose.msra.mxu0 0.0
  %3604 = vmatprep.subr.mxu0 0.0
  %3605 = vmatpush2.xpose.msra.mxu0 0.0
  %3606 = vmatprep.subr.mxu0 0.0
  %3607 = vmatpush2.xpose.msra.mxu0 0.0
  %3608 = vmatprep.subr.mxu0 0.0
  %3609 = vmatpush2.xpose.msra.mxu0 0.0
  %3610 = vmatprep.subr.mxu0 0.0
  %3611 = vmatpush2.xpose.msra.mxu0 0.0
  %3612 = vmatprep.subr.mxu0 0.0
  %3613 = vmatpush2.xpose.msra.mxu0 0.0
  %3614 = vmatprep.subr.mxu0 0.0
  %3615 = vmatpush2.xpose.msra.mxu0 0.0
  %3616 = vmatprep.mubr.f32.mxu0 %v3531
  %3617 = vmatmul.mubr.f32.gmra.mxu0 %v3530
  %v3618 = vpop.f32.mrf.mxu0
  %v3619 = vadd.f32 0.0, %v3618
  %v3620 = vpop.f32.mrf.mxu0
  %3621 = vmatprep.mubr.f32.mxu0 %v3533
  %3622 = vmatmul.mubr.f32.gmra.mxu0 %v3532
  %v3623 = vpop.f32.mrf.mxu0
  %v3624 = vadd.f32 0.0, %v3623
  %v3625 = vpop.f32.mrf.mxu0
  %3626 = vdwg.mxu0
  %v3627 = vmul.f32 %v3619, %v3399
  %v3628 = vmul.f32 %v3624, %v3404
  %v3629 = vadd.f32 %v3627, %v3283
  %v3630 = vadd.f32 %v3628, %v3284
  %v3631 = vsel %vm3410, %v3629, -inf
  %3632 = vmax.xlane.f32.xlu0 %v3631
  %v3633 = vpop.xlane.xlu0 %3632
  %v3634 = vsel %vm3410, %v3630, -inf
  %3635 = vmax.xlane.f32.xlu0 %v3634
  %v3636 = vpop.xlane.xlu0 %3635
  %v3637 = vsub.f32 %v3629, %v3633
  %v3638 = vsub.f32 %v3630, %v3636
  %v3639 = vmul.f32 %v3637, 1.442695
  %v3640 = vpow.pop %v3639
  %v3641 = vmul.f32 %v3638, 1.442695
  %v3642 = vpow.pop %v3641
  %v3643 = vsel %vm3410, %v3640, 0.0
  %3644 = vadd.xlane.f32.xlu0 %v3643
  %v3645 = vpop.xlane.xlu0 %3644
  %v3646 = vsel %vm3410, %v3642, 0.0
  %3647 = vadd.xlane.f32.xlu0 %v3646
  %v3648 = vpop.xlane.xlu0 %3647
  %v3649 = vrcp.pop %v3645
  %v3650 = vmul.f32 %v3640, %v3649
  %v3651 = vrcp.pop %v3648
  %v3652 = vmul.f32 %v3642, %v3651
  %v3654 = vsel %vm3410, %v3650, 0
  %v3657 = vsel %vm3410, %v3652, 0
  %3659 = vmatprep.subr.mxu0 0.0
  %3660 = vmatpush1.msra.mxu0 0.0
  %3661 = vmatprep.subr.mxu0 0.0
  %3662 = vmatpush1.msra.mxu0 0.0
  %3663 = vmatprep.subr.mxu0 0.0
  %3664 = vmatpush1.msra.mxu0 0.0
  %3665 = vmatprep.subr.mxu0 0.0
  %3666 = vmatpush1.msra.mxu0 0.0
  %3667 = vmatprep.subr.mxu0 0.0
  %3668 = vmatpush1.msra.mxu0 0.0
  %3669 = vmatprep.subr.mxu0 0.0
  %3670 = vmatpush1.msra.mxu0 0.0
  %3671 = vmatprep.subr.mxu0 0.0
  %3672 = vmatpush1.msra.mxu0 0.0
  %3673 = vmatprep.subr.mxu0 0.0
  %3674 = vmatpush1.msra.mxu0 0.0
  %3675 = vmatprep.subr.mxu0 0.0
  %3676 = vmatpush1.msra.mxu0 0.0
  %3677 = vmatprep.subr.mxu0 0.0
  %3678 = vmatpush1.msra.mxu0 0.0
  %3679 = vmatprep.subr.mxu0 0.0
  %3680 = vmatpush1.msra.mxu0 0.0
  %3681 = vmatprep.subr.mxu0 0.0
  %3682 = vmatpush1.msra.mxu0 0.0
  %3683 = vmatprep.subr.mxu0 0.0
  %3684 = vmatpush1.msra.mxu0 0.0
  %3685 = vmatprep.subr.mxu0 0.0
  %3686 = vmatpush1.msra.mxu0 0.0
  %3687 = vmatprep.subr.mxu0 %v3280
  %3688 = vmatpush1.msra.mxu0 %v3279
  %3689 = vmatprep.subr.mxu0 %v3276
  %3690 = vmatpush1.msra.mxu0 %v3275
  %3691 = vmatprep.subr.mxu0 0.0
  %3692 = vmatpush2.msra.mxu0 0.0
  %3693 = vmatprep.subr.mxu0 0.0
  %3694 = vmatpush2.msra.mxu0 0.0
  %3695 = vmatprep.subr.mxu0 0.0
  %3696 = vmatpush2.msra.mxu0 0.0
  %3697 = vmatprep.subr.mxu0 0.0
  %3698 = vmatpush2.msra.mxu0 0.0
  %3699 = vmatprep.subr.mxu0 0.0
  %3700 = vmatpush2.msra.mxu0 0.0
  %3701 = vmatprep.subr.mxu0 0.0
  %3702 = vmatpush2.msra.mxu0 0.0
  %3703 = vmatprep.subr.mxu0 0.0
  %3704 = vmatpush2.msra.mxu0 0.0
  %3705 = vmatprep.subr.mxu0 0.0
  %3706 = vmatpush2.msra.mxu0 0.0
  %3707 = vmatprep.subr.mxu0 0.0
  %3708 = vmatpush2.msra.mxu0 0.0
  %3709 = vmatprep.subr.mxu0 0.0
  %3710 = vmatpush2.msra.mxu0 0.0
  %3711 = vmatprep.subr.mxu0 0.0
  %3712 = vmatpush2.msra.mxu0 0.0
  %3713 = vmatprep.subr.mxu0 0.0
  %3714 = vmatpush2.msra.mxu0 0.0
  %3715 = vmatprep.subr.mxu0 0.0
  %3716 = vmatpush2.msra.mxu0 0.0
  %3717 = vmatprep.subr.mxu0 0.0
  %3718 = vmatpush2.msra.mxu0 0.0
  %3719 = vmatprep.subr.mxu0 0.0
  %3720 = vmatpush2.msra.mxu0 0.0
  %3721 = vmatprep.subr.mxu0 0.0
  %3722 = vmatpush2.msra.mxu0 0.0
  %3723 = vmatprep.mubr.f32.mxu0 0.0
  %3724 = vmatmul.mubr.f32.gmra.mxu0 %v3654
  %v3725 = vpop.f32.mrf.mxu0
  %v3726 = vadd.f32 0.0, %v3725
  %v3727 = vpop.f32.mrf.mxu0
  %v3728 = vadd.f32 0.0, %v3727
  %3729 = vmatprep.mubr.f32.mxu0 0.0
  %3730 = vmatmul.mubr.f32.gmra.mxu0 %v3657
  %v3731 = vpop.f32.mrf.mxu0
  %v3732 = vadd.f32 0.0, %v3731
  %v3733 = vpop.f32.mrf.mxu0
  %v3734 = vadd.f32 0.0, %v3733
  %3735 = vdwg.mxu0
  %v3736 = vld [vmem:[%s1 + $0x20] sm:$0xf]
  %v3737 = vld [vmem:[%s1 + $0x24] sm:$0xf]
  %v3738 = vpack.c.bf16 %v3512, %v3506
  %v3739 = vpack.c.bf16 %v3514, %v3508
  %v3740 = vpack.c.bf16 %v3732, %v3726
  %v3741 = vpack.c.bf16 %v3734, %v3728
  %v3742 = vld [vmem:[%s2 + $0xc8] sm:$0xff]
  %v3743 = vld [vmem:[%s2 + $0xd0] sm:$0xff]
  %3745 = vset.pattern.permute.xlu0 0
  %3746 = vperm.xlu0 %3745, %v3742
  %v3747 = vpop.permute.xlu0 %3746
  %3750 = vset.pattern.permute.xlu0 0
  %3751 = vperm.xlu0 %3750, %v3743
  %v3752 = vpop.permute.xlu0 %3751
  %v3756 = vunpack.c.l.b16 %v3736
  %v3757 = vunpack.c.l.b16 %v3737
  %v3758 = vpack.c.b16 %v3757, %v3756
  %v3760 = vsel %vm3410, %v3758, 0
  %3762 = vmatprep.subr.bf16.mxu0 0
  %3763 = vmatpush1.bf16.msra.mxu0 0
  %3764 = vmatprep.subr.bf16.mxu0 0
  %3765 = vmatpush1.bf16.msra.mxu0 0
  %3766 = vmatprep.subr.bf16.mxu0 0
  %3767 = vmatpush1.bf16.msra.mxu0 0
  %3768 = vmatprep.subr.bf16.mxu0 0
  %3769 = vmatpush1.bf16.msra.mxu0 0
  %3770 = vmatprep.subr.bf16.mxu0 0
  %3771 = vmatpush1.bf16.msra.mxu0 0
  %3772 = vmatprep.subr.bf16.mxu0 0
  %3773 = vmatpush1.bf16.msra.mxu0 0
  %3774 = vmatprep.subr.bf16.mxu0 0
  %3775 = vmatpush1.bf16.msra.mxu0 0
  %3776 = vmatprep.subr.bf16.mxu0 %v3739
  %3777 = vmatpush1.bf16.msra.mxu0 %v3738
  %3778 = vmatprep.subr.bf16.mxu0 0
  %3779 = vmatpush2.bf16.msra.mxu0 0
  %3780 = vmatprep.subr.bf16.mxu0 0
  %3781 = vmatpush2.bf16.msra.mxu0 0
  %3782 = vmatprep.subr.bf16.mxu0 0
  %3783 = vmatpush2.bf16.msra.mxu0 0
  %3784 = vmatprep.subr.bf16.mxu0 0
  %3785 = vmatpush2.bf16.msra.mxu0 0
  %3786 = vmatprep.subr.bf16.mxu0 0
  %3787 = vmatpush2.bf16.msra.mxu0 0
  %3788 = vmatprep.subr.bf16.mxu0 0
  %3789 = vmatpush2.bf16.msra.mxu0 0
  %3790 = vmatprep.subr.bf16.mxu0 0
  %3791 = vmatpush2.bf16.msra.mxu0 0
  %3792 = vmatprep.subr.bf16.mxu0 0
  %3793 = vmatpush2.bf16.msra.mxu0 0
  %3794 = vmatprep.mubr.bf16.mxu0 0
  %3795 = vmatmul.mubr.bf16.gmra.mxu0 %v3760
  %v3796 = vpop.f32.mrf.mxu0
  %v3797 = vadd.f32 %v3747, %v3796
  %v3798 = vpop.f32.mrf.mxu0
  %v3799 = vadd.f32 %v3747, %v3798
  %v3800 = vpop.f32.mrf.mxu0
  %v3801 = vadd.f32 %v3752, %v3800
  %v3802 = vpop.f32.mrf.mxu0
  %v3803 = vadd.f32 %v3752, %v3802
  %3804 = vdwg.mxu0
  %3805 = vmatprep.subr.bf16.mxu0 0
  %3806 = vmatpush1.bf16.msra.mxu0 0
  %3807 = vmatprep.subr.bf16.mxu0 0
  %3808 = vmatpush1.bf16.msra.mxu0 0
  %3809 = vmatprep.subr.bf16.mxu0 0
  %3810 = vmatpush1.bf16.msra.mxu0 0
  %3811 = vmatprep.subr.bf16.mxu0 0
  %3812 = vmatpush1.bf16.msra.mxu0 0
  %3813 = vmatprep.subr.bf16.mxu0 0
  %3814 = vmatpush1.bf16.msra.mxu0 0
  %3815 = vmatprep.subr.bf16.mxu0 0
  %3816 = vmatpush1.bf16.msra.mxu0 0
  %3817 = vmatprep.subr.bf16.mxu0 0
  %3818 = vmatpush1.bf16.msra.mxu0 0
  %3819 = vmatprep.subr.bf16.mxu0 %v3741
  %3820 = vmatpush1.bf16.msra.mxu0 %v3740
  %3821 = vmatprep.subr.bf16.mxu0 0
  %3822 = vmatpush2.bf16.msra.mxu0 0
  %3823 = vmatprep.subr.bf16.mxu0 0
  %3824 = vmatpush2.bf16.msra.mxu0 0
  %3825 = vmatprep.subr.bf16.mxu0 0
  %3826 = vmatpush2.bf16.msra.mxu0 0
  %3827 = vmatprep.subr.bf16.mxu0 0
  %3828 = vmatpush2.bf16.msra.mxu0 0
  %3829 = vmatprep.subr.bf16.mxu0 0
  %3830 = vmatpush2.bf16.msra.mxu0 0
  %3831 = vmatprep.subr.bf16.mxu0 0
  %3832 = vmatpush2.bf16.msra.mxu0 0
  %3833 = vmatprep.subr.bf16.mxu0 0
  %3834 = vmatpush2.bf16.msra.mxu0 0
  %3835 = vmatprep.subr.bf16.mxu0 0
  %3836 = vmatpush2.bf16.msra.mxu0 0
  %3837 = vmatprep.mubr.bf16.mxu0 0
  %3838 = vmatmul.mubr.bf16.gmra.mxu0 %v3760
  %v3839 = vpop.f32.mrf.mxu0
  %v3840 = vadd.f32 %v3747, %v3839
  %v3841 = vpop.f32.mrf.mxu0
  %v3842 = vadd.f32 %v3747, %v3841
  %v3843 = vpop.f32.mrf.mxu0
  %v3844 = vadd.f32 %v3752, %v3843
  %v3845 = vpop.f32.mrf.mxu0
  %v3846 = vadd.f32 %v3752, %v3845
  %3847 = vdwg.mxu0
  %v3848 = vld [vmem:[%s1 + $0x28] sm:$0xf]
  %v3849 = vld [vmem:[%s1 + $0x2c] sm:$0xf]
  %v3850 = vpack.c.bf16 %v3801, %v3797
  %v3851 = vpack.c.bf16 %v3803, %v3799
  %v3852 = vpack.c.bf16 %v3844, %v3840
  %v3853 = vpack.c.bf16 %v3846, %v3842
  %v3854 = vld [vmem:[%s2 + $0xd8] sm:$0xff]
  %v3855 = vld [vmem:[%s2 + $0xe0] sm:$0xff]
  %3857 = vset.pattern.permute.xlu0 0
  %3858 = vperm.xlu0 %3857, %v3854
  %v3859 = vpop.permute.xlu0 %3858
  %3862 = vset.pattern.permute.xlu0 0
  %3863 = vperm.xlu0 %3862, %v3855
  %v3864 = vpop.permute.xlu0 %3863
  %v3868 = vunpack.c.l.b16 %v3848
  %v3869 = vunpack.c.l.b16 %v3849
  %v3870 = vpack.c.b16 %v3869, %v3868
  %v3872 = vsel %vm3410, %v3870, 0
  %3874 = vmatprep.subr.bf16.mxu0 0
  %3875 = vmatpush1.bf16.msra.mxu0 0
  %3876 = vmatprep.subr.bf16.mxu0 0
  %3877 = vmatpush1.bf16.msra.mxu0 0
  %3878 = vmatprep.subr.bf16.mxu0 0
  %3879 = vmatpush1.bf16.msra.mxu0 0
  %3880 = vmatprep.subr.bf16.mxu0 0
  %3881 = vmatpush1.bf16.msra.mxu0 0
  %3882 = vmatprep.subr.bf16.mxu0 0
  %3883 = vmatpush1.bf16.msra.mxu0 0
  %3884 = vmatprep.subr.bf16.mxu0 0
  %3885 = vmatpush1.bf16.msra.mxu0 0
  %3886 = vmatprep.subr.bf16.mxu0 0
  %3887 = vmatpush1.bf16.msra.mxu0 0
  %3888 = vmatprep.subr.bf16.mxu0 %v3851
  %3889 = vmatpush1.bf16.msra.mxu0 %v3850
  %3890 = vmatprep.subr.bf16.mxu0 0
  %3891 = vmatpush2.bf16.msra.mxu0 0
  %3892 = vmatprep.subr.bf16.mxu0 0
  %3893 = vmatpush2.bf16.msra.mxu0 0
  %3894 = vmatprep.subr.bf16.mxu0 0
  %3895 = vmatpush2.bf16.msra.mxu0 0
  %3896 = vmatprep.subr.bf16.mxu0 0
  %3897 = vmatpush2.bf16.msra.mxu0 0
  %3898 = vmatprep.subr.bf16.mxu0 0
  %3899 = vmatpush2.bf16.msra.mxu0 0
  %3900 = vmatprep.subr.bf16.mxu0 0
  %3901 = vmatpush2.bf16.msra.mxu0 0
  %3902 = vmatprep.subr.bf16.mxu0 0
  %3903 = vmatpush2.bf16.msra.mxu0 0
  %3904 = vmatprep.subr.bf16.mxu0 0
  %3905 = vmatpush2.bf16.msra.mxu0 0
  %3906 = vmatprep.mubr.bf16.mxu0 0
  %3907 = vmatmul.mubr.bf16.gmra.mxu0 %v3872
  %v3908 = vpop.f32.mrf.mxu0
  %v3909 = vadd.f32 %v3859, %v3908
  %v3910 = vpop.f32.mrf.mxu0
  %v3911 = vadd.f32 %v3859, %v3910
  %v3912 = vpop.f32.mrf.mxu0
  %v3913 = vadd.f32 %v3864, %v3912
  %v3914 = vpop.f32.mrf.mxu0
  %v3915 = vadd.f32 %v3864, %v3914
  %3916 = vdwg.mxu0
  %3917 = vmatprep.subr.bf16.mxu0 0
  %3918 = vmatpush1.bf16.msra.mxu0 0
  %3919 = vmatprep.subr.bf16.mxu0 0
  %3920 = vmatpush1.bf16.msra.mxu0 0
  %3921 = vmatprep.subr.bf16.mxu0 0
  %3922 = vmatpush1.bf16.msra.mxu0 0
  %3923 = vmatprep.subr.bf16.mxu0 0
  %3924 = vmatpush1.bf16.msra.mxu0 0
  %3925 = vmatprep.subr.bf16.mxu0 0
  %3926 = vmatpush1.bf16.msra.mxu0 0
  %3927 = vmatprep.subr.bf16.mxu0 0
  %3928 = vmatpush1.bf16.msra.mxu0 0
  %3929 = vmatprep.subr.bf16.mxu0 0
  %3930 = vmatpush1.bf16.msra.mxu0 0
  %3931 = vmatprep.subr.bf16.mxu0 %v3853
  %3932 = vmatpush1.bf16.msra.mxu0 %v3852
  %3933 = vmatprep.subr.bf16.mxu0 0
  %3934 = vmatpush2.bf16.msra.mxu0 0
  %3935 = vmatprep.subr.bf16.mxu0 0
  %3936 = vmatpush2.bf16.msra.mxu0 0
  %3937 = vmatprep.subr.bf16.mxu0 0
  %3938 = vmatpush2.bf16.msra.mxu0 0
  %3939 = vmatprep.subr.bf16.mxu0 0
  %3940 = vmatpush2.bf16.msra.mxu0 0
  %3941 = vmatprep.subr.bf16.mxu0 0
  %3942 = vmatpush2.bf16.msra.mxu0 0
  %3943 = vmatprep.subr.bf16.mxu0 0
  %3944 = vmatpush2.bf16.msra.mxu0 0
  %3945 = vmatprep.subr.bf16.mxu0 0
  %3946 = vmatpush2.bf16.msra.mxu0 0
  %3947 = vmatprep.subr.bf16.mxu0 0
  %3948 = vmatpush2.bf16.msra.mxu0 0
  %3949 = vmatprep.mubr.bf16.mxu0 0
  %3950 = vmatmul.mubr.bf16.gmra.mxu0 %v3872
  %v3951 = vpop.f32.mrf.mxu0
  %v3952 = vadd.f32 %v3859, %v3951
  %v3953 = vpop.f32.mrf.mxu0
  %v3954 = vadd.f32 %v3859, %v3953
  %v3955 = vpop.f32.mrf.mxu0
  %v3956 = vadd.f32 %v3864, %v3955
  %v3957 = vpop.f32.mrf.mxu0
  %v3958 = vadd.f32 %v3864, %v3957
  %3959 = vdwg.mxu0
  %v3960 = vxor.u32 %v3909, 2147483648
  %v3961 = vxor.u32 %v3911, 2147483648
  %v3962 = vxor.u32 %v3952, 2147483648
  %v3963 = vxor.u32 %v3954, 2147483648
  %v3964 = vxor.u32 %v3913, 2147483648
  %v3965 = vxor.u32 %v3915, 2147483648
  %v3966 = vxor.u32 %v3956, 2147483648
  %v3967 = vxor.u32 %v3958, 2147483648
  %v3968 = vmul.f32 %v3960, 1.442695
  %v3969 = vpow.pop %v3968
  %v3970 = vmul.f32 %v3961, 1.442695
  %v3971 = vpow.pop %v3970
  %v3972 = vmul.f32 %v3962, 1.442695
  %v3973 = vpow.pop %v3972
  %v3974 = vmul.f32 %v3963, 1.442695
  %v3975 = vpow.pop %v3974
  %v3976 = vmul.f32 %v3964, 1.442695
  %v3977 = vpow.pop %v3976
  %v3978 = vmul.f32 %v3965, 1.442695
  %v3979 = vpow.pop %v3978
  %v3980 = vmul.f32 %v3966, 1.442695
  %v3981 = vpow.pop %v3980
  %v3982 = vmul.f32 %v3967, 1.442695
  %v3983 = vpow.pop %v3982
  %v3984 = vadd.f32 %v3969, 1.0
  %v3985 = vadd.f32 %v3971, 1.0
  %v3986 = vadd.f32 %v3973, 1.0
  %v3987 = vadd.f32 %v3975, 1.0
  %v3988 = vadd.f32 %v3977, 1.0
  %v3989 = vadd.f32 %v3979, 1.0
  %v3990 = vadd.f32 %v3981, 1.0
  %v3991 = vadd.f32 %v3983, 1.0
  %v3992 = vrcp.pop %v3984
  %v3993 = vmul.f32 1.0, %v3992
  %v3994 = vrcp.pop %v3985
  %v3995 = vmul.f32 1.0, %v3994
  %v3996 = vrcp.pop %v3986
  %v3997 = vmul.f32 1.0, %v3996
  %v3998 = vrcp.pop %v3987
  %v3999 = vmul.f32 1.0, %v3998
  %v4000 = vrcp.pop %v3988
  %v4001 = vmul.f32 1.0, %v4000
  %v4002 = vrcp.pop %v3989
  %v4003 = vmul.f32 1.0, %v4002
  %v4004 = vrcp.pop %v3990
  %v4005 = vmul.f32 1.0, %v4004
  %v4006 = vrcp.pop %v3991
  %v4007 = vmul.f32 1.0, %v4006
  %v4008 = vmul.f32 %v3909, %v3993
  %v4009 = vmul.f32 %v3911, %v3995
  %v4010 = vmul.f32 %v3952, %v3997
  %v4011 = vmul.f32 %v3954, %v3999
  %v4012 = vmul.f32 %v3913, %v4001
  %v4013 = vmul.f32 %v3915, %v4003
  %v4014 = vmul.f32 %v3956, %v4005
  %v4015 = vmul.f32 %v3958, %v4007
  %v4016 = vmul.f32 %v4008, %v1502
  %v4017 = vmul.f32 %v4009, %v1503
  %v4018 = vmul.f32 %v4010, %v1504
  %v4019 = vmul.f32 %v4011, %v1505
  %v4020 = vmul.f32 %v4012, %v1506
  %v4021 = vmul.f32 %v4013, %v1507
  %v4022 = vmul.f32 %v4014, %v1508
  %v4023 = vmul.f32 %v4015, %v1509
  %v4024 = vld [vmem:[%s1 + $0x30] sm:$0xf]
  %v4025 = vld [vmem:[%s1 + $0x34] sm:$0xf]
  %v4026 = vld [vmem:[%s1 + $0x38] sm:$0xf]
  %v4027 = vld [vmem:[%s1 + $0x3c] sm:$0xf]
  %v4028 = vpack.c.bf16 %v4020, %v4016
  %v4029 = vpack.c.bf16 %v4021, %v4017
  %v4030 = vpack.c.bf16 %v4022, %v4018
  %v4031 = vpack.c.bf16 %v4023, %v4019
  %v4036 = vunpack.c.l.b16 %v4024
  %v4037 = vunpack.c.l.b16 %v4025
  %v4038 = vunpack.c.l.b16 %v4026
  %v4039 = vunpack.c.l.b16 %v4027
  %v4040 = vpack.c.b16 %v4037, %v4036
  %v4041 = vpack.c.b16 %v4039, %v4038
  %4042 = vrot.lane.b32.xlu0 %v4040, 112
  %v4043 = vpop.permute.xlu0 %4042
  %4044 = vrot.lane.b32.xlu0 %v4041, 112
  %v4045 = vpop.permute.xlu0 %4044
  %v4047 = vsel %vm3410, %v4043, 0
  %v4050 = vsel %vm3410, %v4045, 0
  %4052 = vmatprep.subr.bf16.mxu0 0
  %4053 = vmatpush1.bf16.msra.mxu0 0
  %4054 = vmatprep.subr.bf16.mxu0 0
  %4055 = vmatpush1.bf16.msra.mxu0 0
  %4056 = vmatprep.subr.bf16.mxu0 0
  %4057 = vmatpush1.bf16.msra.mxu0 0
  %4058 = vmatprep.subr.bf16.mxu0 0
  %4059 = vmatpush1.bf16.msra.mxu0 0
  %4060 = vmatprep.subr.bf16.mxu0 0
  %4061 = vmatpush1.bf16.msra.mxu0 0
  %4062 = vmatprep.subr.bf16.mxu0 0
  %4063 = vmatpush1.bf16.msra.mxu0 0
  %4064 = vmatprep.subr.bf16.mxu0 0
  %4065 = vmatpush1.bf16.msra.mxu0 0
  %4066 = vmatprep.subr.bf16.mxu0 %v3851
  %4067 = vmatpush1.bf16.msra.mxu0 %v3850
  %4068 = vmatprep.subr.bf16.mxu0 0
  %4069 = vmatpush2.bf16.msra.mxu0 0
  %4070 = vmatprep.subr.bf16.mxu0 0
  %4071 = vmatpush2.bf16.msra.mxu0 0
  %4072 = vmatprep.subr.bf16.mxu0 0
  %4073 = vmatpush2.bf16.msra.mxu0 0
  %4074 = vmatprep.subr.bf16.mxu0 0
  %4075 = vmatpush2.bf16.msra.mxu0 0
  %4076 = vmatprep.subr.bf16.mxu0 0
  %4077 = vmatpush2.bf16.msra.mxu0 0
  %4078 = vmatprep.subr.bf16.mxu0 0
  %4079 = vmatpush2.bf16.msra.mxu0 0
  %4080 = vmatprep.subr.bf16.mxu0 0
  %4081 = vmatpush2.bf16.msra.mxu0 0
  %4082 = vmatprep.subr.bf16.mxu0 0
  %4083 = vmatpush2.bf16.msra.mxu0 0
  %4084 = vmatprep.mubr.bf16.mxu0 0
  %4085 = vmatmul.mubr.bf16.gmra.mxu0 %v4047
  %v4086 = vpop.f32.mrf.mxu0
  %v4087 = vadd.f32 0.0, %v4086
  %v4088 = vpop.f32.mrf.mxu0
  %v4089 = vadd.f32 0.0, %v4088
  %v4090 = vpop.f32.mrf.mxu0
  %v4091 = vadd.f32 0.0, %v4090
  %v4092 = vpop.f32.mrf.mxu0
  %v4093 = vadd.f32 0.0, %v4092
  %4094 = vmatprep.mubr.bf16.mxu0 0
  %4095 = vmatmul.mubr.bf16.gmra.mxu0 %v4050
  %v4096 = vpop.f32.mrf.mxu0
  %v4097 = vadd.f32 0.0, %v4096
  %v4098 = vpop.f32.mrf.mxu0
  %v4099 = vadd.f32 0.0, %v4098
  %v4100 = vpop.f32.mrf.mxu0
  %v4101 = vadd.f32 0.0, %v4100
  %v4102 = vpop.f32.mrf.mxu0
  %v4103 = vadd.f32 0.0, %v4102
  %4104 = vdwg.mxu0
  %4105 = vmatprep.subr.bf16.mxu0 0
  %4106 = vmatpush1.bf16.msra.mxu0 0
  %4107 = vmatprep.subr.bf16.mxu0 0
  %4108 = vmatpush1.bf16.msra.mxu0 0
  %4109 = vmatprep.subr.bf16.mxu0 0
  %4110 = vmatpush1.bf16.msra.mxu0 0
  %4111 = vmatprep.subr.bf16.mxu0 0
  %4112 = vmatpush1.bf16.msra.mxu0 0
  %4113 = vmatprep.subr.bf16.mxu0 0
  %4114 = vmatpush1.bf16.msra.mxu0 0
  %4115 = vmatprep.subr.bf16.mxu0 0
  %4116 = vmatpush1.bf16.msra.mxu0 0
  %4117 = vmatprep.subr.bf16.mxu0 0
  %4118 = vmatpush1.bf16.msra.mxu0 0
  %4119 = vmatprep.subr.bf16.mxu0 %v3853
  %4120 = vmatpush1.bf16.msra.mxu0 %v3852
  %4121 = vmatprep.subr.bf16.mxu0 0
  %4122 = vmatpush2.bf16.msra.mxu0 0
  %4123 = vmatprep.subr.bf16.mxu0 0
  %4124 = vmatpush2.bf16.msra.mxu0 0
  %4125 = vmatprep.subr.bf16.mxu0 0
  %4126 = vmatpush2.bf16.msra.mxu0 0
  %4127 = vmatprep.subr.bf16.mxu0 0
  %4128 = vmatpush2.bf16.msra.mxu0 0
  %4129 = vmatprep.subr.bf16.mxu0 0
  %4130 = vmatpush2.bf16.msra.mxu0 0
  %4131 = vmatprep.subr.bf16.mxu0 0
  %4132 = vmatpush2.bf16.msra.mxu0 0
  %4133 = vmatprep.subr.bf16.mxu0 0
  %4134 = vmatpush2.bf16.msra.mxu0 0
  %4135 = vmatprep.subr.bf16.mxu0 0
  %4136 = vmatpush2.bf16.msra.mxu0 0
  %4137 = vmatprep.mubr.bf16.mxu0 0
  %4138 = vmatmul.mubr.bf16.gmra.mxu0 %v4047
  %v4139 = vpop.f32.mrf.mxu0
  %v4140 = vadd.f32 0.0, %v4139
  %v4141 = vpop.f32.mrf.mxu0
  %v4142 = vadd.f32 0.0, %v4141
  %v4143 = vpop.f32.mrf.mxu0
  %v4144 = vadd.f32 0.0, %v4143
  %v4145 = vpop.f32.mrf.mxu0
  %v4146 = vadd.f32 0.0, %v4145
  %4147 = vmatprep.mubr.bf16.mxu0 0
  %4148 = vmatmul.mubr.bf16.gmra.mxu0 %v4050
  %v4149 = vpop.f32.mrf.mxu0
  %v4150 = vadd.f32 0.0, %v4149
  %v4151 = vpop.f32.mrf.mxu0
  %v4152 = vadd.f32 0.0, %v4151
  %v4153 = vpop.f32.mrf.mxu0
  %v4154 = vadd.f32 0.0, %v4153
  %v4155 = vpop.f32.mrf.mxu0
  %v4156 = vadd.f32 0.0, %v4155
  %4157 = vdwg.mxu0
  %v4159 = vsel %vm3410, %v4040, 0
  %v4162 = vsel %vm3410, %v4041, 0
  %4164 = vmatprep.subr.bf16.mxu0 0
  %4165 = vmatpush1.bf16.msra.mxu0 0
  %4166 = vmatprep.subr.bf16.mxu0 0
  %4167 = vmatpush1.bf16.msra.mxu0 0
  %4168 = vmatprep.subr.bf16.mxu0 0
  %4169 = vmatpush1.bf16.msra.mxu0 0
  %4170 = vmatprep.subr.bf16.mxu0 0
  %4171 = vmatpush1.bf16.msra.mxu0 0
  %4172 = vmatprep.subr.bf16.mxu0 0
  %4173 = vmatpush1.bf16.msra.mxu0 0
  %4174 = vmatprep.subr.bf16.mxu0 0
  %4175 = vmatpush1.bf16.msra.mxu0 0
  %4176 = vmatprep.subr.bf16.mxu0 0
  %4177 = vmatpush1.bf16.msra.mxu0 0
  %4178 = vmatprep.subr.bf16.mxu0 %v4029
  %4179 = vmatpush1.bf16.msra.mxu0 %v4028
  %4180 = vmatprep.subr.bf16.mxu0 0
  %4181 = vmatpush2.bf16.msra.mxu0 0
  %4182 = vmatprep.subr.bf16.mxu0 0
  %4183 = vmatpush2.bf16.msra.mxu0 0
  %4184 = vmatprep.subr.bf16.mxu0 0
  %4185 = vmatpush2.bf16.msra.mxu0 0
  %4186 = vmatprep.subr.bf16.mxu0 0
  %4187 = vmatpush2.bf16.msra.mxu0 0
  %4188 = vmatprep.subr.bf16.mxu0 0
  %4189 = vmatpush2.bf16.msra.mxu0 0
  %4190 = vmatprep.subr.bf16.mxu0 0
  %4191 = vmatpush2.bf16.msra.mxu0 0
  %4192 = vmatprep.subr.bf16.mxu0 0
  %4193 = vmatpush2.bf16.msra.mxu0 0
  %4194 = vmatprep.subr.bf16.mxu0 0
  %4195 = vmatpush2.bf16.msra.mxu0 0
  %4196 = vmatprep.mubr.bf16.mxu0 0
  %4197 = vmatmul.mubr.bf16.gmra.mxu0 %v4159
  %v4198 = vpop.f32.mrf.mxu0
  %v4199 = vadd.f32 %v4087, %v4198
  %v4200 = vpop.f32.mrf.mxu0
  %v4201 = vadd.f32 %v4089, %v4200
  %v4202 = vpop.f32.mrf.mxu0
  %v4203 = vadd.f32 %v4091, %v4202
  %v4204 = vpop.f32.mrf.mxu0
  %v4205 = vadd.f32 %v4093, %v4204
  %4206 = vmatprep.mubr.bf16.mxu0 0
  %4207 = vmatmul.mubr.bf16.gmra.mxu0 %v4162
  %v4208 = vpop.f32.mrf.mxu0
  %v4209 = vadd.f32 %v4097, %v4208
  %v4210 = vpop.f32.mrf.mxu0
  %v4211 = vadd.f32 %v4099, %v4210
  %v4212 = vpop.f32.mrf.mxu0
  %v4213 = vadd.f32 %v4101, %v4212
  %v4214 = vpop.f32.mrf.mxu0
  %v4215 = vadd.f32 %v4103, %v4214
  %4216 = vdwg.mxu0
  %4217 = vmatprep.subr.bf16.mxu0 0
  %4218 = vmatpush1.bf16.msra.mxu0 0
  %4219 = vmatprep.subr.bf16.mxu0 0
  %4220 = vmatpush1.bf16.msra.mxu0 0
  %4221 = vmatprep.subr.bf16.mxu0 0
  %4222 = vmatpush1.bf16.msra.mxu0 0
  %4223 = vmatprep.subr.bf16.mxu0 0
  %4224 = vmatpush1.bf16.msra.mxu0 0
  %4225 = vmatprep.subr.bf16.mxu0 0
  %4226 = vmatpush1.bf16.msra.mxu0 0
  %4227 = vmatprep.subr.bf16.mxu0 0
  %4228 = vmatpush1.bf16.msra.mxu0 0
  %4229 = vmatprep.subr.bf16.mxu0 0
  %4230 = vmatpush1.bf16.msra.mxu0 0
  %4231 = vmatprep.subr.bf16.mxu0 %v4031
  %4232 = vmatpush1.bf16.msra.mxu0 %v4030
  %4233 = vmatprep.subr.bf16.mxu0 0
  %4234 = vmatpush2.bf16.msra.mxu0 0
  %4235 = vmatprep.subr.bf16.mxu0 0
  %4236 = vmatpush2.bf16.msra.mxu0 0
  %4237 = vmatprep.subr.bf16.mxu0 0
  %4238 = vmatpush2.bf16.msra.mxu0 0
  %4239 = vmatprep.subr.bf16.mxu0 0
  %4240 = vmatpush2.bf16.msra.mxu0 0
  %4241 = vmatprep.subr.bf16.mxu0 0
  %4242 = vmatpush2.bf16.msra.mxu0 0
  %4243 = vmatprep.subr.bf16.mxu0 0
  %4244 = vmatpush2.bf16.msra.mxu0 0
  %4245 = vmatprep.subr.bf16.mxu0 0
  %4246 = vmatpush2.bf16.msra.mxu0 0
  %4247 = vmatprep.subr.bf16.mxu0 0
  %4248 = vmatpush2.bf16.msra.mxu0 0
  %4249 = vmatprep.mubr.bf16.mxu0 0
  %4250 = vmatmul.mubr.bf16.gmra.mxu0 %v4159
  %v4251 = vpop.f32.mrf.mxu0
  %v4252 = vadd.f32 %v4140, %v4251
  %v4253 = vpop.f32.mrf.mxu0
  %v4254 = vadd.f32 %v4142, %v4253
  %v4255 = vpop.f32.mrf.mxu0
  %v4256 = vadd.f32 %v4144, %v4255
  %v4257 = vpop.f32.mrf.mxu0
  %v4258 = vadd.f32 %v4146, %v4257
  %4259 = vmatprep.mubr.bf16.mxu0 0
  %4260 = vmatmul.mubr.bf16.gmra.mxu0 %v4162
  %v4261 = vpop.f32.mrf.mxu0
  %v4262 = vadd.f32 %v4150, %v4261
  %v4263 = vpop.f32.mrf.mxu0
  %v4264 = vadd.f32 %v4152, %v4263
  %v4265 = vpop.f32.mrf.mxu0
  %v4266 = vadd.f32 %v4154, %v4265
  %v4267 = vpop.f32.mrf.mxu0
  %v4268 = vadd.f32 %v4156, %v4267
  %4269 = vdwg.mxu0
  %v4270 = vld [vmem:[%s2 + $0xe8] sm:$0xff]
  %v4271 = vld [vmem:[%s2 + $0xf0] sm:$0xff]
  %v4272 = vld [vmem:[%s2 + $0xf8] sm:$0xff]
  %v4273 = vld [vmem:[%s2 + $0x100] sm:$0xff]
  %4275 = vset.pattern.permute.xlu0 0
  %4276 = vperm.xlu0 %4275, %v4270
  %v4277 = vpop.permute.xlu0 %4276
  %4280 = vset.pattern.permute.xlu0 0
  %4281 = vperm.xlu0 %4280, %v4271
  %v4282 = vpop.permute.xlu0 %4281
  %4285 = vset.pattern.permute.xlu0 0
  %4286 = vperm.xlu0 %4285, %v4272
  %v4287 = vpop.permute.xlu0 %4286
  %4290 = vset.pattern.permute.xlu0 0
  %4291 = vperm.xlu0 %4290, %v4273
  %v4292 = vpop.permute.xlu0 %4291
  %v4294 = vadd.f32 %v4199, %v4277
  %v4295 = vadd.f32 %v4201, %v4277
  %v4296 = vadd.f32 %v4252, %v4277
  %v4297 = vadd.f32 %v4254, %v4277
  %v4298 = vadd.f32 %v4203, %v4282
  %v4299 = vadd.f32 %v4205, %v4282
  %v4300 = vadd.f32 %v4256, %v4282
  %v4301 = vadd.f32 %v4258, %v4282
  %v4302 = vadd.f32 %v4209, %v4287
  %v4303 = vadd.f32 %v4211, %v4287
  %v4304 = vadd.f32 %v4262, %v4287
  %v4305 = vadd.f32 %v4264, %v4287
  %v4306 = vadd.f32 %v4213, %v4292
  %v4307 = vadd.f32 %v4215, %v4292
  %v4308 = vadd.f32 %v4266, %v4292
  %v4309 = vadd.f32 %v4268, %v4292
  %v4310 = vxor.u32 %v4294, 2147483648
  %v4311 = vxor.u32 %v4295, 2147483648
  %v4312 = vxor.u32 %v4296, 2147483648
  %v4313 = vxor.u32 %v4297, 2147483648
  %v4314 = vxor.u32 %v4298, 2147483648
  %v4315 = vxor.u32 %v4299, 2147483648
  %v4316 = vxor.u32 %v4300, 2147483648
  %v4317 = vxor.u32 %v4301, 2147483648
  %v4318 = vxor.u32 %v4302, 2147483648
  %v4319 = vxor.u32 %v4303, 2147483648
  %v4320 = vxor.u32 %v4304, 2147483648
  %v4321 = vxor.u32 %v4305, 2147483648
  %v4322 = vxor.u32 %v4306, 2147483648
  %v4323 = vxor.u32 %v4307, 2147483648
  %v4324 = vxor.u32 %v4308, 2147483648
  %v4325 = vxor.u32 %v4309, 2147483648
  %v4326 = vmul.f32 %v4310, 1.442695
  %v4327 = vpow.pop %v4326
  %v4328 = vmul.f32 %v4311, 1.442695
  %v4329 = vpow.pop %v4328
  %v4330 = vmul.f32 %v4312, 1.442695
  %v4331 = vpow.pop %v4330
  %v4332 = vmul.f32 %v4313, 1.442695
  %v4333 = vpow.pop %v4332
  %v4334 = vmul.f32 %v4314, 1.442695
  %v4335 = vpow.pop %v4334
  %v4336 = vmul.f32 %v4315, 1.442695
  %v4337 = vpow.pop %v4336
  %v4338 = vmul.f32 %v4316, 1.442695
  %v4339 = vpow.pop %v4338
  %v4340 = vmul.f32 %v4317, 1.442695
  %v4341 = vpow.pop %v4340
  %v4342 = vmul.f32 %v4318, 1.442695
  %v4343 = vpow.pop %v4342
  %v4344 = vmul.f32 %v4319, 1.442695
  %v4345 = vpow.pop %v4344
  %v4346 = vmul.f32 %v4320, 1.442695
  %v4347 = vpow.pop %v4346
  %v4348 = vmul.f32 %v4321, 1.442695
  %v4349 = vpow.pop %v4348
  %v4350 = vmul.f32 %v4322, 1.442695
  %v4351 = vpow.pop %v4350
  %v4352 = vmul.f32 %v4323, 1.442695
  %v4353 = vpow.pop %v4352
  %v4354 = vmul.f32 %v4324, 1.442695
  %v4355 = vpow.pop %v4354
  %v4356 = vmul.f32 %v4325, 1.442695
  %v4357 = vpow.pop %v4356
  %v4358 = vadd.f32 %v4327, 1.0
  %v4359 = vadd.f32 %v4329, 1.0
  %v4360 = vadd.f32 %v4331, 1.0
  %v4361 = vadd.f32 %v4333, 1.0
  %v4362 = vadd.f32 %v4335, 1.0
  %v4363 = vadd.f32 %v4337, 1.0
  %v4364 = vadd.f32 %v4339, 1.0
  %v4365 = vadd.f32 %v4341, 1.0
  %v4366 = vadd.f32 %v4343, 1.0
  %v4367 = vadd.f32 %v4345, 1.0
  %v4368 = vadd.f32 %v4347, 1.0
  %v4369 = vadd.f32 %v4349, 1.0
  %v4370 = vadd.f32 %v4351, 1.0
  %v4371 = vadd.f32 %v4353, 1.0
  %v4372 = vadd.f32 %v4355, 1.0
  %v4373 = vadd.f32 %v4357, 1.0
  %v4374 = vrcp.pop %v4358
  %v4375 = vmul.f32 1.0, %v4374
  %v4376 = vrcp.pop %v4359
  %v4377 = vmul.f32 1.0, %v4376
  %v4378 = vrcp.pop %v4360
  %v4379 = vmul.f32 1.0, %v4378
  %v4380 = vrcp.pop %v4361
  %v4381 = vmul.f32 1.0, %v4380
  %v4382 = vrcp.pop %v4362
  %v4383 = vmul.f32 1.0, %v4382
  %v4384 = vrcp.pop %v4363
  %v4385 = vmul.f32 1.0, %v4384
  %v4386 = vrcp.pop %v4364
  %v4387 = vmul.f32 1.0, %v4386
  %v4388 = vrcp.pop %v4365
  %v4389 = vmul.f32 1.0, %v4388
  %v4390 = vrcp.pop %v4366
  %v4391 = vmul.f32 1.0, %v4390
  %v4392 = vrcp.pop %v4367
  %v4393 = vmul.f32 1.0, %v4392
  %v4394 = vrcp.pop %v4368
  %v4395 = vmul.f32 1.0, %v4394
  %v4396 = vrcp.pop %v4369
  %v4397 = vmul.f32 1.0, %v4396
  %v4398 = vrcp.pop %v4370
  %v4399 = vmul.f32 1.0, %v4398
  %v4400 = vrcp.pop %v4371
  %v4401 = vmul.f32 1.0, %v4400
  %v4402 = vrcp.pop %v4372
  %v4403 = vmul.f32 1.0, %v4402
  %v4404 = vrcp.pop %v4373
  %v4405 = vmul.f32 1.0, %v4404
  %v4406 = vmul.f32 %v4294, %v4375
  %v4407 = vmul.f32 %v4295, %v4377
  %v4408 = vmul.f32 %v4296, %v4379
  %v4409 = vmul.f32 %v4297, %v4381
  %v4410 = vmul.f32 %v4298, %v4383
  %v4411 = vmul.f32 %v4299, %v4385
  %v4412 = vmul.f32 %v4300, %v4387
  %v4413 = vmul.f32 %v4301, %v4389
  %v4414 = vmul.f32 %v4302, %v4391
  %v4415 = vmul.f32 %v4303, %v4393
  %v4416 = vmul.f32 %v4304, %v4395
  %v4417 = vmul.f32 %v4305, %v4397
  %v4418 = vmul.f32 %v4306, %v4399
  %v4419 = vmul.f32 %v4307, %v4401
  %v4420 = vmul.f32 %v4308, %v4403
  %v4421 = vmul.f32 %v4309, %v4405
  %v4422 = vmul.f32 %v4406, %v18
  %v4423 = vmul.f32 %v4407, %v19
  %v4424 = vmul.f32 %v4408, %v20
  %v4425 = vmul.f32 %v4409, %v21
  %v4426 = vmul.f32 %v4410, %v22
  %v4427 = vmul.f32 %v4411, %v23
  %v4428 = vmul.f32 %v4412, %v24
  %v4429 = vmul.f32 %v4413, %v25
  %v4430 = vmul.f32 %v4414, %v26
  %v4431 = vmul.f32 %v4415, %v27
  %v4432 = vmul.f32 %v4416, %v28
  %v4433 = vmul.f32 %v4417, %v29
  %v4434 = vmul.f32 %v4418, %v30
  %v4435 = vmul.f32 %v4419, %v31
  %v4436 = vmul.f32 %v4420, %v32
  %v4437 = vmul.f32 %v4421, %v33
  %4438 = vst [vmem:[%s4] sm:$0xff] %v4422
  %4439 = vst [vmem:[%s4 + $0x8] sm:$0xff] %v4423
  %4440 = vst [vmem:[%s4 + $0x10] sm:$0xff] %v4424
  %4441 = vst [vmem:[%s4 + $0x18] sm:$0xff] %v4425
  %4442 = vst [vmem:[%s4 + $0x20] sm:$0xff] %v4426
  %4443 = vst [vmem:[%s4 + $0x28] sm:$0xff] %v4427
  %4444 = vst [vmem:[%s4 + $0x30] sm:$0xff] %v4428
  %4445 = vst [vmem:[%s4 + $0x38] sm:$0xff] %v4429
  %4446 = vst [vmem:[%s4 + $0x40] sm:$0xff] %v4430
  %4447 = vst [vmem:[%s4 + $0x48] sm:$0xff] %v4431
  %4448 = vst [vmem:[%s4 + $0x50] sm:$0xff] %v4432
  %4449 = vst [vmem:[%s4 + $0x58] sm:$0xff] %v4433
  %4450 = vst [vmem:[%s4 + $0x60] sm:$0xff] %v4434
  %4451 = vst [vmem:[%s4 + $0x68] sm:$0xff] %v4435
  %4452 = vst [vmem:[%s4 + $0x70] sm:$0xff] %v4436
  %4453 = vst [vmem:[%s4 + $0x78] sm:$0xff] %v4437
  // Predicated region
  $region18: #{_lambda_.1} parent=0 // pred_check
    _
  $region19: #{_lambda_.1} parent=0 // pred_check_branch
    %4455 = sbr.rel (0) target = $region21
  $region20: #{_lambda_.1} parent=0 // pred_region
    _
  $region21: #{_lambda_.1} parent=0 // pred_fallthru
    _
  // Predicated region
  $region22: #{_lambda_.1} parent=0 // pred_check
    _
  $region23: #{_lambda_.1} parent=0 // pred_check_branch
    %4457 = sbr.rel (0) target = $region25
  $region24: #{_lambda_.1} parent=0 // pred_region
    _
  $region25: #{_lambda_.1} parent=0 // pred_fallthru
    _

</llo_original>
